<compile_context>
chip_gen: v5e
topology: v5e:2x2
jax: 0.10.0
libtpu: 0.0.40
codegen_flags: <defaults>
</compile_context>

<pallas_src>
import math
from functools import partial

import jax
import jax.numpy as jnp
from jax.experimental import pallas as pl
from jax.experimental.pallas import tpu as pltpu


# ----------------------------- kernel ---------------------------------------

def contour_self_attention_kernel(
    x_ref, aff_ref, wqkv_ref, bqkv_ref, wo_ref, w1_ref, b1_ref, w2_ref,
    lw_ref, lb_ref, o_ref, *, num_heads):
    BT, N, C = x_ref.shape
    M = BT * N
    H = num_heads
    dk = C // H
    scale = 1.0 / math.sqrt(dk)

    x = x_ref[...].astype(jnp.float32).reshape(M, C)     # fold batch into rows
    aff = aff_ref[...].astype(jnp.float32)                # (8, C) packed affine params
    # rows: 0 ln1_g, 1 ln1_b, 2 ln2_g, 3 ln2_b, 4 ln3_g, 5 ln3_b, 6 bo, 7 b2

    def layernorm(v, gi, bi, eps=1e-5):
        m = jnp.mean(v, axis=-1, keepdims=True)
        c = v - m
        var = jnp.mean(c * c, axis=-1, keepdims=True)
        return c * jax.lax.rsqrt(var + eps) * aff[gi:gi + 1, :] + aff[bi:bi + 1, :]

    # --- residual block 1: x = x + MultiHeadedAttention(norm1(x)) -----------
    n1 = layernorm(x, 0, 1)
    qkv = jnp.dot(n1, wqkv_ref[...], preferred_element_type=jnp.float32) + bqkv_ref[...]

    def split_heads(off):
        # (M, dk) per head -> stacked (H*BT, N, dk); only leading-dim reshapes.
        parts = [qkv[:, off + h * dk: off + (h + 1) * dk].reshape(BT, N, dk)
                 for h in range(H)]
        return jnp.concatenate(parts, axis=0)

    qh = split_heads(0)        # (H*BT, N, dk)
    kh = split_heads(C)
    vh = split_heads(2 * C)

    s = jnp.einsum('gqd,gkd->gqk', qh, kh,
                   preferred_element_type=jnp.float32) * scale       # (H*BT, N, N)
    s = s - jnp.max(s, axis=-1, keepdims=True)
    e = jnp.exp(s)
    p = e * pl.reciprocal(jnp.sum(e, axis=-1, keepdims=True), approx=True)
    oh = jnp.einsum('gqk,gkd->gqd', p, vh,
                    preferred_element_type=jnp.float32)               # (H*BT, N, dk)

    att = jnp.concatenate(
        [oh[h * BT:(h + 1) * BT].reshape(M, dk) for h in range(H)], axis=-1)  # (M, C)
    x1 = x + jnp.dot(att, wo_ref[...], preferred_element_type=jnp.float32) + aff[6:7, :]

    # --- residual block 2: x = x + PositionwiseFeedForward(norm2(x)) --------
    n2 = layernorm(x1, 2, 3)
    hdn = jnp.maximum(
        jnp.dot(n2, w1_ref[...], preferred_element_type=jnp.float32) + b1_ref[...], 0.0)
    x2 = x1 + jnp.dot(hdn, w2_ref[...], preferred_element_type=jnp.float32) + aff[7:8, :]

    # --- head: Linear(norm3(x)) -> lane-dense 128-wide slab ------------------
    n3 = layernorm(x2, 4, 5)
    out = jnp.dot(n3, lw_ref[...], preferred_element_type=jnp.float32) + lb_ref[...]
    o_ref[...] = out.reshape(BT, N, lw_ref.shape[1]).astype(o_ref.dtype)


# ----------------------------- wrapper ---------------------------------------

def _pick_b_tile(B, N):
    # Aim for ~128 rows (B_TILE*N) per grid step; prefer >=2 grid steps
    # (v7x has 2 TensorCores) as long as each step keeps >=64 rows.
    target = max(1, 128 // max(N, 1))
    divisors = [d for d in range(min(B, target), 0, -1) if B % d == 0] or [1]
    bt = divisors[0]
    if B // bt < 2:
        multi = [d for d in divisors if B // d >= 2 and d * N >= 64]
        if multi:
            bt = multi[0]
    return bt


def contour_self_attention(x, params, num_heads, *, out_lanes=128):
    B, N, C = x.shape
    assert C % num_heads == 0

    # ---- one-time parameter packing (would live at init time in production) ----
    wqkv = jnp.concatenate([params["wq"], params["wk"], params["wv"]], axis=1)  # (C, 3C)
    bqkv = jnp.concatenate([params["bq"], params["bk"], params["bv"]], axis=1)  # (1, 3C)
    aff = jnp.concatenate([params["ln1_g"], params["ln1_b"],
                           params["ln2_g"], params["ln2_b"],
                           params["ln3_g"], params["ln3_b"],
                           params["bo"], params["b2"]], axis=0)                  # (8, C)
    lw = params["lw"]
    lb = params["lb"]
    lw_pad = jnp.zeros((C, out_lanes), lw.dtype).at[:, :lw.shape[1]].set(lw)     # (C, 128)
    lb_pad = jnp.zeros((1, out_lanes), lb.dtype).at[:, :lb.shape[1]].set(lb)     # (1, 128)

    plist = [aff, wqkv, bqkv, params["wo"], params["w1"], params["b1"],
             params["w2"], lw_pad, lb_pad]

    BT = _pick_b_tile(B, N)
    grid = (B // BT,)

    def const_spec(p):
        return pl.BlockSpec(p.shape, lambda b: (0, 0))   # all params are 2-D, replicated

    out_padded = pl.pallas_call(
        partial(contour_self_attention_kernel, num_heads=num_heads),
        out_shape=jax.ShapeDtypeStruct((B, N, out_lanes), x.dtype),
        grid_spec=pltpu.PrefetchScalarGridSpec(
            num_scalar_prefetch=0,
            grid=grid,
            in_specs=[pl.BlockSpec((BT, N, C), lambda b: (b, 0, 0))]
                     + [const_spec(p) for p in plist],
            out_specs=pl.BlockSpec((BT, N, out_lanes), lambda b: (b, 0, 0)),
        ),
        compiler_params=pltpu.CompilerParams(dimension_semantics=("parallel",)),
    )(x, *plist)

    return out_padded[:, :, :2]


# ----------------------------- param init / reference ------------------------

def init_params(key, c_in):
    d_ff = 4 * c_in
    ks = jax.random.split(key, 32)
    i = iter(range(32))

    def w(shape, scale=0.1):
        return (scale * jax.random.normal(ks[next(i)], shape)).astype(jnp.float32)

    p = {}
    for name in ("ln1", "ln2", "ln3"):
        p[f"{name}_g"] = (1.0 + 0.02 * jax.random.normal(ks[next(i)], (1, c_in))).astype(jnp.float32)
        p[f"{name}_b"] = w((1, c_in), 0.02)
    for name in ("wq", "wk", "wv", "wo"):
        p[name] = w((c_in, c_in))
    for name in ("bq", "bk", "bv", "bo"):
        p[name] = w((1, c_in), 0.02)
    p["w1"] = w((c_in, d_ff)); p["b1"] = w((1, d_ff), 0.02)
    p["w2"] = w((d_ff, c_in)); p["b2"] = w((1, c_in), 0.02)
    p["lw"] = w((c_in, 2)); p["lb"] = w((1, 2), 0.02)
    return p


def reference(x, p, num_heads):
    def ln(v, g, b):
        m = v.mean(-1, keepdims=True)
        var = ((v - m) ** 2).mean(-1, keepdims=True)
        return (v - m) / jnp.sqrt(var + 1e-5) * g + b

    B, N, C = x.shape
    d_k = C // num_heads

    n1 = ln(x, p["ln1_g"], p["ln1_b"])
    q = n1 @ p["wq"] + p["bq"]
    k = n1 @ p["wk"] + p["bk"]
    v = n1 @ p["wv"] + p["bv"]
    qh = q.reshape(B, N, num_heads, d_k).transpose(0, 2, 1, 3)
    kh = k.reshape(B, N, num_heads, d_k).transpose(0, 2, 1, 3)
    vh = v.reshape(B, N, num_heads, d_k).transpose(0, 2, 1, 3)
    scores = jnp.einsum("bhqd,bhkd->bhqk", qh, kh) / math.sqrt(d_k)
    attn = jax.nn.softmax(scores, axis=-1)
    o = jnp.einsum("bhqk,bhkd->bhqd", attn, vh).transpose(0, 2, 1, 3).reshape(B, N, C)
    x1 = x + (o @ p["wo"] + p["bo"])

    n2 = ln(x1, p["ln2_g"], p["ln2_b"])
    x2 = x1 + (jnp.maximum(n2 @ p["w1"] + p["b1"], 0.0) @ p["w2"] + p["b2"])

    n3 = ln(x2, p["ln3_g"], p["ln3_b"])
    return n3 @ p["lw"] + p["lb"]


# ----------------------------- main ------------------------------------------

if __name__ == "__main__":
    B, N, C_IN, HEADS = 8, 16, 32, 4

    key = jax.random.PRNGKey(0)
    kx, kp = jax.random.split(key)
    x = jax.random.normal(kx, (B, N, C_IN), dtype=jnp.float32)
    params = init_params(kp, C_IN)

    out = contour_self_attention(x, params, HEADS)
    out = jax.block_until_ready(out)

    ref = reference(x, params, HEADS)
    assert out.shape == (B, N, 2), out.shape
    # tolerance slightly relaxed vs 1e-4 to cover pl.reciprocal(approx=True)
    err = float(jnp.max(jnp.abs(out - ref)))
    assert jnp.allclose(out, ref, atol=1e-3, rtol=1e-3), err

    print("KERNEL_OK")
</pallas_src>

<mosaic_0001>
module attributes {stable_mosaic.version = 11 : i64} {
  func.func @contour_self_attention_kernel(%arg0: i32, %arg1: memref<4x16x32xf32, #tpu.memory_space<vmem>>, %arg2: memref<8x32xf32, #tpu.memory_space<vmem>>, %arg3: memref<32x96xf32, #tpu.memory_space<vmem>>, %arg4: memref<1x96xf32, #tpu.memory_space<vmem>>, %arg5: memref<32x32xf32, #tpu.memory_space<vmem>>, %arg6: memref<32x128xf32, #tpu.memory_space<vmem>>, %arg7: memref<1x128xf32, #tpu.memory_space<vmem>>, %arg8: memref<128x32xf32, #tpu.memory_space<vmem>>, %arg9: memref<32x128xf32, #tpu.memory_space<vmem>>, %arg10: memref<1x128xf32, #tpu.memory_space<vmem>>, %arg11: memref<4x16x128xf32, #tpu.memory_space<vmem>>) attributes {dimension_semantics = [#tpu.dimension_semantics<parallel>], iteration_bounds = array<i64: 2>, scalar_prefetch = 0 : i64, scratch_operands = 0 : i64, tpu.core_type = #tpu.core_type<tc>, window_params = [{transform_indices = @transform_0, window_bounds = array<i64: 4, 16, 32>}, {pipeline_mode = #tpu.pipeline_mode<synchronous>, transform_indices = @transform_1, window_bounds = array<i64: 8, 32>}, {pipeline_mode = #tpu.pipeline_mode<synchronous>, transform_indices = @transform_2, window_bounds = array<i64: 32, 96>}, {pipeline_mode = #tpu.pipeline_mode<synchronous>, transform_indices = @transform_3, window_bounds = array<i64: 1, 96>}, {pipeline_mode = #tpu.pipeline_mode<synchronous>, transform_indices = @transform_4, window_bounds = array<i64: 32, 32>}, {pipeline_mode = #tpu.pipeline_mode<synchronous>, transform_indices = @transform_5, window_bounds = array<i64: 32, 128>}, {pipeline_mode = #tpu.pipeline_mode<synchronous>, transform_indices = @transform_6, window_bounds = array<i64: 1, 128>}, {pipeline_mode = #tpu.pipeline_mode<synchronous>, transform_indices = @transform_7, window_bounds = array<i64: 128, 32>}, {pipeline_mode = #tpu.pipeline_mode<synchronous>, transform_indices = @transform_8, window_bounds = array<i64: 32, 128>}, {pipeline_mode = #tpu.pipeline_mode<synchronous>, transform_indices = @transform_9, window_bounds = array<i64: 1, 128>}, {transform_indices = @transform_10, window_bounds = array<i64: 4, 16, 128>}]} {
    %c0 = arith.constant 0 : index
    %c0_0 = arith.constant 0 : index
    %c0_1 = arith.constant 0 : index
    %0 = vector.load %arg1[%c0, %c0_0, %c0_1] : memref<4x16x32xf32, #tpu.memory_space<vmem>>, vector<4x16x32xf32>
    %1 = vector.shape_cast %0 : vector<4x16x32xf32> to vector<64x32xf32>
    %c0_2 = arith.constant 0 : index
    %c0_3 = arith.constant 0 : index
    %2 = vector.load %arg2[%c0_2, %c0_3] : memref<8x32xf32, #tpu.memory_space<vmem>>, vector<8x32xf32>
    %cst = arith.constant dense<0.000000e+00> : vector<64xf32>
    %3 = vector.multi_reduction <add>, %1, %cst [1] : vector<64x32xf32> to vector<64xf32>
    %4 = vector.shape_cast %3 : vector<64xf32> to vector<64x1xf32>
    %cst_4 = arith.constant 3.200000e+01 : f32
    %5 = vector.broadcast %cst_4 : f32 to vector<64x1xf32>
    %6 = arith.divf %4, %5 : vector<64x1xf32>
    %7 = vector.broadcast %6 : vector<64x1xf32> to vector<64x32xf32>
    %8 = arith.subf %1, %7 : vector<64x32xf32>
    %9 = arith.mulf %8, %8 : vector<64x32xf32>
    %cst_5 = arith.constant dense<0.000000e+00> : vector<64xf32>
    %10 = vector.multi_reduction <add>, %9, %cst_5 [1] : vector<64x32xf32> to vector<64xf32>
    %11 = vector.shape_cast %10 : vector<64xf32> to vector<64x1xf32>
    %cst_6 = arith.constant 3.200000e+01 : f32
    %12 = vector.broadcast %cst_6 : f32 to vector<64x1xf32>
    %13 = arith.divf %11, %12 : vector<64x1xf32>
    %cst_7 = arith.constant 9.99999974E-6 : f32
    %14 = vector.broadcast %cst_7 : f32 to vector<64x1xf32>
    %15 = arith.addf %13, %14 : vector<64x1xf32>
    %16 = math.rsqrt %15 : vector<64x1xf32>
    %17 = vector.broadcast %16 : vector<64x1xf32> to vector<64x32xf32>
    %18 = arith.mulf %8, %17 : vector<64x32xf32>
    %19 = vector.extract_strided_slice %2 {offsets = [0, 0], sizes = [1, 32], strides = [1, 1]} : vector<8x32xf32> to vector<1x32xf32>
    %20 = vector.broadcast %19 : vector<1x32xf32> to vector<64x32xf32>
    %21 = arith.mulf %18, %20 : vector<64x32xf32>
    %22 = vector.extract_strided_slice %2 {offsets = [1, 0], sizes = [1, 32], strides = [1, 1]} : vector<8x32xf32> to vector<1x32xf32>
    %23 = vector.broadcast %22 : vector<1x32xf32> to vector<64x32xf32>
    %24 = arith.addf %21, %23 : vector<64x32xf32>
    %c0_8 = arith.constant 0 : index
    %c0_9 = arith.constant 0 : index
    %25 = vector.load %arg3[%c0_8, %c0_9] : memref<32x96xf32, #tpu.memory_space<vmem>>, vector<32x96xf32>
    %cst_10 = arith.constant dense<0.000000e+00> : vector<64x96xf32>
    %26 = tpu.matmul %24, %25, %cst_10 {dimension_numbers = #tpu.dot_dimension_numbers<[1], [0], [0], [1], [0, 0, 1, 1], [], []>} : vector<64x32xf32>, vector<32x96xf32>, vector<64x96xf32> -> vector<64x96xf32>
    %c0_11 = arith.constant 0 : index
    %c0_12 = arith.constant 0 : index
    %27 = vector.load %arg4[%c0_11, %c0_12] : memref<1x96xf32, #tpu.memory_space<vmem>>, vector<1x96xf32>
    %28 = vector.broadcast %27 : vector<1x96xf32> to vector<64x96xf32>
    %29 = arith.addf %26, %28 : vector<64x96xf32>
    %30 = vector.extract_strided_slice %29 {offsets = [0, 0], sizes = [64, 8], strides = [1, 1]} : vector<64x96xf32> to vector<64x8xf32>
    %31 = vector.shape_cast %30 : vector<64x8xf32> to vector<4x16x8xf32>
    %32 = vector.extract_strided_slice %29 {offsets = [0, 8], sizes = [64, 8], strides = [1, 1]} : vector<64x96xf32> to vector<64x8xf32>
    %33 = vector.shape_cast %32 : vector<64x8xf32> to vector<4x16x8xf32>
    %34 = vector.extract_strided_slice %29 {offsets = [0, 16], sizes = [64, 8], strides = [1, 1]} : vector<64x96xf32> to vector<64x8xf32>
    %35 = vector.shape_cast %34 : vector<64x8xf32> to vector<4x16x8xf32>
    %36 = vector.extract_strided_slice %29 {offsets = [0, 24], sizes = [64, 8], strides = [1, 1]} : vector<64x96xf32> to vector<64x8xf32>
    %37 = vector.shape_cast %36 : vector<64x8xf32> to vector<4x16x8xf32>
    %38 = tpu.concatenate %31, %33, %35, %37 in 0 : vector<4x16x8xf32>, vector<4x16x8xf32>, vector<4x16x8xf32>, vector<4x16x8xf32> -> vector<16x16x8xf32>
    %39 = vector.extract_strided_slice %29 {offsets = [0, 32], sizes = [64, 8], strides = [1, 1]} : vector<64x96xf32> to vector<64x8xf32>
    %40 = vector.shape_cast %39 : vector<64x8xf32> to vector<4x16x8xf32>
    %41 = vector.extract_strided_slice %29 {offsets = [0, 40], sizes = [64, 8], strides = [1, 1]} : vector<64x96xf32> to vector<64x8xf32>
    %42 = vector.shape_cast %41 : vector<64x8xf32> to vector<4x16x8xf32>
    %43 = vector.extract_strided_slice %29 {offsets = [0, 48], sizes = [64, 8], strides = [1, 1]} : vector<64x96xf32> to vector<64x8xf32>
    %44 = vector.shape_cast %43 : vector<64x8xf32> to vector<4x16x8xf32>
    %45 = vector.extract_strided_slice %29 {offsets = [0, 56], sizes = [64, 8], strides = [1, 1]} : vector<64x96xf32> to vector<64x8xf32>
    %46 = vector.shape_cast %45 : vector<64x8xf32> to vector<4x16x8xf32>
    %47 = tpu.concatenate %40, %42, %44, %46 in 0 : vector<4x16x8xf32>, vector<4x16x8xf32>, vector<4x16x8xf32>, vector<4x16x8xf32> -> vector<16x16x8xf32>
    %48 = vector.extract_strided_slice %29 {offsets = [0, 64], sizes = [64, 8], strides = [1, 1]} : vector<64x96xf32> to vector<64x8xf32>
    %49 = vector.shape_cast %48 : vector<64x8xf32> to vector<4x16x8xf32>
    %50 = vector.extract_strided_slice %29 {offsets = [0, 72], sizes = [64, 8], strides = [1, 1]} : vector<64x96xf32> to vector<64x8xf32>
    %51 = vector.shape_cast %50 : vector<64x8xf32> to vector<4x16x8xf32>
    %52 = vector.extract_strided_slice %29 {offsets = [0, 80], sizes = [64, 8], strides = [1, 1]} : vector<64x96xf32> to vector<64x8xf32>
    %53 = vector.shape_cast %52 : vector<64x8xf32> to vector<4x16x8xf32>
    %54 = vector.extract_strided_slice %29 {offsets = [0, 88], sizes = [64, 8], strides = [1, 1]} : vector<64x96xf32> to vector<64x8xf32>
    %55 = vector.shape_cast %54 : vector<64x8xf32> to vector<4x16x8xf32>
    %56 = tpu.concatenate %49, %51, %53, %55 in 0 : vector<4x16x8xf32>, vector<4x16x8xf32>, vector<4x16x8xf32>, vector<4x16x8xf32> -> vector<16x16x8xf32>
    "tpu.trace_start"() <{level = 10 : i32, message = "gqd,gkd->gqk"}> : () -> ()
    %cst_13 = arith.constant dense<0.000000e+00> : vector<16x16x16xf32>
    %57 = tpu.matmul %38, %47, %cst_13 {dimension_numbers = #tpu.dot_dimension_numbers<[2], [2], [1], [1], [0, 0, 0, 1, 1, 1], [0], [0]>} : vector<16x16x8xf32>, vector<16x16x8xf32>, vector<16x16x16xf32> -> vector<16x16x16xf32>
    "tpu.trace_stop"() : () -> ()
    %cst_14 = arith.constant 0.353553385 : f32
    %58 = vector.broadcast %cst_14 : f32 to vector<16x16x16xf32>
    %59 = arith.mulf %57, %58 : vector<16x16x16xf32>
    %cst_15 = arith.constant dense<0xFF800000> : vector<16x16xf32>
    %60 = vector.multi_reduction <maximumf>, %59, %cst_15 [2] : vector<16x16x16xf32> to vector<16x16xf32>
    %61 = vector.shape_cast %60 : vector<16x16xf32> to vector<16x16x1xf32>
    %62 = vector.broadcast %61 : vector<16x16x1xf32> to vector<16x16x16xf32>
    %63 = arith.subf %59, %62 : vector<16x16x16xf32>
    %64 = math.exp %63 : vector<16x16x16xf32>
    %cst_16 = arith.constant dense<0.000000e+00> : vector<16x16xf32>
    %65 = vector.multi_reduction <add>, %64, %cst_16 [2] : vector<16x16x16xf32> to vector<16x16xf32>
    %66 = vector.shape_cast %65 : vector<16x16xf32> to vector<16x16x1xf32>
    %67 = tpu.reciprocal %66 {approx = true} : vector<16x16x1xf32> -> vector<16x16x1xf32>
    %68 = vector.broadcast %67 : vector<16x16x1xf32> to vector<16x16x16xf32>
    %69 = arith.mulf %64, %68 : vector<16x16x16xf32>
    "tpu.trace_start"() <{level = 10 : i32, message = "gqk,gkd->gqd"}> : () -> ()
    %cst_17 = arith.constant dense<0.000000e+00> : vector<16x16x8xf32>
    %70 = tpu.matmul %69, %56, %cst_17 {dimension_numbers = #tpu.dot_dimension_numbers<[2], [1], [1], [2], [0, 0, 0, 1, 1, 2], [0], [0]>} : vector<16x16x16xf32>, vector<16x16x8xf32>, vector<16x16x8xf32> -> vector<16x16x8xf32>
    "tpu.trace_stop"() : () -> ()
    %71 = vector.extract_strided_slice %70 {offsets = [0, 0, 0], sizes = [4, 16, 8], strides = [1, 1, 1]} : vector<16x16x8xf32> to vector<4x16x8xf32>
    %72 = vector.shape_cast %71 : vector<4x16x8xf32> to vector<64x8xf32>
    %73 = vector.extract_strided_slice %70 {offsets = [4, 0, 0], sizes = [4, 16, 8], strides = [1, 1, 1]} : vector<16x16x8xf32> to vector<4x16x8xf32>
    %74 = vector.shape_cast %73 : vector<4x16x8xf32> to vector<64x8xf32>
    %75 = vector.extract_strided_slice %70 {offsets = [8, 0, 0], sizes = [4, 16, 8], strides = [1, 1, 1]} : vector<16x16x8xf32> to vector<4x16x8xf32>
    %76 = vector.shape_cast %75 : vector<4x16x8xf32> to vector<64x8xf32>
    %77 = vector.extract_strided_slice %70 {offsets = [12, 0, 0], sizes = [4, 16, 8], strides = [1, 1, 1]} : vector<16x16x8xf32> to vector<4x16x8xf32>
    %78 = vector.shape_cast %77 : vector<4x16x8xf32> to vector<64x8xf32>
    %79 = tpu.concatenate %72, %74, %76, %78 in 1 : vector<64x8xf32>, vector<64x8xf32>, vector<64x8xf32>, vector<64x8xf32> -> vector<64x32xf32>
    %c0_18 = arith.constant 0 : index
    %c0_19 = arith.constant 0 : index
    %80 = vector.load %arg5[%c0_18, %c0_19] : memref<32x32xf32, #tpu.memory_space<vmem>>, vector<32x32xf32>
    %cst_20 = arith.constant dense<0.000000e+00> : vector<64x32xf32>
    %81 = tpu.matmul %79, %80, %cst_20 {dimension_numbers = #tpu.dot_dimension_numbers<[1], [0], [0], [1], [0, 0, 1, 1], [], []>} : vector<64x32xf32>, vector<32x32xf32>, vector<64x32xf32> -> vector<64x32xf32>
    %82 = arith.addf %1, %81 : vector<64x32xf32>
    %83 = vector.extract_strided_slice %2 {offsets = [6, 0], sizes = [1, 32], strides = [1, 1]} : vector<8x32xf32> to vector<1x32xf32>
    %84 = vector.broadcast %83 : vector<1x32xf32> to vector<64x32xf32>
    %85 = arith.addf %82, %84 : vector<64x32xf32>
    %cst_21 = arith.constant dense<0.000000e+00> : vector<64xf32>
    %86 = vector.multi_reduction <add>, %85, %cst_21 [1] : vector<64x32xf32> to vector<64xf32>
    %87 = vector.shape_cast %86 : vector<64xf32> to vector<64x1xf32>
    %cst_22 = arith.constant 3.200000e+01 : f32
    %88 = vector.broadcast %cst_22 : f32 to vector<64x1xf32>
    %89 = arith.divf %87, %88 : vector<64x1xf32>
    %90 = vector.broadcast %89 : vector<64x1xf32> to vector<64x32xf32>
    %91 = arith.subf %85, %90 : vector<64x32xf32>
    %92 = arith.mulf %91, %91 : vector<64x32xf32>
    %cst_23 = arith.constant dense<0.000000e+00> : vector<64xf32>
    %93 = vector.multi_reduction <add>, %92, %cst_23 [1] : vector<64x32xf32> to vector<64xf32>
    %94 = vector.shape_cast %93 : vector<64xf32> to vector<64x1xf32>
    %cst_24 = arith.constant 3.200000e+01 : f32
    %95 = vector.broadcast %cst_24 : f32 to vector<64x1xf32>
    %96 = arith.divf %94, %95 : vector<64x1xf32>
    %cst_25 = arith.constant 9.99999974E-6 : f32
    %97 = vector.broadcast %cst_25 : f32 to vector<64x1xf32>
    %98 = arith.addf %96, %97 : vector<64x1xf32>
    %99 = math.rsqrt %98 : vector<64x1xf32>
    %100 = vector.broadcast %99 : vector<64x1xf32> to vector<64x32xf32>
    %101 = arith.mulf %91, %100 : vector<64x32xf32>
    %102 = vector.extract_strided_slice %2 {offsets = [2, 0], sizes = [1, 32], strides = [1, 1]} : vector<8x32xf32> to vector<1x32xf32>
    %103 = vector.broadcast %102 : vector<1x32xf32> to vector<64x32xf32>
    %104 = arith.mulf %101, %103 : vector<64x32xf32>
    %105 = vector.extract_strided_slice %2 {offsets = [3, 0], sizes = [1, 32], strides = [1, 1]} : vector<8x32xf32> to vector<1x32xf32>
    %106 = vector.broadcast %105 : vector<1x32xf32> to vector<64x32xf32>
    %107 = arith.addf %104, %106 : vector<64x32xf32>
    %c0_26 = arith.constant 0 : index
    %c0_27 = arith.constant 0 : index
    %108 = vector.load %arg6[%c0_26, %c0_27] : memref<32x128xf32, #tpu.memory_space<vmem>>, vector<32x128xf32>
    %cst_28 = arith.constant dense<0.000000e+00> : vector<64x128xf32>
    %109 = tpu.matmul %107, %108, %cst_28 {dimension_numbers = #tpu.dot_dimension_numbers<[1], [0], [0], [1], [0, 0, 1, 1], [], []>} : vector<64x32xf32>, vector<32x128xf32>, vector<64x128xf32> -> vector<64x128xf32>
    %c0_29 = arith.constant 0 : index
    %c0_30 = arith.constant 0 : index
    %110 = vector.load %arg7[%c0_29, %c0_30] : memref<1x128xf32, #tpu.memory_space<vmem>>, vector<1x128xf32>
    %111 = vector.broadcast %110 : vector<1x128xf32> to vector<64x128xf32>
    %112 = arith.addf %109, %111 : vector<64x128xf32>
    %cst_31 = arith.constant 0.000000e+00 : f32
    %113 = vector.broadcast %cst_31 : f32 to vector<64x128xf32>
    %114 = arith.maximumf %112, %113 : vector<64x128xf32>
    %c0_32 = arith.constant 0 : index
    %c0_33 = arith.constant 0 : index
    %115 = vector.load %arg8[%c0_32, %c0_33] : memref<128x32xf32, #tpu.memory_space<vmem>>, vector<128x32xf32>
    %cst_34 = arith.constant dense<0.000000e+00> : vector<64x32xf32>
    %116 = tpu.matmul %114, %115, %cst_34 {dimension_numbers = #tpu.dot_dimension_numbers<[1], [0], [0], [1], [0, 0, 1, 1], [], []>} : vector<64x128xf32>, vector<128x32xf32>, vector<64x32xf32> -> vector<64x32xf32>
    %117 = arith.addf %85, %116 : vector<64x32xf32>
    %118 = vector.extract_strided_slice %2 {offsets = [7, 0], sizes = [1, 32], strides = [1, 1]} : vector<8x32xf32> to vector<1x32xf32>
    %119 = vector.broadcast %118 : vector<1x32xf32> to vector<64x32xf32>
    %120 = arith.addf %117, %119 : vector<64x32xf32>
    %cst_35 = arith.constant dense<0.000000e+00> : vector<64xf32>
    %121 = vector.multi_reduction <add>, %120, %cst_35 [1] : vector<64x32xf32> to vector<64xf32>
    %122 = vector.shape_cast %121 : vector<64xf32> to vector<64x1xf32>
    %cst_36 = arith.constant 3.200000e+01 : f32
    %123 = vector.broadcast %cst_36 : f32 to vector<64x1xf32>
    %124 = arith.divf %122, %123 : vector<64x1xf32>
    %125 = vector.broadcast %124 : vector<64x1xf32> to vector<64x32xf32>
    %126 = arith.subf %120, %125 : vector<64x32xf32>
    %127 = arith.mulf %126, %126 : vector<64x32xf32>
    %cst_37 = arith.constant dense<0.000000e+00> : vector<64xf32>
    %128 = vector.multi_reduction <add>, %127, %cst_37 [1] : vector<64x32xf32> to vector<64xf32>
    %129 = vector.shape_cast %128 : vector<64xf32> to vector<64x1xf32>
    %cst_38 = arith.constant 3.200000e+01 : f32
    %130 = vector.broadcast %cst_38 : f32 to vector<64x1xf32>
    %131 = arith.divf %129, %130 : vector<64x1xf32>
    %cst_39 = arith.constant 9.99999974E-6 : f32
    %132 = vector.broadcast %cst_39 : f32 to vector<64x1xf32>
    %133 = arith.addf %131, %132 : vector<64x1xf32>
    %134 = math.rsqrt %133 : vector<64x1xf32>
    %135 = vector.broadcast %134 : vector<64x1xf32> to vector<64x32xf32>
    %136 = arith.mulf %126, %135 : vector<64x32xf32>
    %137 = vector.extract_strided_slice %2 {offsets = [4, 0], sizes = [1, 32], strides = [1, 1]} : vector<8x32xf32> to vector<1x32xf32>
    %138 = vector.broadcast %137 : vector<1x32xf32> to vector<64x32xf32>
    %139 = arith.mulf %136, %138 : vector<64x32xf32>
    %140 = vector.extract_strided_slice %2 {offsets = [5, 0], sizes = [1, 32], strides = [1, 1]} : vector<8x32xf32> to vector<1x32xf32>
    %141 = vector.broadcast %140 : vector<1x32xf32> to vector<64x32xf32>
    %142 = arith.addf %139, %141 : vector<64x32xf32>
    %c0_40 = arith.constant 0 : index
    %c0_41 = arith.constant 0 : index
    %143 = vector.load %arg9[%c0_40, %c0_41] : memref<32x128xf32, #tpu.memory_space<vmem>>, vector<32x128xf32>
    %cst_42 = arith.constant dense<0.000000e+00> : vector<64x128xf32>
    %144 = tpu.matmul %142, %143, %cst_42 {dimension_numbers = #tpu.dot_dimension_numbers<[1], [0], [0], [1], [0, 0, 1, 1], [], []>} : vector<64x32xf32>, vector<32x128xf32>, vector<64x128xf32> -> vector<64x128xf32>
    %c0_43 = arith.constant 0 : index
    %c0_44 = arith.constant 0 : index
    %145 = vector.load %arg10[%c0_43, %c0_44] : memref<1x128xf32, #tpu.memory_space<vmem>>, vector<1x128xf32>
    %146 = vector.broadcast %145 : vector<1x128xf32> to vector<64x128xf32>
    %147 = arith.addf %144, %146 : vector<64x128xf32>
    %148 = vector.shape_cast %147 : vector<64x128xf32> to vector<4x16x128xf32>
    %c0_45 = arith.constant 0 : index
    %c0_46 = arith.constant 0 : index
    %c0_47 = arith.constant 0 : index
    %149 = vector.load %arg11[%c0_45, %c0_46, %c0_47] : memref<4x16x128xf32, #tpu.memory_space<vmem>>, vector<4x16x128xf32>
    tpu.vector_store %arg11[%c0_45, %c0_46, %c0_47], %148 {strides = array<i32>} : memref<4x16x128xf32, #tpu.memory_space<vmem>>, vector<4x16x128xf32>,
    return
  }
  func.func @transform_0(%arg0: i32) -> (i32, i32, i32) {
    %c0_i32 = arith.constant 0 : i32
    %c0_i32_0 = arith.constant 0 : i32
    %c0_i32_1 = arith.constant 0 : i32
    return %arg0, %c0_i32, %c0_i32_0 : i32, i32, i32
  }
  func.func @transform_1(%arg0: i32) -> (i32, i32) {
    %c0_i32 = arith.constant 0 : i32
    %c0_i32_0 = arith.constant 0 : i32
    %c0_i32_1 = arith.constant 0 : i32
    return %c0_i32, %c0_i32_0 : i32, i32
  }
  func.func @transform_2(%arg0: i32) -> (i32, i32) {
    %c0_i32 = arith.constant 0 : i32
    %c0_i32_0 = arith.constant 0 : i32
    %c0_i32_1 = arith.constant 0 : i32
    return %c0_i32, %c0_i32_0 : i32, i32
  }
  func.func @transform_3(%arg0: i32) -> (i32, i32) {
    %c0_i32 = arith.constant 0 : i32
    %c0_i32_0 = arith.constant 0 : i32
    %c0_i32_1 = arith.constant 0 : i32
    return %c0_i32, %c0_i32_0 : i32, i32
  }
  func.func @transform_4(%arg0: i32) -> (i32, i32) {
    %c0_i32 = arith.constant 0 : i32
    %c0_i32_0 = arith.constant 0 : i32
    %c0_i32_1 = arith.constant 0 : i32
    return %c0_i32, %c0_i32_0 : i32, i32
  }
  func.func @transform_5(%arg0: i32) -> (i32, i32) {
    %c0_i32 = arith.constant 0 : i32
    %c0_i32_0 = arith.constant 0 : i32
    %c0_i32_1 = arith.constant 0 : i32
    return %c0_i32, %c0_i32_0 : i32, i32
  }
  func.func @transform_6(%arg0: i32) -> (i32, i32) {
    %c0_i32 = arith.constant 0 : i32
    %c0_i32_0 = arith.constant 0 : i32
    %c0_i32_1 = arith.constant 0 : i32
    return %c0_i32, %c0_i32_0 : i32, i32
  }
  func.func @transform_7(%arg0: i32) -> (i32, i32) {
    %c0_i32 = arith.constant 0 : i32
    %c0_i32_0 = arith.constant 0 : i32
    %c0_i32_1 = arith.constant 0 : i32
    return %c0_i32, %c0_i32_0 : i32, i32
  }
  func.func @transform_8(%arg0: i32) -> (i32, i32) {
    %c0_i32 = arith.constant 0 : i32
    %c0_i32_0 = arith.constant 0 : i32
    %c0_i32_1 = arith.constant 0 : i32
    return %c0_i32, %c0_i32_0 : i32, i32
  }
  func.func @transform_9(%arg0: i32) -> (i32, i32) {
    %c0_i32 = arith.constant 0 : i32
    %c0_i32_0 = arith.constant 0 : i32
    %c0_i32_1 = arith.constant 0 : i32
    return %c0_i32, %c0_i32_0 : i32, i32
  }
  func.func @transform_10(%arg0: i32) -> (i32, i32, i32) {
    %c0_i32 = arith.constant 0 : i32
    %c0_i32_0 = arith.constant 0 : i32
    %c0_i32_1 = arith.constant 0 : i32
    return %arg0, %c0_i32, %c0_i32_0 : i32, i32, i32
  }
}

</mosaic_0001>

<llo_original>
// kernel: tpu_custom_call.1
$region0: #{tpu_custom_call.1}
  #allocation0 [shape = 'u32[]', space=smem, size = 0x4, offset = 0x4, fixed_abs, tag = 'smem constant byte address 0x4 - core index']
  #allocation1 [shape = 'u32[72,128]{1,0:T(1,128)}', space=vmem, size = 0x9000, scoped, tag = 'internal scratch']
  %s0 = inlined_call_operand.vmem [shape: f32[8,16,32], index: 0, kind: input, shape index: {}]
  %s1 = inlined_call_operand.hbm [shape: f32[8,32], index: 1, kind: input, shape index: {}]
  %s2 = inlined_call_operand.vmem [shape: f32[32,96], index: 2, kind: input, shape index: {}]
  %s3 = inlined_call_operand.vmem [shape: f32[1,96], index: 3, kind: input, shape index: {}]
  %s4 = inlined_call_operand.hbm [shape: f32[32,32], index: 4, kind: input, shape index: {}]
  %s5 = inlined_call_operand.hbm [shape: f32[32,128], index: 5, kind: input, shape index: {}]
  %s6 = inlined_call_operand.vmem [shape: f32[1,128], index: 6, kind: input, shape index: {}]
  %s7 = inlined_call_operand.vmem [shape: f32[128,32], index: 7, kind: input, shape index: {}]
  %s8 = inlined_call_operand.hbm [shape: f32[32,128], index: 8, kind: input, shape index: {}]
  %s9 = inlined_call_operand.vmem [shape: f32[1,128], index: 9, kind: input, shape index: {}]
  %s10 = inlined_call_operand.hbm [shape: f32[8,16,128], index: 10, kind: output, shape index: {}]
  %s11 = sld [smem:[#allocation0]]
  $region89: #{tpu_custom_call.1} parent=0
    _
  %s13 = ssub.s32 1, %s11
  %s14 = scalar_select 0, %s13, %s11
  $region1: #{tpu_custom_call.1} parent=0
    #allocation2 [shape = 'u8[4096]{0}', space=vmem, size = 0x1000, scoped, tag = 'input window, operand 1, single buffered']
    #allocation3 [shape = 's32[2]{0}', space=sflag, size = 0x8, scoped, tag = 'scoped memory for tpu_custom_call.1']
    #allocation4 [shape = 's32[2]{0}', space=sflag, size = 0x8, scoped, tag = 'scoped memory for tpu_custom_call.1']
    #allocation5 [shape = 'u8[16384]{0}', space=vmem, size = 0x4000, scoped, tag = 'input window, operand 4, single buffered']
    #allocation6 [shape = 's32[1]{0}', space=sflag, size = 0x4, scoped, tag = 'scoped memory for tpu_custom_call.1']
    #allocation7 [shape = 'u8[16384]{0}', space=vmem, size = 0x4000, scoped, tag = 'input window, operand 5, single buffered']
    #allocation8 [shape = 'u8[16384]{0}', space=vmem, size = 0x4000, scoped, tag = 'input window, operand 8, single buffered']
    #allocation9 [shape = 's32[1]{0}', space=sflag, size = 0x4, scoped, tag = 'scoped memory for tpu_custom_call.1']
    #allocation10 [shape = 'u8[65536]{0}', space=vmem, size = 0x10000, scoped, tag = 'output window, operand 0']
    %15 = vsyncpa [#allocation3], 0
    %16 = vsyncpa [#allocation6], 0
    %17 = vsyncpa [#allocation9], 0
    %18 = vsyncpa [#allocation4], 0
    %s19 = scalar_lea.sflag [#allocation4], 1
    %20 = vsyncpa %s19, 0
    loop: start=0, step=1, limit=4
    $region2: #{tpu_custom_call.1} parent=1 // loop_pre_header
      _
    $region3: #{tpu_custom_call.1} parent=1 // loop_header
      %s22 = sphi 0, %s26
      %p23 = scmp.ge.s32.totalorder %s22, 4
      %s32 = sphi 0, %s34
      %s35 = sphi 0, %s32
      %s36 = sphi 0, %s35
      %s52 = sphi 0, %s36
      %s56 = sphi 0, %s56
      %s58 = sphi 0, %s56
      %s59 = sphi 0, %s58
      %s73 = sphi 0, %s59
      %s77 = sphi 0, %s77
      %s79 = sphi 0, %s77
      %s80 = sphi 0, %s79
      %s94 = sphi 0, %s80
      %s98 = sphi 0, %s98
      %s100 = sphi 0, %s98
      %s101 = sphi 0, %s100
      %s115 = sphi 0, %s101
      %s119 = sphi 0, %s119
      %s121 = sphi 0, %s119
      %s122 = sphi 0, %s121
      %s136 = sphi 0, %s122
      %s140 = sphi 0, %s140
      %s142 = sphi 0, %s140
      %s143 = sphi 0, %s142
      %s157 = sphi 0, %s143
      %s161 = sphi 0, %s161
      %s163 = sphi 0, %s161
      %s164 = sphi 0, %s163
      %s178 = sphi 0, %s164
      %s182 = sphi 0, %s182
      %s184 = sphi 0, %s182
      %s185 = sphi 0, %s184
      %s199 = sphi 0, %s185
      %s203 = sphi 0, %s203
      %s205 = sphi 0, %s203
      %s206 = sphi 0, %s205
      %s220 = sphi 0, %s206
      %s224 = sphi 0, %s224
      %s226 = sphi 0, %s224
      %s227 = sphi 0, %s226
      %s241 = sphi 0, %s227
      %s247 = sphi 0, %s249
      %s250 = sphi 0, %s247
      %s251 = sphi 0, %s250
      %s267 = sphi 0, %s251
    $region4: #{tpu_custom_call.1} parent=1 // loop_header_branch
      %25 = sbr.rel (%p23) target = $region8
    $region5: #{tpu_custom_call.1} parent=1 // loop_body
      %s27 = ssub.s32 %s22, 1
      %s28 = ssub.s32 %s22, 2
      %s29 = sadd.s32 %s22, 1
      %s30 = ssub.s32 %s22, %s29
      %p31 = scmp.eq.s32.totalorder %s30, 0
      %s33 = sadd.s32 %s32, 1
      %s34 = scalar_select %p31, %s32, %s33
      %p37 = pneg %p31
      %p38 = scmp.eq.s32.totalorder %s22, 1
      %p39 = por %p37, %p38
      %p40 = scmp.ne.s32.totalorder %s32, %s35
      %p41 = scmp.eq.s32.totalorder %s22, 0
      %p42 = por %p40, %p41
      %p43 = scmp.ne.s32.totalorder %s32, %s35
      %p44 = scmp.eq.s32.totalorder %s27, 1
      %p45 = por %p43, %p44
      %p46 = scmp.ne.s32.totalorder %s35, %s36
      %p47 = scmp.eq.s32.totalorder %s27, 0
      %p48 = por %p46, %p47
      %p49 = scmp.ne.s32.totalorder %s35, %s36
      %p50 = scmp.eq.s32.totalorder %s28, 1
      %p51 = por %p49, %p50
      %p53 = scmp.ne.s32.totalorder %s36, %s52
      %p54 = scmp.eq.s32.totalorder %s28, 0
      %p55 = por %p53, %p54
      %s57 = sadd.s32 %s56, 1
      %p60 = scmp.eq.s32.totalorder %s22, 1
      %p61 = scmp.ne.s32.totalorder %s56, %s58
      %p62 = scmp.eq.s32.totalorder %s22, 0
      %p63 = por %p61, %p62
      %p64 = scmp.ne.s32.totalorder %s56, %s58
      %p65 = scmp.eq.s32.totalorder %s27, 1
      %p66 = por %p64, %p65
      %p67 = scmp.ne.s32.totalorder %s58, %s59
      %p68 = scmp.eq.s32.totalorder %s27, 0
      %p69 = por %p67, %p68
      %p70 = scmp.ne.s32.totalorder %s58, %s59
      %p71 = scmp.eq.s32.totalorder %s28, 1
      %p72 = por %p70, %p71
      %p74 = scmp.ne.s32.totalorder %s59, %s73
      %p75 = scmp.eq.s32.totalorder %s28, 0
      %p76 = por %p74, %p75
      %s78 = sadd.s32 %s77, 1
      %p81 = scmp.eq.s32.totalorder %s22, 1
      %p82 = scmp.ne.s32.totalorder %s77, %s79
      %p83 = scmp.eq.s32.totalorder %s22, 0
      %p84 = por %p82, %p83
      %p85 = scmp.ne.s32.totalorder %s77, %s79
      %p86 = scmp.eq.s32.totalorder %s27, 1
      %p87 = por %p85, %p86
      %p88 = scmp.ne.s32.totalorder %s79, %s80
      %p89 = scmp.eq.s32.totalorder %s27, 0
      %p90 = por %p88, %p89
      %p91 = scmp.ne.s32.totalorder %s79, %s80
      %p92 = scmp.eq.s32.totalorder %s28, 1
      %p93 = por %p91, %p92
      %p95 = scmp.ne.s32.totalorder %s80, %s94
      %p96 = scmp.eq.s32.totalorder %s28, 0
      %p97 = por %p95, %p96
      %s99 = sadd.s32 %s98, 1
      %p102 = scmp.eq.s32.totalorder %s22, 1
      %p103 = scmp.ne.s32.totalorder %s98, %s100
      %p104 = scmp.eq.s32.totalorder %s22, 0
      %p105 = por %p103, %p104
      %p106 = scmp.ne.s32.totalorder %s98, %s100
      %p107 = scmp.eq.s32.totalorder %s27, 1
      %p108 = por %p106, %p107
      %p109 = scmp.ne.s32.totalorder %s100, %s101
      %p110 = scmp.eq.s32.totalorder %s27, 0
      %p111 = por %p109, %p110
      %p112 = scmp.ne.s32.totalorder %s100, %s101
      %p113 = scmp.eq.s32.totalorder %s28, 1
      %p114 = por %p112, %p113
      %p116 = scmp.ne.s32.totalorder %s101, %s115
      %p117 = scmp.eq.s32.totalorder %s28, 0
      %p118 = por %p116, %p117
      %s120 = sadd.s32 %s119, 1
      %p123 = scmp.eq.s32.totalorder %s22, 1
      %p124 = scmp.ne.s32.totalorder %s119, %s121
      %p125 = scmp.eq.s32.totalorder %s22, 0
      %p126 = por %p124, %p125
      %p127 = scmp.ne.s32.totalorder %s119, %s121
      %p128 = scmp.eq.s32.totalorder %s27, 1
      %p129 = por %p127, %p128
      %p130 = scmp.ne.s32.totalorder %s121, %s122
      %p131 = scmp.eq.s32.totalorder %s27, 0
      %p132 = por %p130, %p131
      %p133 = scmp.ne.s32.totalorder %s121, %s122
      %p134 = scmp.eq.s32.totalorder %s28, 1
      %p135 = por %p133, %p134
      %p137 = scmp.ne.s32.totalorder %s122, %s136
      %p138 = scmp.eq.s32.totalorder %s28, 0
      %p139 = por %p137, %p138
      %s141 = sadd.s32 %s140, 1
      %p144 = scmp.eq.s32.totalorder %s22, 1
      %p145 = scmp.ne.s32.totalorder %s140, %s142
      %p146 = scmp.eq.s32.totalorder %s22, 0
      %p147 = por %p145, %p146
      %p148 = scmp.ne.s32.totalorder %s140, %s142
      %p149 = scmp.eq.s32.totalorder %s27, 1
      %p150 = por %p148, %p149
      %p151 = scmp.ne.s32.totalorder %s142, %s143
      %p152 = scmp.eq.s32.totalorder %s27, 0
      %p153 = por %p151, %p152
      %p154 = scmp.ne.s32.totalorder %s142, %s143
      %p155 = scmp.eq.s32.totalorder %s28, 1
      %p156 = por %p154, %p155
      %p158 = scmp.ne.s32.totalorder %s143, %s157
      %p159 = scmp.eq.s32.totalorder %s28, 0
      %p160 = por %p158, %p159
      %s162 = sadd.s32 %s161, 1
      %p165 = scmp.eq.s32.totalorder %s22, 1
      %p166 = scmp.ne.s32.totalorder %s161, %s163
      %p167 = scmp.eq.s32.totalorder %s22, 0
      %p168 = por %p166, %p167
      %p169 = scmp.ne.s32.totalorder %s161, %s163
      %p170 = scmp.eq.s32.totalorder %s27, 1
      %p171 = por %p169, %p170
      %p172 = scmp.ne.s32.totalorder %s163, %s164
      %p173 = scmp.eq.s32.totalorder %s27, 0
      %p174 = por %p172, %p173
      %p175 = scmp.ne.s32.totalorder %s163, %s164
      %p176 = scmp.eq.s32.totalorder %s28, 1
      %p177 = por %p175, %p176
      %p179 = scmp.ne.s32.totalorder %s164, %s178
      %p180 = scmp.eq.s32.totalorder %s28, 0
      %p181 = por %p179, %p180
      %s183 = sadd.s32 %s182, 1
      %p186 = scmp.eq.s32.totalorder %s22, 1
      %p187 = scmp.ne.s32.totalorder %s182, %s184
      %p188 = scmp.eq.s32.totalorder %s22, 0
      %p189 = por %p187, %p188
      %p190 = scmp.ne.s32.totalorder %s182, %s184
      %p191 = scmp.eq.s32.totalorder %s27, 1
      %p192 = por %p190, %p191
      %p193 = scmp.ne.s32.totalorder %s184, %s185
      %p194 = scmp.eq.s32.totalorder %s27, 0
      %p195 = por %p193, %p194
      %p196 = scmp.ne.s32.totalorder %s184, %s185
      %p197 = scmp.eq.s32.totalorder %s28, 1
      %p198 = por %p196, %p197
      %p200 = scmp.ne.s32.totalorder %s185, %s199
      %p201 = scmp.eq.s32.totalorder %s28, 0
      %p202 = por %p200, %p201
      %s204 = sadd.s32 %s203, 1
      %p207 = scmp.eq.s32.totalorder %s22, 1
      %p208 = scmp.ne.s32.totalorder %s203, %s205
      %p209 = scmp.eq.s32.totalorder %s22, 0
      %p210 = por %p208, %p209
      %p211 = scmp.ne.s32.totalorder %s203, %s205
      %p212 = scmp.eq.s32.totalorder %s27, 1
      %p213 = por %p211, %p212
      %p214 = scmp.ne.s32.totalorder %s205, %s206
      %p215 = scmp.eq.s32.totalorder %s27, 0
      %p216 = por %p214, %p215
      %p217 = scmp.ne.s32.totalorder %s205, %s206
      %p218 = scmp.eq.s32.totalorder %s28, 1
      %p219 = por %p217, %p218
      %p221 = scmp.ne.s32.totalorder %s206, %s220
      %p222 = scmp.eq.s32.totalorder %s28, 0
      %p223 = por %p221, %p222
      %s225 = sadd.s32 %s224, 1
      %p228 = scmp.eq.s32.totalorder %s22, 1
      %p229 = scmp.ne.s32.totalorder %s224, %s226
      %p230 = scmp.eq.s32.totalorder %s22, 0
      %p231 = por %p229, %p230
      %p232 = scmp.ne.s32.totalorder %s224, %s226
      %p233 = scmp.eq.s32.totalorder %s27, 1
      %p234 = por %p232, %p233
      %p235 = scmp.ne.s32.totalorder %s226, %s227
      %p236 = scmp.eq.s32.totalorder %s27, 0
      %p237 = por %p235, %p236
      %p238 = scmp.ne.s32.totalorder %s226, %s227
      %p239 = scmp.eq.s32.totalorder %s28, 1
      %p240 = por %p238, %p239
      %p242 = scmp.ne.s32.totalorder %s227, %s241
      %p243 = scmp.eq.s32.totalorder %s28, 0
      %p244 = por %p242, %p243
      %s245 = ssub.s32 %s22, %s29
      %p246 = scmp.eq.s32.totalorder %s245, 0
      %s248 = sadd.s32 %s247, 1
      %s249 = scalar_select %p246, %s247, %s248
      %p252 = pneg %p246
      %p253 = scmp.eq.s32.totalorder %s22, 1
      %p254 = por %p252, %p253
      %p255 = scmp.ne.s32.totalorder %s247, %s250
      %p256 = scmp.eq.s32.totalorder %s22, 0
      %p257 = por %p255, %p256
      %p258 = scmp.ne.s32.totalorder %s247, %s250
      %p259 = scmp.eq.s32.totalorder %s27, 1
      %p260 = por %p258, %p259
      %p261 = scmp.ne.s32.totalorder %s250, %s251
      %p262 = scmp.eq.s32.totalorder %s27, 0
      %p263 = por %p261, %p262
      %p264 = scmp.ne.s32.totalorder %s250, %s251
      %p265 = scmp.eq.s32.totalorder %s28, 1
      %p266 = por %p264, %p265
      %p268 = scmp.ne.s32.totalorder %s251, %s267
      %p269 = scmp.eq.s32.totalorder %s28, 0
      %p270 = por %p268, %p269
      %p271 = scmp.le.s32.totalorder 1, %s22
      %p272 = scmp.lt.s32.totalorder %s22, 3
      %p273 = pnand %p271, %p272
      %p274 = pneg %p273
      // Predicated region
      $region9: #{tpu_custom_call.1} parent=5 // pred_check
        _
      $region10: #{tpu_custom_call.1} parent=5 // pred_check_branch
        %276 = sbr.rel (%p273) target = $region12
      $region11: #{tpu_custom_call.1} parent=5 // pred_region
        %s277 = ssub.s32 %s22, 1
        // Predicated region
        $region13: #{tpu_custom_call.1} parent=11 // pred_check
          %p278 = pneg %p69
        $region14: #{tpu_custom_call.1} parent=11 // pred_check_branch
          %280 = sbr.rel (%p278) target = $region16
        $region15: #{tpu_custom_call.1} parent=11 // pred_region
          %282 = vsyncadd [#allocation3], 0
          %s284 = sshll.u32 %s1, 4
          %s285 = int_to_ptr.hbm [resolvable:$true] %s284
          %s286 = sshll.u32 [#allocation2], 4
          %s287 = int_to_ptr.vmem [resolvable:$true] %s286
          %289 = dma.hbm_to_vmem [thread:$0]  %s285, 128, %s287, [#allocation3]
        $region16: #{tpu_custom_call.1} parent=11 // pred_fallthru
          _
        // Predicated region
        $region17: #{tpu_custom_call.1} parent=11 // pred_check
          %p290 = pneg %p90
        $region18: #{tpu_custom_call.1} parent=11 // pred_check_branch
          %292 = sbr.rel (%p290) target = $region20
        $region19: #{tpu_custom_call.1} parent=11 // pred_region
          _
        $region20: #{tpu_custom_call.1} parent=11 // pred_fallthru
          _
        // Predicated region
        $region21: #{tpu_custom_call.1} parent=11 // pred_check
          %p293 = pneg %p111
        $region22: #{tpu_custom_call.1} parent=11 // pred_check_branch
          %295 = sbr.rel (%p293) target = $region24
        $region23: #{tpu_custom_call.1} parent=11 // pred_region
          _
        $region24: #{tpu_custom_call.1} parent=11 // pred_fallthru
          _
        // Predicated region
        $region25: #{tpu_custom_call.1} parent=11 // pred_check
          %p296 = pneg %p132
        $region26: #{tpu_custom_call.1} parent=11 // pred_check_branch
          %298 = sbr.rel (%p296) target = $region28
        $region27: #{tpu_custom_call.1} parent=11 // pred_region
          %300 = vsyncadd [#allocation6], 0
          %s301 = sshll.u32 %s4, 4
          %s302 = int_to_ptr.hbm [resolvable:$true] %s301
          %s303 = sshll.u32 [#allocation5], 4
          %s304 = int_to_ptr.vmem [resolvable:$true] %s303
          %309 = dma.hbm_to_vmem [thread:$0]  %s302, 512, %s304, [#allocation6], 128, 128, 8
        $region28: #{tpu_custom_call.1} parent=11 // pred_fallthru
          _
        // Predicated region
        $region29: #{tpu_custom_call.1} parent=11 // pred_check
          %p310 = pneg %p153
        $region30: #{tpu_custom_call.1} parent=11 // pred_check_branch
          %312 = sbr.rel (%p310) target = $region32
        $region31: #{tpu_custom_call.1} parent=11 // pred_region
          %314 = vsyncadd [#allocation6], 0
          %s315 = sshll.u32 %s5, 4
          %s316 = int_to_ptr.hbm [resolvable:$true] %s315
          %s317 = sshll.u32 [#allocation7], 4
          %s318 = int_to_ptr.vmem [resolvable:$true] %s317
          %323 = dma.hbm_to_vmem [thread:$0]  %s316, 512, %s318, [#allocation6], 128, 128, 8
        $region32: #{tpu_custom_call.1} parent=11 // pred_fallthru
          _
        // Predicated region
        $region33: #{tpu_custom_call.1} parent=11 // pred_check
          %p324 = pneg %p174
        $region34: #{tpu_custom_call.1} parent=11 // pred_check_branch
          %326 = sbr.rel (%p324) target = $region36
        $region35: #{tpu_custom_call.1} parent=11 // pred_region
          _
        $region36: #{tpu_custom_call.1} parent=11 // pred_fallthru
          _
        // Predicated region
        $region37: #{tpu_custom_call.1} parent=11 // pred_check
          %p327 = pneg %p195
        $region38: #{tpu_custom_call.1} parent=11 // pred_check_branch
          %329 = sbr.rel (%p327) target = $region40
        $region39: #{tpu_custom_call.1} parent=11 // pred_region
          _
        $region40: #{tpu_custom_call.1} parent=11 // pred_fallthru
          _
        // Predicated region
        $region41: #{tpu_custom_call.1} parent=11 // pred_check
          %p330 = pneg %p216
        $region42: #{tpu_custom_call.1} parent=11 // pred_check_branch
          %332 = sbr.rel (%p330) target = $region44
        $region43: #{tpu_custom_call.1} parent=11 // pred_region
          %334 = vsyncadd [#allocation9], 0
          %s335 = sshll.u32 %s8, 4
          %s336 = int_to_ptr.hbm [resolvable:$true] %s335
          %s337 = sshll.u32 [#allocation8], 4
          %s338 = int_to_ptr.vmem [resolvable:$true] %s337
          %343 = dma.hbm_to_vmem [thread:$0]  %s336, 512, %s338, [#allocation9], 128, 128, 8
        $region44: #{tpu_custom_call.1} parent=11 // pred_fallthru
          _
        // Predicated region
        $region45: #{tpu_custom_call.1} parent=11 // pred_check
          %p344 = pneg %p237
        $region46: #{tpu_custom_call.1} parent=11 // pred_check_branch
          %346 = sbr.rel (%p344) target = $region48
        $region47: #{tpu_custom_call.1} parent=11 // pred_region
          _
        $region48: #{tpu_custom_call.1} parent=11 // pred_fallthru
          _
      $region12: #{tpu_custom_call.1} parent=5 // pred_fallthru
        _
      %p347 = scmp.lt.s32.totalorder %s22, 2
      // Predicated region
      $region49: #{tpu_custom_call.1} parent=5 // pred_check
        %p348 = pneg %p347
      $region50: #{tpu_custom_call.1} parent=5 // pred_check_branch
        %350 = sbr.rel (%p348) target = $region52
      $region51: #{tpu_custom_call.1} parent=5 // pred_region
        // Predicated region
        $region53: #{tpu_custom_call.1} parent=51 // pred_check
          %p351 = pneg %p42
        $region54: #{tpu_custom_call.1} parent=51 // pred_check_branch
          %353 = sbr.rel (%p351) target = $region56
        $region55: #{tpu_custom_call.1} parent=51 // pred_region
          %s354 = smul.u32 4, %s22
          %p355 = scmp.lt.s32.totalorder %s354, 7
          %s356 = scalar_select %p355, %s354, 7
          %s357 = smul.addr %s356, 2
          %s358 = smul.addr %s357, 8
          %s359 = scalar_lea.vmem %s0, %s358
          %s360 = smul.u32 4, %s22
        $region56: #{tpu_custom_call.1} parent=51 // pred_fallthru
          _
      $region52: #{tpu_custom_call.1} parent=5 // pred_fallthru
        _
      %p361 = scmp.le.s32.totalorder 1, %s22
      %p362 = scmp.lt.s32.totalorder %s22, 3
      %p363 = pnand %p361, %p362
      %p364 = pneg %p363
      // Predicated region
      $region57: #{tpu_custom_call.1} parent=5 // pred_check
        _
      $region58: #{tpu_custom_call.1} parent=5 // pred_check_branch
        %366 = sbr.rel (%p363) target = $region60
      $region59: #{tpu_custom_call.1} parent=5 // pred_region
        %s367 = ssub.s32 %s22, 1
        // Predicated region
        $region61: #{tpu_custom_call.1} parent=59 // pred_check
          %p368 = pneg %p69
        $region62: #{tpu_custom_call.1} parent=59 // pred_check_branch
          %370 = sbr.rel (%p368) target = $region64
        $region63: #{tpu_custom_call.1} parent=59 // pred_region
          %372 = dma.done [#allocation3], 128
        $region64: #{tpu_custom_call.1} parent=59 // pred_fallthru
          _
        // Predicated region
        $region65: #{tpu_custom_call.1} parent=59 // pred_check
          %p373 = pneg %p132
        $region66: #{tpu_custom_call.1} parent=59 // pred_check_branch
          %375 = sbr.rel (%p373) target = $region68
        $region67: #{tpu_custom_call.1} parent=59 // pred_region
          %377 = dma.done [#allocation6], 512
        $region68: #{tpu_custom_call.1} parent=59 // pred_fallthru
          _
        // Predicated region
        $region69: #{tpu_custom_call.1} parent=59 // pred_check
          %p378 = pneg %p153
        $region70: #{tpu_custom_call.1} parent=59 // pred_check_branch
          %380 = sbr.rel (%p378) target = $region72
        $region71: #{tpu_custom_call.1} parent=59 // pred_region
          %382 = dma.done [#allocation6], 512
        $region72: #{tpu_custom_call.1} parent=59 // pred_fallthru
          _
        // Predicated region
        $region73: #{tpu_custom_call.1} parent=59 // pred_check
          %p383 = pneg %p216
        $region74: #{tpu_custom_call.1} parent=59 // pred_check_branch
          %385 = sbr.rel (%p383) target = $region76
        $region75: #{tpu_custom_call.1} parent=59 // pred_region
          %387 = dma.done [#allocation9], 512
        $region76: #{tpu_custom_call.1} parent=59 // pred_fallthru
          _
        %s388 = smul.u32 4, %s27
        %p389 = scmp.lt.s32.totalorder %s388, 7
        %s390 = scalar_select %p389, %s388, 7
        %s391 = smul.addr %s390, 2
        %s392 = smul.addr %s391, 8
        %s393 = scalar_lea.vmem %s0, %s392
        %p394 = pneg %p48
        %p395 = pneg %p45
        %p396 = pneg %p69
        %p397 = pneg %p66
        %p398 = pneg %p90
        %p399 = pneg %p87
        %p400 = pneg %p111
        %p401 = pneg %p108
        %p402 = pneg %p132
        %p403 = pneg %p129
        %p404 = pneg %p153
        %p405 = pneg %p150
        %p406 = pneg %p174
        %p407 = pneg %p171
        %p408 = pneg %p195
        %p409 = pneg %p192
        %p410 = pneg %p216
        %p411 = pneg %p213
        %p412 = pneg %p237
        %p413 = pneg %p234
        %p414 = pneg %p263
        %p415 = pneg %p260
        %s416 = sand.u32 %s250, 1
        %s417 = scalar_lea.sflag [#allocation4], %s416
        %s418 = sand.u32 %s250, 1
        %s419 = smul.addr %s418, 64
        %s420 = scalar_lea.vmem [#allocation10], %s419
        %s421 = smul.u32 4, %s27
        %p422 = scmp.lt.s32.totalorder %s421, 7
        %s423 = scalar_select %p422, %s421, 7
        %s424 = smul.addr %s423, 2
        %s425 = smul.addr %s424, 8
        %s426 = scalar_lea.vmem %s0, %s425
        %s427 = smul.u32 4, %s27
        %s428 = smul.u32 4, %s27
        %v429 = vld [vmem:[%s426] sm:$0xff]
        %v430 = vld [vmem:[%s426 + $0x8] sm:$0xff]
        %v431 = vld [vmem:[%s426 + $0x10] sm:$0xff]
        %v432 = vld [vmem:[%s426 + $0x18] sm:$0xff]
        %v433 = vld [vmem:[%s426 + $0x20] sm:$0xff]
        %v434 = vld [vmem:[%s426 + $0x28] sm:$0xff]
        %v435 = vld [vmem:[%s426 + $0x30] sm:$0xff]
        %v436 = vld [vmem:[%s426 + $0x38] sm:$0xff]
        %v437 = vld [vmem:[#allocation2] sm:$0xff]
        %vm438 = vcmask 261120
        %v439 = vsel %vm438, %v429, 0.0
        %440 = vadd.xlane.f32.xlu0 %v439
        %v441 = vpop.xlane.xlu0 %440
        %v442 = vsel %vm438, %v430, 0.0
        %443 = vadd.xlane.f32.xlu0 %v442
        %v444 = vpop.xlane.xlu0 %443
        %v445 = vsel %vm438, %v431, 0.0
        %446 = vadd.xlane.f32.xlu0 %v445
        %v447 = vpop.xlane.xlu0 %446
        %v448 = vsel %vm438, %v432, 0.0
        %449 = vadd.xlane.f32.xlu0 %v448
        %v450 = vpop.xlane.xlu0 %449
        %v451 = vsel %vm438, %v433, 0.0
        %452 = vadd.xlane.f32.xlu0 %v451
        %v453 = vpop.xlane.xlu0 %452
        %v454 = vsel %vm438, %v434, 0.0
        %455 = vadd.xlane.f32.xlu0 %v454
        %v456 = vpop.xlane.xlu0 %455
        %v457 = vsel %vm438, %v435, 0.0
        %458 = vadd.xlane.f32.xlu0 %v457
        %v459 = vpop.xlane.xlu0 %458
        %v460 = vsel %vm438, %v436, 0.0
        %461 = vadd.xlane.f32.xlu0 %v460
        %v462 = vpop.xlane.xlu0 %461
        %v463 = vrcp.pop 32.0
        %v464 = vmul.f32 32.0, %v463
        %v465 = vsub.f32 1.0, %v464
        %v466 = vmul.f32 %v463, %v465
        %v467 = vadd.f32 %v463, %v466
        %vm468 = vweird.f32 %v463
        %v469 = vsel %vm468, %v463, %v467
        %v470 = vmul.f32 %v441, %v469
        %v471 = vmul.f32 %v444, %v469
        %v472 = vmul.f32 %v447, %v469
        %v473 = vmul.f32 %v450, %v469
        %v474 = vmul.f32 %v453, %v469
        %v475 = vmul.f32 %v456, %v469
        %v476 = vmul.f32 %v459, %v469
        %v477 = vmul.f32 %v462, %v469
        %v478 = vsub.f32 %v429, %v470
        %v479 = vsub.f32 %v430, %v471
        %v480 = vsub.f32 %v431, %v472
        %v481 = vsub.f32 %v432, %v473
        %v482 = vsub.f32 %v433, %v474
        %v483 = vsub.f32 %v434, %v475
        %v484 = vsub.f32 %v435, %v476
        %v485 = vsub.f32 %v436, %v477
        %v486 = vmul.f32 %v478, %v478
        %v487 = vmul.f32 %v479, %v479
        %v488 = vmul.f32 %v480, %v480
        %v489 = vmul.f32 %v481, %v481
        %v490 = vmul.f32 %v482, %v482
        %v491 = vmul.f32 %v483, %v483
        %v492 = vmul.f32 %v484, %v484
        %v493 = vmul.f32 %v485, %v485
        %v494 = vsel %vm438, %v486, 0.0
        %495 = vadd.xlane.f32.xlu0 %v494
        %v496 = vpop.xlane.xlu0 %495
        %v497 = vsel %vm438, %v487, 0.0
        %498 = vadd.xlane.f32.xlu0 %v497
        %v499 = vpop.xlane.xlu0 %498
        %v500 = vsel %vm438, %v488, 0.0
        %501 = vadd.xlane.f32.xlu0 %v500
        %v502 = vpop.xlane.xlu0 %501
        %v503 = vsel %vm438, %v489, 0.0
        %504 = vadd.xlane.f32.xlu0 %v503
        %v505 = vpop.xlane.xlu0 %504
        %v506 = vsel %vm438, %v490, 0.0
        %507 = vadd.xlane.f32.xlu0 %v506
        %v508 = vpop.xlane.xlu0 %507
        %v509 = vsel %vm438, %v491, 0.0
        %510 = vadd.xlane.f32.xlu0 %v509
        %v511 = vpop.xlane.xlu0 %510
        %v512 = vsel %vm438, %v492, 0.0
        %513 = vadd.xlane.f32.xlu0 %v512
        %v514 = vpop.xlane.xlu0 %513
        %v515 = vsel %vm438, %v493, 0.0
        %516 = vadd.xlane.f32.xlu0 %v515
        %v517 = vpop.xlane.xlu0 %516
        %v518 = vmul.f32 %v496, %v469
        %v519 = vmul.f32 %v499, %v469
        %v520 = vmul.f32 %v502, %v469
        %v521 = vmul.f32 %v505, %v469
        %v522 = vmul.f32 %v508, %v469
        %v523 = vmul.f32 %v511, %v469
        %v524 = vmul.f32 %v514, %v469
        %v525 = vmul.f32 %v517, %v469
        %v526 = vadd.f32 %v518, 1e-05
        %v527 = vadd.f32 %v519, 1e-05
        %v528 = vadd.f32 %v520, 1e-05
        %v529 = vadd.f32 %v521, 1e-05
        %v530 = vadd.f32 %v522, 1e-05
        %v531 = vadd.f32 %v523, 1e-05
        %v532 = vadd.f32 %v524, 1e-05
        %v533 = vadd.f32 %v525, 1e-05
        %v534 = vrsqrt.pop %v526
        %v535 = vmul.f32 %v534, %v526
        %v536 = vmul.f32 %v535, %v534
        %v537 = vmul.f32 0.5, %v536
        %v538 = vsub.f32 1.5, %v537
        %v539 = vmul.f32 %v534, %v538
        %vm540 = vweird.f32 %v526
        %vm541 = vweird.f32 %v534
        %vm542 = vmor %vm540, %vm541
        %v543 = vsel %vm542, %v534, %v539
        %v544 = vrsqrt.pop %v527
        %v545 = vmul.f32 %v544, %v527
        %v546 = vmul.f32 %v545, %v544
        %v547 = vmul.f32 0.5, %v546
        %v548 = vsub.f32 1.5, %v547
        %v549 = vmul.f32 %v544, %v548
        %vm550 = vweird.f32 %v527
        %vm551 = vweird.f32 %v544
        %vm552 = vmor %vm550, %vm551
        %v553 = vsel %vm552, %v544, %v549
        %v554 = vrsqrt.pop %v528
        %v555 = vmul.f32 %v554, %v528
        %v556 = vmul.f32 %v555, %v554
        %v557 = vmul.f32 0.5, %v556
        %v558 = vsub.f32 1.5, %v557
        %v559 = vmul.f32 %v554, %v558
        %vm560 = vweird.f32 %v528
        %vm561 = vweird.f32 %v554
        %vm562 = vmor %vm560, %vm561
        %v563 = vsel %vm562, %v554, %v559
        %v564 = vrsqrt.pop %v529
        %v565 = vmul.f32 %v564, %v529
        %v566 = vmul.f32 %v565, %v564
        %v567 = vmul.f32 0.5, %v566
        %v568 = vsub.f32 1.5, %v567
        %v569 = vmul.f32 %v564, %v568
        %vm570 = vweird.f32 %v529
        %vm571 = vweird.f32 %v564
        %vm572 = vmor %vm570, %vm571
        %v573 = vsel %vm572, %v564, %v569
        %v574 = vrsqrt.pop %v530
        %v575 = vmul.f32 %v574, %v530
        %v576 = vmul.f32 %v575, %v574
        %v577 = vmul.f32 0.5, %v576
        %v578 = vsub.f32 1.5, %v577
        %v579 = vmul.f32 %v574, %v578
        %vm580 = vweird.f32 %v530
        %vm581 = vweird.f32 %v574
        %vm582 = vmor %vm580, %vm581
        %v583 = vsel %vm582, %v574, %v579
        %v584 = vrsqrt.pop %v531
        %v585 = vmul.f32 %v584, %v531
        %v586 = vmul.f32 %v585, %v584
        %v587 = vmul.f32 0.5, %v586
        %v588 = vsub.f32 1.5, %v587
        %v589 = vmul.f32 %v584, %v588
        %vm590 = vweird.f32 %v531
        %vm591 = vweird.f32 %v584
        %vm592 = vmor %vm590, %vm591
        %v593 = vsel %vm592, %v584, %v589
        %v594 = vrsqrt.pop %v532
        %v595 = vmul.f32 %v594, %v532
        %v596 = vmul.f32 %v595, %v594
        %v597 = vmul.f32 0.5, %v596
        %v598 = vsub.f32 1.5, %v597
        %v599 = vmul.f32 %v594, %v598
        %vm600 = vweird.f32 %v532
        %vm601 = vweird.f32 %v594
        %vm602 = vmor %vm600, %vm601
        %v603 = vsel %vm602, %v594, %v599
        %v604 = vrsqrt.pop %v533
        %v605 = vmul.f32 %v604, %v533
        %v606 = vmul.f32 %v605, %v604
        %v607 = vmul.f32 0.5, %v606
        %v608 = vsub.f32 1.5, %v607
        %v609 = vmul.f32 %v604, %v608
        %vm610 = vweird.f32 %v533
        %vm611 = vweird.f32 %v604
        %vm612 = vmor %vm610, %vm611
        %v613 = vsel %vm612, %v604, %v609
        %v614 = vmul.f32 %v478, %v543
        %v615 = vmul.f32 %v479, %v553
        %v616 = vmul.f32 %v480, %v563
        %v617 = vmul.f32 %v481, %v573
        %v618 = vmul.f32 %v482, %v583
        %v619 = vmul.f32 %v483, %v593
        %v620 = vmul.f32 %v484, %v603
        %v621 = vmul.f32 %v485, %v613
        %v622 = vperm.slane %v437, 0
        %v623 = vmul.f32 %v614, %v622
        %v624 = vmul.f32 %v615, %v622
        %v625 = vmul.f32 %v616, %v622
        %v626 = vmul.f32 %v617, %v622
        %v627 = vmul.f32 %v618, %v622
        %v628 = vmul.f32 %v619, %v622
        %v629 = vmul.f32 %v620, %v622
        %v630 = vmul.f32 %v621, %v622
        %v631 = vperm.slane %v437, 1
        %v632 = vadd.f32 %v623, %v631
        %v633 = vadd.f32 %v624, %v631
        %v634 = vadd.f32 %v625, %v631
        %v635 = vadd.f32 %v626, %v631
        %v636 = vadd.f32 %v627, %v631
        %v637 = vadd.f32 %v628, %v631
        %v638 = vadd.f32 %v629, %v631
        %v639 = vadd.f32 %v630, %v631
        %v640 = vld [vmem:[%s2] sm:$0xff]
        %v641 = vld [vmem:[%s2 + $0x8] sm:$0xff]
        %v642 = vld [vmem:[%s2 + $0x10] sm:$0xff]
        %v643 = vld [vmem:[%s2 + $0x18] sm:$0xff]
        %v644 = vld [vmem:[%s3] sm:$0x1]
        %v646 = vperm.slane %v644, 0
        %v649 = vsel %vm438, %v632, 0
        %v652 = vsel %vm438, %v633, 0
        %v655 = vsel %vm438, %v634, 0
        %v658 = vsel %vm438, %v635, 0
        %v661 = vsel %vm438, %v636, 0
        %v664 = vsel %vm438, %v637, 0
        %v667 = vsel %vm438, %v638, 0
        %v670 = vsel %vm438, %v639, 0
        %672 = vmatpush.msra.mxu0 0.0
        %673 = vmatpush.msra.mxu0 0.0
        %674 = vmatpush.msra.mxu0 0.0
        %675 = vmatpush.msra.mxu0 0.0
        %676 = vmatpush.msra.mxu0 0.0
        %677 = vmatpush.msra.mxu0 0.0
        %678 = vmatpush.msra.mxu0 0.0
        %679 = vmatpush.msra.mxu0 0.0
        %680 = vmatpush.msra.mxu0 0.0
        %681 = vmatpush.msra.mxu0 0.0
        %682 = vmatpush.msra.mxu0 0.0
        %683 = vmatpush.msra.mxu0 0.0
        %684 = vmatpush.msra.mxu0 %v643
        %685 = vmatpush.msra.mxu0 %v642
        %686 = vmatpush.msra.mxu0 %v641
        %687 = vmatpush.msra.mxu0 %v640
        %688 = vmatmul.f32.gmra.mxu0 %v649
        %v689 = vpop.f32.mrf.mxu0
        %v690 = vadd.f32 %v646, %v689
        %691 = vmatmul.f32.gmra.mxu0 %v652
        %v692 = vpop.f32.mrf.mxu0
        %v693 = vadd.f32 %v646, %v692
        %694 = vmatmul.f32.gmra.mxu0 %v655
        %v695 = vpop.f32.mrf.mxu0
        %v696 = vadd.f32 %v646, %v695
        %697 = vmatmul.f32.gmra.mxu0 %v658
        %v698 = vpop.f32.mrf.mxu0
        %v699 = vadd.f32 %v646, %v698
        %700 = vmatmul.f32.gmra.mxu0 %v661
        %v701 = vpop.f32.mrf.mxu0
        %v702 = vadd.f32 %v646, %v701
        %703 = vmatmul.f32.gmra.mxu0 %v664
        %v704 = vpop.f32.mrf.mxu0
        %v705 = vadd.f32 %v646, %v704
        %706 = vmatmul.f32.gmra.mxu0 %v667
        %v707 = vpop.f32.mrf.mxu0
        %v708 = vadd.f32 %v646, %v707
        %709 = vmatmul.f32.gmra.mxu0 %v670
        %v710 = vpop.f32.mrf.mxu0
        %v711 = vadd.f32 %v646, %v710
        %712 = vdwg.mxu0
        %721 = vrot.lane.b32.xlu0 %v690, 120
        %v722 = vpop.permute.xlu0 %721
        %723 = vrot.lane.b32.xlu0 %v693, 120
        %v724 = vpop.permute.xlu0 %723
        %725 = vrot.lane.b32.xlu0 %v696, 120
        %v726 = vpop.permute.xlu0 %725
        %727 = vrot.lane.b32.xlu0 %v699, 120
        %v728 = vpop.permute.xlu0 %727
        %729 = vrot.lane.b32.xlu0 %v702, 120
        %v730 = vpop.permute.xlu0 %729
        %731 = vrot.lane.b32.xlu0 %v705, 120
        %v732 = vpop.permute.xlu0 %731
        %733 = vrot.lane.b32.xlu0 %v708, 120
        %v734 = vpop.permute.xlu0 %733
        %735 = vrot.lane.b32.xlu0 %v711, 120
        %v736 = vpop.permute.xlu0 %735
        %737 = vrot.lane.b32.xlu0 %v690, 112
        %v738 = vpop.permute.xlu0 %737
        %739 = vrot.lane.b32.xlu0 %v693, 112
        %v740 = vpop.permute.xlu0 %739
        %741 = vrot.lane.b32.xlu0 %v696, 112
        %v742 = vpop.permute.xlu0 %741
        %743 = vrot.lane.b32.xlu0 %v699, 112
        %v744 = vpop.permute.xlu0 %743
        %745 = vrot.lane.b32.xlu0 %v702, 112
        %v746 = vpop.permute.xlu0 %745
        %747 = vrot.lane.b32.xlu0 %v705, 112
        %v748 = vpop.permute.xlu0 %747
        %749 = vrot.lane.b32.xlu0 %v708, 112
        %v750 = vpop.permute.xlu0 %749
        %751 = vrot.lane.b32.xlu0 %v711, 112
        %v752 = vpop.permute.xlu0 %751
        %753 = vrot.lane.b32.xlu0 %v690, 104
        %v754 = vpop.permute.xlu0 %753
        %755 = vrot.lane.b32.xlu0 %v693, 104
        %v756 = vpop.permute.xlu0 %755
        %757 = vrot.lane.b32.xlu0 %v696, 104
        %v758 = vpop.permute.xlu0 %757
        %759 = vrot.lane.b32.xlu0 %v699, 104
        %v760 = vpop.permute.xlu0 %759
        %761 = vrot.lane.b32.xlu0 %v702, 104
        %v762 = vpop.permute.xlu0 %761
        %763 = vrot.lane.b32.xlu0 %v705, 104
        %v764 = vpop.permute.xlu0 %763
        %765 = vrot.lane.b32.xlu0 %v708, 104
        %v766 = vpop.permute.xlu0 %765
        %767 = vrot.lane.b32.xlu0 %v711, 104
        %v768 = vpop.permute.xlu0 %767
        %769 = vrot.lane.b32.xlu0 %v690, 96
        %v770 = vpop.permute.xlu0 %769
        %771 = vrot.lane.b32.xlu0 %v693, 96
        %v772 = vpop.permute.xlu0 %771
        %vm773 = vcmask 64512
        %v774 = vsel %vm773, %v690, 0
        %v776 = vsel %vm773, %v693, 0
        %v778 = vsel %vm773, %v770, 0
        %v780 = vsel %vm773, %v772, 0
        %782 = vmatpush.xpose.msra.mxu0 0.0
        %783 = vmatpush.xpose.msra.mxu0 0.0
        %784 = vmatpush.xpose.msra.mxu0 0.0
        %785 = vmatpush.xpose.msra.mxu0 0.0
        %786 = vmatpush.xpose.msra.mxu0 0.0
        %787 = vmatpush.xpose.msra.mxu0 0.0
        %788 = vmatpush.xpose.msra.mxu0 0.0
        %789 = vmatpush.xpose.msra.mxu0 0.0
        %790 = vmatpush.xpose.msra.mxu0 0.0
        %791 = vmatpush.xpose.msra.mxu0 0.0
        %792 = vmatpush.xpose.msra.mxu0 0.0
        %793 = vmatpush.xpose.msra.mxu0 0.0
        %794 = vmatpush.xpose.msra.mxu0 0.0
        %795 = vmatpush.xpose.msra.mxu0 0.0
        %796 = vmatpush.xpose.msra.mxu0 %v780
        %797 = vmatpush.xpose.msra.mxu0 %v778
        %798 = vmatmul.f32.gmra.mxu0 %v774
        %v799 = vpop.f32.mrf.mxu0
        %v800 = vadd.f32 0.0, %v799
        %801 = vmatmul.f32.gmra.mxu0 %v776
        %v802 = vpop.f32.mrf.mxu0
        %v803 = vadd.f32 0.0, %v802
        %804 = vdwg.mxu0
        %805 = vrot.lane.b32.xlu0 %v696, 96
        %v806 = vpop.permute.xlu0 %805
        %807 = vrot.lane.b32.xlu0 %v699, 96
        %v808 = vpop.permute.xlu0 %807
        %v809 = vsel %vm773, %v696, 0
        %v811 = vsel %vm773, %v699, 0
        %v813 = vsel %vm773, %v806, 0
        %v815 = vsel %vm773, %v808, 0
        %817 = vmatpush.xpose.msra.mxu0 0.0
        %818 = vmatpush.xpose.msra.mxu0 0.0
        %819 = vmatpush.xpose.msra.mxu0 0.0
        %820 = vmatpush.xpose.msra.mxu0 0.0
        %821 = vmatpush.xpose.msra.mxu0 0.0
        %822 = vmatpush.xpose.msra.mxu0 0.0
        %823 = vmatpush.xpose.msra.mxu0 0.0
        %824 = vmatpush.xpose.msra.mxu0 0.0
        %825 = vmatpush.xpose.msra.mxu0 0.0
        %826 = vmatpush.xpose.msra.mxu0 0.0
        %827 = vmatpush.xpose.msra.mxu0 0.0
        %828 = vmatpush.xpose.msra.mxu0 0.0
        %829 = vmatpush.xpose.msra.mxu0 0.0
        %830 = vmatpush.xpose.msra.mxu0 0.0
        %831 = vmatpush.xpose.msra.mxu0 %v815
        %832 = vmatpush.xpose.msra.mxu0 %v813
        %833 = vmatmul.f32.gmra.mxu0 %v809
        %v834 = vpop.f32.mrf.mxu0
        %v835 = vadd.f32 0.0, %v834
        %836 = vmatmul.f32.gmra.mxu0 %v811
        %v837 = vpop.f32.mrf.mxu0
        %v838 = vadd.f32 0.0, %v837
        %839 = vdwg.mxu0
        %840 = vrot.lane.b32.xlu0 %v702, 96
        %v841 = vpop.permute.xlu0 %840
        %842 = vrot.lane.b32.xlu0 %v705, 96
        %v843 = vpop.permute.xlu0 %842
        %v844 = vsel %vm773, %v702, 0
        %v846 = vsel %vm773, %v705, 0
        %v848 = vsel %vm773, %v841, 0
        %v850 = vsel %vm773, %v843, 0
        %852 = vmatpush.xpose.msra.mxu0 0.0
        %853 = vmatpush.xpose.msra.mxu0 0.0
        %854 = vmatpush.xpose.msra.mxu0 0.0
        %855 = vmatpush.xpose.msra.mxu0 0.0
        %856 = vmatpush.xpose.msra.mxu0 0.0
        %857 = vmatpush.xpose.msra.mxu0 0.0
        %858 = vmatpush.xpose.msra.mxu0 0.0
        %859 = vmatpush.xpose.msra.mxu0 0.0
        %860 = vmatpush.xpose.msra.mxu0 0.0
        %861 = vmatpush.xpose.msra.mxu0 0.0
        %862 = vmatpush.xpose.msra.mxu0 0.0
        %863 = vmatpush.xpose.msra.mxu0 0.0
        %864 = vmatpush.xpose.msra.mxu0 0.0
        %865 = vmatpush.xpose.msra.mxu0 0.0
        %866 = vmatpush.xpose.msra.mxu0 %v850
        %867 = vmatpush.xpose.msra.mxu0 %v848
        %868 = vmatmul.f32.gmra.mxu0 %v844
        %v869 = vpop.f32.mrf.mxu0
        %v870 = vadd.f32 0.0, %v869
        %871 = vmatmul.f32.gmra.mxu0 %v846
        %v872 = vpop.f32.mrf.mxu0
        %v873 = vadd.f32 0.0, %v872
        %874 = vdwg.mxu0
        %875 = vrot.lane.b32.xlu0 %v708, 96
        %v876 = vpop.permute.xlu0 %875
        %877 = vrot.lane.b32.xlu0 %v711, 96
        %v878 = vpop.permute.xlu0 %877
        %v879 = vsel %vm773, %v708, 0
        %v881 = vsel %vm773, %v711, 0
        %v883 = vsel %vm773, %v876, 0
        %v885 = vsel %vm773, %v878, 0
        %887 = vmatpush.xpose.msra.mxu0 0.0
        %888 = vmatpush.xpose.msra.mxu0 0.0
        %889 = vmatpush.xpose.msra.mxu0 0.0
        %890 = vmatpush.xpose.msra.mxu0 0.0
        %891 = vmatpush.xpose.msra.mxu0 0.0
        %892 = vmatpush.xpose.msra.mxu0 0.0
        %893 = vmatpush.xpose.msra.mxu0 0.0
        %894 = vmatpush.xpose.msra.mxu0 0.0
        %895 = vmatpush.xpose.msra.mxu0 0.0
        %896 = vmatpush.xpose.msra.mxu0 0.0
        %897 = vmatpush.xpose.msra.mxu0 0.0
        %898 = vmatpush.xpose.msra.mxu0 0.0
        %899 = vmatpush.xpose.msra.mxu0 0.0
        %900 = vmatpush.xpose.msra.mxu0 0.0
        %901 = vmatpush.xpose.msra.mxu0 %v885
        %902 = vmatpush.xpose.msra.mxu0 %v883
        %903 = vmatmul.f32.gmra.mxu0 %v879
        %v904 = vpop.f32.mrf.mxu0
        %v905 = vadd.f32 0.0, %v904
        %906 = vmatmul.f32.gmra.mxu0 %v881
        %v907 = vpop.f32.mrf.mxu0
        %v908 = vadd.f32 0.0, %v907
        %909 = vdwg.mxu0
        %910 = vrot.lane.b32.xlu0 %v722, 96
        %v911 = vpop.permute.xlu0 %910
        %912 = vrot.lane.b32.xlu0 %v724, 96
        %v913 = vpop.permute.xlu0 %912
        %v914 = vsel %vm773, %v722, 0
        %v916 = vsel %vm773, %v724, 0
        %v918 = vsel %vm773, %v911, 0
        %v920 = vsel %vm773, %v913, 0
        %922 = vmatpush.xpose.msra.mxu0 0.0
        %923 = vmatpush.xpose.msra.mxu0 0.0
        %924 = vmatpush.xpose.msra.mxu0 0.0
        %925 = vmatpush.xpose.msra.mxu0 0.0
        %926 = vmatpush.xpose.msra.mxu0 0.0
        %927 = vmatpush.xpose.msra.mxu0 0.0
        %928 = vmatpush.xpose.msra.mxu0 0.0
        %929 = vmatpush.xpose.msra.mxu0 0.0
        %930 = vmatpush.xpose.msra.mxu0 0.0
        %931 = vmatpush.xpose.msra.mxu0 0.0
        %932 = vmatpush.xpose.msra.mxu0 0.0
        %933 = vmatpush.xpose.msra.mxu0 0.0
        %934 = vmatpush.xpose.msra.mxu0 0.0
        %935 = vmatpush.xpose.msra.mxu0 0.0
        %936 = vmatpush.xpose.msra.mxu0 %v920
        %937 = vmatpush.xpose.msra.mxu0 %v918
        %938 = vmatmul.f32.gmra.mxu0 %v914
        %v939 = vpop.f32.mrf.mxu0
        %v940 = vadd.f32 0.0, %v939
        %941 = vmatmul.f32.gmra.mxu0 %v916
        %v942 = vpop.f32.mrf.mxu0
        %v943 = vadd.f32 0.0, %v942
        %944 = vdwg.mxu0
        %945 = vrot.lane.b32.xlu0 %v726, 96
        %v946 = vpop.permute.xlu0 %945
        %947 = vrot.lane.b32.xlu0 %v728, 96
        %v948 = vpop.permute.xlu0 %947
        %v949 = vsel %vm773, %v726, 0
        %v951 = vsel %vm773, %v728, 0
        %v953 = vsel %vm773, %v946, 0
        %v955 = vsel %vm773, %v948, 0
        %957 = vmatpush.xpose.msra.mxu0 0.0
        %958 = vmatpush.xpose.msra.mxu0 0.0
        %959 = vmatpush.xpose.msra.mxu0 0.0
        %960 = vmatpush.xpose.msra.mxu0 0.0
        %961 = vmatpush.xpose.msra.mxu0 0.0
        %962 = vmatpush.xpose.msra.mxu0 0.0
        %963 = vmatpush.xpose.msra.mxu0 0.0
        %964 = vmatpush.xpose.msra.mxu0 0.0
        %965 = vmatpush.xpose.msra.mxu0 0.0
        %966 = vmatpush.xpose.msra.mxu0 0.0
        %967 = vmatpush.xpose.msra.mxu0 0.0
        %968 = vmatpush.xpose.msra.mxu0 0.0
        %969 = vmatpush.xpose.msra.mxu0 0.0
        %970 = vmatpush.xpose.msra.mxu0 0.0
        %971 = vmatpush.xpose.msra.mxu0 %v955
        %972 = vmatpush.xpose.msra.mxu0 %v953
        %973 = vmatmul.f32.gmra.mxu0 %v949
        %v974 = vpop.f32.mrf.mxu0
        %v975 = vadd.f32 0.0, %v974
        %976 = vmatmul.f32.gmra.mxu0 %v951
        %v977 = vpop.f32.mrf.mxu0
        %v978 = vadd.f32 0.0, %v977
        %979 = vdwg.mxu0
        %980 = vrot.lane.b32.xlu0 %v730, 96
        %v981 = vpop.permute.xlu0 %980
        %982 = vrot.lane.b32.xlu0 %v732, 96
        %v983 = vpop.permute.xlu0 %982
        %v984 = vsel %vm773, %v730, 0
        %v986 = vsel %vm773, %v732, 0
        %v988 = vsel %vm773, %v981, 0
        %v990 = vsel %vm773, %v983, 0
        %992 = vmatpush.xpose.msra.mxu0 0.0
        %993 = vmatpush.xpose.msra.mxu0 0.0
        %994 = vmatpush.xpose.msra.mxu0 0.0
        %995 = vmatpush.xpose.msra.mxu0 0.0
        %996 = vmatpush.xpose.msra.mxu0 0.0
        %997 = vmatpush.xpose.msra.mxu0 0.0
        %998 = vmatpush.xpose.msra.mxu0 0.0
        %999 = vmatpush.xpose.msra.mxu0 0.0
        %1000 = vmatpush.xpose.msra.mxu0 0.0
        %1001 = vmatpush.xpose.msra.mxu0 0.0
        %1002 = vmatpush.xpose.msra.mxu0 0.0
        %1003 = vmatpush.xpose.msra.mxu0 0.0
        %1004 = vmatpush.xpose.msra.mxu0 0.0
        %1005 = vmatpush.xpose.msra.mxu0 0.0
        %1006 = vmatpush.xpose.msra.mxu0 %v990
        %1007 = vmatpush.xpose.msra.mxu0 %v988
        %1008 = vmatmul.f32.gmra.mxu0 %v984
        %v1009 = vpop.f32.mrf.mxu0
        %v1010 = vadd.f32 0.0, %v1009
        %1011 = vmatmul.f32.gmra.mxu0 %v986
        %v1012 = vpop.f32.mrf.mxu0
        %v1013 = vadd.f32 0.0, %v1012
        %1014 = vdwg.mxu0
        %1015 = vrot.lane.b32.xlu0 %v734, 96
        %v1016 = vpop.permute.xlu0 %1015
        %1017 = vrot.lane.b32.xlu0 %v736, 96
        %v1018 = vpop.permute.xlu0 %1017
        %v1019 = vsel %vm773, %v734, 0
        %v1021 = vsel %vm773, %v736, 0
        %v1023 = vsel %vm773, %v1016, 0
        %v1025 = vsel %vm773, %v1018, 0
        %1027 = vmatpush.xpose.msra.mxu0 0.0
        %1028 = vmatpush.xpose.msra.mxu0 0.0
        %1029 = vmatpush.xpose.msra.mxu0 0.0
        %1030 = vmatpush.xpose.msra.mxu0 0.0
        %1031 = vmatpush.xpose.msra.mxu0 0.0
        %1032 = vmatpush.xpose.msra.mxu0 0.0
        %1033 = vmatpush.xpose.msra.mxu0 0.0
        %1034 = vmatpush.xpose.msra.mxu0 0.0
        %1035 = vmatpush.xpose.msra.mxu0 0.0
        %1036 = vmatpush.xpose.msra.mxu0 0.0
        %1037 = vmatpush.xpose.msra.mxu0 0.0
        %1038 = vmatpush.xpose.msra.mxu0 0.0
        %1039 = vmatpush.xpose.msra.mxu0 0.0
        %1040 = vmatpush.xpose.msra.mxu0 0.0
        %1041 = vmatpush.xpose.msra.mxu0 %v1025
        %1042 = vmatpush.xpose.msra.mxu0 %v1023
        %1043 = vmatmul.f32.gmra.mxu0 %v1019
        %v1044 = vpop.f32.mrf.mxu0
        %v1045 = vadd.f32 0.0, %v1044
        %1046 = vmatmul.f32.gmra.mxu0 %v1021
        %v1047 = vpop.f32.mrf.mxu0
        %v1048 = vadd.f32 0.0, %v1047
        %1049 = vdwg.mxu0
        %1050 = vrot.lane.b32.xlu0 %v738, 96
        %v1051 = vpop.permute.xlu0 %1050
        %1052 = vrot.lane.b32.xlu0 %v740, 96
        %v1053 = vpop.permute.xlu0 %1052
        %v1054 = vsel %vm773, %v738, 0
        %v1056 = vsel %vm773, %v740, 0
        %v1058 = vsel %vm773, %v1051, 0
        %v1060 = vsel %vm773, %v1053, 0
        %1062 = vmatpush.xpose.msra.mxu0 0.0
        %1063 = vmatpush.xpose.msra.mxu0 0.0
        %1064 = vmatpush.xpose.msra.mxu0 0.0
        %1065 = vmatpush.xpose.msra.mxu0 0.0
        %1066 = vmatpush.xpose.msra.mxu0 0.0
        %1067 = vmatpush.xpose.msra.mxu0 0.0
        %1068 = vmatpush.xpose.msra.mxu0 0.0
        %1069 = vmatpush.xpose.msra.mxu0 0.0
        %1070 = vmatpush.xpose.msra.mxu0 0.0
        %1071 = vmatpush.xpose.msra.mxu0 0.0
        %1072 = vmatpush.xpose.msra.mxu0 0.0
        %1073 = vmatpush.xpose.msra.mxu0 0.0
        %1074 = vmatpush.xpose.msra.mxu0 0.0
        %1075 = vmatpush.xpose.msra.mxu0 0.0
        %1076 = vmatpush.xpose.msra.mxu0 %v1060
        %1077 = vmatpush.xpose.msra.mxu0 %v1058
        %1078 = vmatmul.f32.gmra.mxu0 %v1054
        %v1079 = vpop.f32.mrf.mxu0
        %v1080 = vadd.f32 0.0, %v1079
        %1081 = vmatmul.f32.gmra.mxu0 %v1056
        %v1082 = vpop.f32.mrf.mxu0
        %v1083 = vadd.f32 0.0, %v1082
        %1084 = vdwg.mxu0
        %1085 = vrot.lane.b32.xlu0 %v742, 96
        %v1086 = vpop.permute.xlu0 %1085
        %1087 = vrot.lane.b32.xlu0 %v744, 96
        %v1088 = vpop.permute.xlu0 %1087
        %v1089 = vsel %vm773, %v742, 0
        %v1091 = vsel %vm773, %v744, 0
        %v1093 = vsel %vm773, %v1086, 0
        %v1095 = vsel %vm773, %v1088, 0
        %1097 = vmatpush.xpose.msra.mxu0 0.0
        %1098 = vmatpush.xpose.msra.mxu0 0.0
        %1099 = vmatpush.xpose.msra.mxu0 0.0
        %1100 = vmatpush.xpose.msra.mxu0 0.0
        %1101 = vmatpush.xpose.msra.mxu0 0.0
        %1102 = vmatpush.xpose.msra.mxu0 0.0
        %1103 = vmatpush.xpose.msra.mxu0 0.0
        %1104 = vmatpush.xpose.msra.mxu0 0.0
        %1105 = vmatpush.xpose.msra.mxu0 0.0
        %1106 = vmatpush.xpose.msra.mxu0 0.0
        %1107 = vmatpush.xpose.msra.mxu0 0.0
        %1108 = vmatpush.xpose.msra.mxu0 0.0
        %1109 = vmatpush.xpose.msra.mxu0 0.0
        %1110 = vmatpush.xpose.msra.mxu0 0.0
        %1111 = vmatpush.xpose.msra.mxu0 %v1095
        %1112 = vmatpush.xpose.msra.mxu0 %v1093
        %1113 = vmatmul.f32.gmra.mxu0 %v1089
        %v1114 = vpop.f32.mrf.mxu0
        %v1115 = vadd.f32 0.0, %v1114
        %1116 = vmatmul.f32.gmra.mxu0 %v1091
        %v1117 = vpop.f32.mrf.mxu0
        %v1118 = vadd.f32 0.0, %v1117
        %1119 = vdwg.mxu0
        %1120 = vrot.lane.b32.xlu0 %v746, 96
        %v1121 = vpop.permute.xlu0 %1120
        %1122 = vrot.lane.b32.xlu0 %v748, 96
        %v1123 = vpop.permute.xlu0 %1122
        %v1124 = vsel %vm773, %v746, 0
        %v1126 = vsel %vm773, %v748, 0
        %v1128 = vsel %vm773, %v1121, 0
        %v1130 = vsel %vm773, %v1123, 0
        %1132 = vmatpush.xpose.msra.mxu0 0.0
        %1133 = vmatpush.xpose.msra.mxu0 0.0
        %1134 = vmatpush.xpose.msra.mxu0 0.0
        %1135 = vmatpush.xpose.msra.mxu0 0.0
        %1136 = vmatpush.xpose.msra.mxu0 0.0
        %1137 = vmatpush.xpose.msra.mxu0 0.0
        %1138 = vmatpush.xpose.msra.mxu0 0.0
        %1139 = vmatpush.xpose.msra.mxu0 0.0
        %1140 = vmatpush.xpose.msra.mxu0 0.0
        %1141 = vmatpush.xpose.msra.mxu0 0.0
        %1142 = vmatpush.xpose.msra.mxu0 0.0
        %1143 = vmatpush.xpose.msra.mxu0 0.0
        %1144 = vmatpush.xpose.msra.mxu0 0.0
        %1145 = vmatpush.xpose.msra.mxu0 0.0
        %1146 = vmatpush.xpose.msra.mxu0 %v1130
        %1147 = vmatpush.xpose.msra.mxu0 %v1128
        %1148 = vmatmul.f32.gmra.mxu0 %v1124
        %v1149 = vpop.f32.mrf.mxu0
        %v1150 = vadd.f32 0.0, %v1149
        %1151 = vmatmul.f32.gmra.mxu0 %v1126
        %v1152 = vpop.f32.mrf.mxu0
        %v1153 = vadd.f32 0.0, %v1152
        %1154 = vdwg.mxu0
        %1155 = vrot.lane.b32.xlu0 %v750, 96
        %v1156 = vpop.permute.xlu0 %1155
        %1157 = vrot.lane.b32.xlu0 %v752, 96
        %v1158 = vpop.permute.xlu0 %1157
        %v1159 = vsel %vm773, %v750, 0
        %v1161 = vsel %vm773, %v752, 0
        %v1163 = vsel %vm773, %v1156, 0
        %v1165 = vsel %vm773, %v1158, 0
        %1167 = vmatpush.xpose.msra.mxu0 0.0
        %1168 = vmatpush.xpose.msra.mxu0 0.0
        %1169 = vmatpush.xpose.msra.mxu0 0.0
        %1170 = vmatpush.xpose.msra.mxu0 0.0
        %1171 = vmatpush.xpose.msra.mxu0 0.0
        %1172 = vmatpush.xpose.msra.mxu0 0.0
        %1173 = vmatpush.xpose.msra.mxu0 0.0
        %1174 = vmatpush.xpose.msra.mxu0 0.0
        %1175 = vmatpush.xpose.msra.mxu0 0.0
        %1176 = vmatpush.xpose.msra.mxu0 0.0
        %1177 = vmatpush.xpose.msra.mxu0 0.0
        %1178 = vmatpush.xpose.msra.mxu0 0.0
        %1179 = vmatpush.xpose.msra.mxu0 0.0
        %1180 = vmatpush.xpose.msra.mxu0 0.0
        %1181 = vmatpush.xpose.msra.mxu0 %v1165
        %1182 = vmatpush.xpose.msra.mxu0 %v1163
        %1183 = vmatmul.f32.gmra.mxu0 %v1159
        %v1184 = vpop.f32.mrf.mxu0
        %v1185 = vadd.f32 0.0, %v1184
        %1186 = vmatmul.f32.gmra.mxu0 %v1161
        %v1187 = vpop.f32.mrf.mxu0
        %v1188 = vadd.f32 0.0, %v1187
        %1189 = vdwg.mxu0
        %1190 = vrot.lane.b32.xlu0 %v754, 96
        %v1191 = vpop.permute.xlu0 %1190
        %1192 = vrot.lane.b32.xlu0 %v756, 96
        %v1193 = vpop.permute.xlu0 %1192
        %v1194 = vsel %vm773, %v754, 0
        %v1196 = vsel %vm773, %v756, 0
        %v1198 = vsel %vm773, %v1191, 0
        %v1200 = vsel %vm773, %v1193, 0
        %1202 = vmatpush.xpose.msra.mxu0 0.0
        %1203 = vmatpush.xpose.msra.mxu0 0.0
        %1204 = vmatpush.xpose.msra.mxu0 0.0
        %1205 = vmatpush.xpose.msra.mxu0 0.0
        %1206 = vmatpush.xpose.msra.mxu0 0.0
        %1207 = vmatpush.xpose.msra.mxu0 0.0
        %1208 = vmatpush.xpose.msra.mxu0 0.0
        %1209 = vmatpush.xpose.msra.mxu0 0.0
        %1210 = vmatpush.xpose.msra.mxu0 0.0
        %1211 = vmatpush.xpose.msra.mxu0 0.0
        %1212 = vmatpush.xpose.msra.mxu0 0.0
        %1213 = vmatpush.xpose.msra.mxu0 0.0
        %1214 = vmatpush.xpose.msra.mxu0 0.0
        %1215 = vmatpush.xpose.msra.mxu0 0.0
        %1216 = vmatpush.xpose.msra.mxu0 %v1200
        %1217 = vmatpush.xpose.msra.mxu0 %v1198
        %1218 = vmatmul.f32.gmra.mxu0 %v1194
        %v1219 = vpop.f32.mrf.mxu0
        %v1220 = vadd.f32 0.0, %v1219
        %1221 = vmatmul.f32.gmra.mxu0 %v1196
        %v1222 = vpop.f32.mrf.mxu0
        %v1223 = vadd.f32 0.0, %v1222
        %1224 = vdwg.mxu0
        %1225 = vrot.lane.b32.xlu0 %v758, 96
        %v1226 = vpop.permute.xlu0 %1225
        %1227 = vrot.lane.b32.xlu0 %v760, 96
        %v1228 = vpop.permute.xlu0 %1227
        %v1229 = vsel %vm773, %v758, 0
        %v1231 = vsel %vm773, %v760, 0
        %v1233 = vsel %vm773, %v1226, 0
        %v1235 = vsel %vm773, %v1228, 0
        %1237 = vmatpush.xpose.msra.mxu0 0.0
        %1238 = vmatpush.xpose.msra.mxu0 0.0
        %1239 = vmatpush.xpose.msra.mxu0 0.0
        %1240 = vmatpush.xpose.msra.mxu0 0.0
        %1241 = vmatpush.xpose.msra.mxu0 0.0
        %1242 = vmatpush.xpose.msra.mxu0 0.0
        %1243 = vmatpush.xpose.msra.mxu0 0.0
        %1244 = vmatpush.xpose.msra.mxu0 0.0
        %1245 = vmatpush.xpose.msra.mxu0 0.0
        %1246 = vmatpush.xpose.msra.mxu0 0.0
        %1247 = vmatpush.xpose.msra.mxu0 0.0
        %1248 = vmatpush.xpose.msra.mxu0 0.0
        %1249 = vmatpush.xpose.msra.mxu0 0.0
        %1250 = vmatpush.xpose.msra.mxu0 0.0
        %1251 = vmatpush.xpose.msra.mxu0 %v1235
        %1252 = vmatpush.xpose.msra.mxu0 %v1233
        %1253 = vmatmul.f32.gmra.mxu0 %v1229
        %v1254 = vpop.f32.mrf.mxu0
        %v1255 = vadd.f32 0.0, %v1254
        %1256 = vmatmul.f32.gmra.mxu0 %v1231
        %v1257 = vpop.f32.mrf.mxu0
        %v1258 = vadd.f32 0.0, %v1257
        %1259 = vdwg.mxu0
        %1260 = vrot.lane.b32.xlu0 %v762, 96
        %v1261 = vpop.permute.xlu0 %1260
        %1262 = vrot.lane.b32.xlu0 %v764, 96
        %v1263 = vpop.permute.xlu0 %1262
        %v1264 = vsel %vm773, %v762, 0
        %v1266 = vsel %vm773, %v764, 0
        %v1268 = vsel %vm773, %v1261, 0
        %v1270 = vsel %vm773, %v1263, 0
        %1272 = vmatpush.xpose.msra.mxu0 0.0
        %1273 = vmatpush.xpose.msra.mxu0 0.0
        %1274 = vmatpush.xpose.msra.mxu0 0.0
        %1275 = vmatpush.xpose.msra.mxu0 0.0
        %1276 = vmatpush.xpose.msra.mxu0 0.0
        %1277 = vmatpush.xpose.msra.mxu0 0.0
        %1278 = vmatpush.xpose.msra.mxu0 0.0
        %1279 = vmatpush.xpose.msra.mxu0 0.0
        %1280 = vmatpush.xpose.msra.mxu0 0.0
        %1281 = vmatpush.xpose.msra.mxu0 0.0
        %1282 = vmatpush.xpose.msra.mxu0 0.0
        %1283 = vmatpush.xpose.msra.mxu0 0.0
        %1284 = vmatpush.xpose.msra.mxu0 0.0
        %1285 = vmatpush.xpose.msra.mxu0 0.0
        %1286 = vmatpush.xpose.msra.mxu0 %v1270
        %1287 = vmatpush.xpose.msra.mxu0 %v1268
        %1288 = vmatmul.f32.gmra.mxu0 %v1264
        %v1289 = vpop.f32.mrf.mxu0
        %v1290 = vadd.f32 0.0, %v1289
        %1291 = vmatmul.f32.gmra.mxu0 %v1266
        %v1292 = vpop.f32.mrf.mxu0
        %v1293 = vadd.f32 0.0, %v1292
        %1294 = vdwg.mxu0
        %1295 = vrot.lane.b32.xlu0 %v766, 96
        %v1296 = vpop.permute.xlu0 %1295
        %1297 = vrot.lane.b32.xlu0 %v768, 96
        %v1298 = vpop.permute.xlu0 %1297
        %v1299 = vsel %vm773, %v766, 0
        %v1301 = vsel %vm773, %v768, 0
        %v1303 = vsel %vm773, %v1296, 0
        %v1305 = vsel %vm773, %v1298, 0
        %1307 = vmatpush.xpose.msra.mxu0 0.0
        %1308 = vmatpush.xpose.msra.mxu0 0.0
        %1309 = vmatpush.xpose.msra.mxu0 0.0
        %1310 = vmatpush.xpose.msra.mxu0 0.0
        %1311 = vmatpush.xpose.msra.mxu0 0.0
        %1312 = vmatpush.xpose.msra.mxu0 0.0
        %1313 = vmatpush.xpose.msra.mxu0 0.0
        %1314 = vmatpush.xpose.msra.mxu0 0.0
        %1315 = vmatpush.xpose.msra.mxu0 0.0
        %1316 = vmatpush.xpose.msra.mxu0 0.0
        %1317 = vmatpush.xpose.msra.mxu0 0.0
        %1318 = vmatpush.xpose.msra.mxu0 0.0
        %1319 = vmatpush.xpose.msra.mxu0 0.0
        %1320 = vmatpush.xpose.msra.mxu0 0.0
        %1321 = vmatpush.xpose.msra.mxu0 %v1305
        %1322 = vmatpush.xpose.msra.mxu0 %v1303
        %1323 = vmatmul.f32.gmra.mxu0 %v1299
        %v1324 = vpop.f32.mrf.mxu0
        %v1325 = vadd.f32 0.0, %v1324
        %1326 = vmatmul.f32.gmra.mxu0 %v1301
        %v1327 = vpop.f32.mrf.mxu0
        %v1328 = vadd.f32 0.0, %v1327
        %1329 = vdwg.mxu0
        %v1330 = vmul.f32 %v800, 0.35355338
        %v1331 = vmul.f32 %v803, 0.35355338
        %v1332 = vmul.f32 %v835, 0.35355338
        %v1333 = vmul.f32 %v838, 0.35355338
        %v1334 = vmul.f32 %v870, 0.35355338
        %v1335 = vmul.f32 %v873, 0.35355338
        %v1336 = vmul.f32 %v905, 0.35355338
        %v1337 = vmul.f32 %v908, 0.35355338
        %v1338 = vmul.f32 %v940, 0.35355338
        %v1339 = vmul.f32 %v943, 0.35355338
        %v1340 = vmul.f32 %v975, 0.35355338
        %v1341 = vmul.f32 %v978, 0.35355338
        %v1342 = vmul.f32 %v1010, 0.35355338
        %v1343 = vmul.f32 %v1013, 0.35355338
        %v1344 = vmul.f32 %v1045, 0.35355338
        %v1345 = vmul.f32 %v1048, 0.35355338
        %v1346 = vmul.f32 %v1080, 0.35355338
        %v1347 = vmul.f32 %v1083, 0.35355338
        %v1348 = vmul.f32 %v1115, 0.35355338
        %v1349 = vmul.f32 %v1118, 0.35355338
        %v1350 = vmul.f32 %v1150, 0.35355338
        %v1351 = vmul.f32 %v1153, 0.35355338
        %v1352 = vmul.f32 %v1185, 0.35355338
        %v1353 = vmul.f32 %v1188, 0.35355338
        %v1354 = vmul.f32 %v1220, 0.35355338
        %v1355 = vmul.f32 %v1223, 0.35355338
        %v1356 = vmul.f32 %v1255, 0.35355338
        %v1357 = vmul.f32 %v1258, 0.35355338
        %v1358 = vmul.f32 %v1290, 0.35355338
        %v1359 = vmul.f32 %v1293, 0.35355338
        %v1360 = vmul.f32 %v1325, 0.35355338
        %v1361 = vmul.f32 %v1328, 0.35355338
        %vm1362 = vcmask 130048
        %v1363 = vsel %vm1362, %v1330, -inf
        %1364 = vmax.xlane.f32.xlu0 %v1363
        %v1365 = vpop.xlane.xlu0 %1364
        %v1366 = vsel %vm1362, %v1331, -inf
        %1367 = vmax.xlane.f32.xlu0 %v1366
        %v1368 = vpop.xlane.xlu0 %1367
        %v1369 = vsel %vm1362, %v1332, -inf
        %1370 = vmax.xlane.f32.xlu0 %v1369
        %v1371 = vpop.xlane.xlu0 %1370
        %v1372 = vsel %vm1362, %v1333, -inf
        %1373 = vmax.xlane.f32.xlu0 %v1372
        %v1374 = vpop.xlane.xlu0 %1373
        %v1375 = vsel %vm1362, %v1334, -inf
        %1376 = vmax.xlane.f32.xlu0 %v1375
        %v1377 = vpop.xlane.xlu0 %1376
        %v1378 = vsel %vm1362, %v1335, -inf
        %1379 = vmax.xlane.f32.xlu0 %v1378
        %v1380 = vpop.xlane.xlu0 %1379
        %v1381 = vsel %vm1362, %v1336, -inf
        %1382 = vmax.xlane.f32.xlu0 %v1381
        %v1383 = vpop.xlane.xlu0 %1382
        %v1384 = vsel %vm1362, %v1337, -inf
        %1385 = vmax.xlane.f32.xlu0 %v1384
        %v1386 = vpop.xlane.xlu0 %1385
        %v1387 = vsel %vm1362, %v1338, -inf
        %1388 = vmax.xlane.f32.xlu0 %v1387
        %v1389 = vpop.xlane.xlu0 %1388
        %v1390 = vsel %vm1362, %v1339, -inf
        %1391 = vmax.xlane.f32.xlu0 %v1390
        %v1392 = vpop.xlane.xlu0 %1391
        %v1393 = vsel %vm1362, %v1340, -inf
        %1394 = vmax.xlane.f32.xlu0 %v1393
        %v1395 = vpop.xlane.xlu0 %1394
        %v1396 = vsel %vm1362, %v1341, -inf
        %1397 = vmax.xlane.f32.xlu0 %v1396
        %v1398 = vpop.xlane.xlu0 %1397
        %v1399 = vsel %vm1362, %v1342, -inf
        %1400 = vmax.xlane.f32.xlu0 %v1399
        %v1401 = vpop.xlane.xlu0 %1400
        %v1402 = vsel %vm1362, %v1343, -inf
        %1403 = vmax.xlane.f32.xlu0 %v1402
        %v1404 = vpop.xlane.xlu0 %1403
        %v1405 = vsel %vm1362, %v1344, -inf
        %1406 = vmax.xlane.f32.xlu0 %v1405
        %v1407 = vpop.xlane.xlu0 %1406
        %v1408 = vsel %vm1362, %v1345, -inf
        %1409 = vmax.xlane.f32.xlu0 %v1408
        %v1410 = vpop.xlane.xlu0 %1409
        %v1411 = vsel %vm1362, %v1346, -inf
        %1412 = vmax.xlane.f32.xlu0 %v1411
        %v1413 = vpop.xlane.xlu0 %1412
        %v1414 = vsel %vm1362, %v1347, -inf
        %1415 = vmax.xlane.f32.xlu0 %v1414
        %v1416 = vpop.xlane.xlu0 %1415
        %v1417 = vsel %vm1362, %v1348, -inf
        %1418 = vmax.xlane.f32.xlu0 %v1417
        %v1419 = vpop.xlane.xlu0 %1418
        %v1420 = vsel %vm1362, %v1349, -inf
        %1421 = vmax.xlane.f32.xlu0 %v1420
        %v1422 = vpop.xlane.xlu0 %1421
        %v1423 = vsel %vm1362, %v1350, -inf
        %1424 = vmax.xlane.f32.xlu0 %v1423
        %v1425 = vpop.xlane.xlu0 %1424
        %v1426 = vsel %vm1362, %v1351, -inf
        %1427 = vmax.xlane.f32.xlu0 %v1426
        %v1428 = vpop.xlane.xlu0 %1427
        %v1429 = vsel %vm1362, %v1352, -inf
        %1430 = vmax.xlane.f32.xlu0 %v1429
        %v1431 = vpop.xlane.xlu0 %1430
        %v1432 = vsel %vm1362, %v1353, -inf
        %1433 = vmax.xlane.f32.xlu0 %v1432
        %v1434 = vpop.xlane.xlu0 %1433
        %v1435 = vsel %vm1362, %v1354, -inf
        %1436 = vmax.xlane.f32.xlu0 %v1435
        %v1437 = vpop.xlane.xlu0 %1436
        %v1438 = vsel %vm1362, %v1355, -inf
        %1439 = vmax.xlane.f32.xlu0 %v1438
        %v1440 = vpop.xlane.xlu0 %1439
        %v1441 = vsel %vm1362, %v1356, -inf
        %1442 = vmax.xlane.f32.xlu0 %v1441
        %v1443 = vpop.xlane.xlu0 %1442
        %v1444 = vsel %vm1362, %v1357, -inf
        %1445 = vmax.xlane.f32.xlu0 %v1444
        %v1446 = vpop.xlane.xlu0 %1445
        %v1447 = vsel %vm1362, %v1358, -inf
        %1448 = vmax.xlane.f32.xlu0 %v1447
        %v1449 = vpop.xlane.xlu0 %1448
        %v1450 = vsel %vm1362, %v1359, -inf
        %1451 = vmax.xlane.f32.xlu0 %v1450
        %v1452 = vpop.xlane.xlu0 %1451
        %v1453 = vsel %vm1362, %v1360, -inf
        %1454 = vmax.xlane.f32.xlu0 %v1453
        %v1455 = vpop.xlane.xlu0 %1454
        %v1456 = vsel %vm1362, %v1361, -inf
        %1457 = vmax.xlane.f32.xlu0 %v1456
        %v1458 = vpop.xlane.xlu0 %1457
        %v1459 = vsub.f32 %v1330, %v1365
        %v1460 = vsub.f32 %v1331, %v1368
        %v1461 = vsub.f32 %v1332, %v1371
        %v1462 = vsub.f32 %v1333, %v1374
        %v1463 = vsub.f32 %v1334, %v1377
        %v1464 = vsub.f32 %v1335, %v1380
        %v1465 = vsub.f32 %v1336, %v1383
        %v1466 = vsub.f32 %v1337, %v1386
        %v1467 = vsub.f32 %v1338, %v1389
        %v1468 = vsub.f32 %v1339, %v1392
        %v1469 = vsub.f32 %v1340, %v1395
        %v1470 = vsub.f32 %v1341, %v1398
        %v1471 = vsub.f32 %v1342, %v1401
        %v1472 = vsub.f32 %v1343, %v1404
        %v1473 = vsub.f32 %v1344, %v1407
        %v1474 = vsub.f32 %v1345, %v1410
        %v1475 = vsub.f32 %v1346, %v1413
        %v1476 = vsub.f32 %v1347, %v1416
        %v1477 = vsub.f32 %v1348, %v1419
        %v1478 = vsub.f32 %v1349, %v1422
        %v1479 = vsub.f32 %v1350, %v1425
        %v1480 = vsub.f32 %v1351, %v1428
        %v1481 = vsub.f32 %v1352, %v1431
        %v1482 = vsub.f32 %v1353, %v1434
        %v1483 = vsub.f32 %v1354, %v1437
        %v1484 = vsub.f32 %v1355, %v1440
        %v1485 = vsub.f32 %v1356, %v1443
        %v1486 = vsub.f32 %v1357, %v1446
        %v1487 = vsub.f32 %v1358, %v1449
        %v1488 = vsub.f32 %v1359, %v1452
        %v1489 = vsub.f32 %v1360, %v1455
        %v1490 = vsub.f32 %v1361, %v1458
        %v1491 = vmul.f32 %v1459, 1.442695
        %v1492 = vpow.pop %v1491
        %v1493 = vmul.f32 %v1460, 1.442695
        %v1494 = vpow.pop %v1493
        %v1495 = vmul.f32 %v1461, 1.442695
        %v1496 = vpow.pop %v1495
        %v1497 = vmul.f32 %v1462, 1.442695
        %v1498 = vpow.pop %v1497
        %v1499 = vmul.f32 %v1463, 1.442695
        %v1500 = vpow.pop %v1499
        %v1501 = vmul.f32 %v1464, 1.442695
        %v1502 = vpow.pop %v1501
        %v1503 = vmul.f32 %v1465, 1.442695
        %v1504 = vpow.pop %v1503
        %v1505 = vmul.f32 %v1466, 1.442695
        %v1506 = vpow.pop %v1505
        %v1507 = vmul.f32 %v1467, 1.442695
        %v1508 = vpow.pop %v1507
        %v1509 = vmul.f32 %v1468, 1.442695
        %v1510 = vpow.pop %v1509
        %v1511 = vmul.f32 %v1469, 1.442695
        %v1512 = vpow.pop %v1511
        %v1513 = vmul.f32 %v1470, 1.442695
        %v1514 = vpow.pop %v1513
        %v1515 = vmul.f32 %v1471, 1.442695
        %v1516 = vpow.pop %v1515
        %v1517 = vmul.f32 %v1472, 1.442695
        %v1518 = vpow.pop %v1517
        %v1519 = vmul.f32 %v1473, 1.442695
        %v1520 = vpow.pop %v1519
        %v1521 = vmul.f32 %v1474, 1.442695
        %v1522 = vpow.pop %v1521
        %v1523 = vmul.f32 %v1475, 1.442695
        %v1524 = vpow.pop %v1523
        %v1525 = vmul.f32 %v1476, 1.442695
        %v1526 = vpow.pop %v1525
        %v1527 = vmul.f32 %v1477, 1.442695
        %v1528 = vpow.pop %v1527
        %v1529 = vmul.f32 %v1478, 1.442695
        %v1530 = vpow.pop %v1529
        %v1531 = vmul.f32 %v1479, 1.442695
        %v1532 = vpow.pop %v1531
        %v1533 = vmul.f32 %v1480, 1.442695
        %v1534 = vpow.pop %v1533
        %v1535 = vmul.f32 %v1481, 1.442695
        %v1536 = vpow.pop %v1535
        %v1537 = vmul.f32 %v1482, 1.442695
        %v1538 = vpow.pop %v1537
        %v1539 = vmul.f32 %v1483, 1.442695
        %v1540 = vpow.pop %v1539
        %v1541 = vmul.f32 %v1484, 1.442695
        %v1542 = vpow.pop %v1541
        %v1543 = vmul.f32 %v1485, 1.442695
        %v1544 = vpow.pop %v1543
        %v1545 = vmul.f32 %v1486, 1.442695
        %v1546 = vpow.pop %v1545
        %v1547 = vmul.f32 %v1487, 1.442695
        %v1548 = vpow.pop %v1547
        %v1549 = vmul.f32 %v1488, 1.442695
        %v1550 = vpow.pop %v1549
        %v1551 = vmul.f32 %v1489, 1.442695
        %v1552 = vpow.pop %v1551
        %v1553 = vmul.f32 %v1490, 1.442695
        %v1554 = vpow.pop %v1553
        %v1555 = vsel %vm1362, %v1492, 0.0
        %1556 = vadd.xlane.f32.xlu0 %v1555
        %v1557 = vpop.xlane.xlu0 %1556
        %v1558 = vsel %vm1362, %v1494, 0.0
        %1559 = vadd.xlane.f32.xlu0 %v1558
        %v1560 = vpop.xlane.xlu0 %1559
        %v1561 = vsel %vm1362, %v1496, 0.0
        %1562 = vadd.xlane.f32.xlu0 %v1561
        %v1563 = vpop.xlane.xlu0 %1562
        %v1564 = vsel %vm1362, %v1498, 0.0
        %1565 = vadd.xlane.f32.xlu0 %v1564
        %v1566 = vpop.xlane.xlu0 %1565
        %v1567 = vsel %vm1362, %v1500, 0.0
        %1568 = vadd.xlane.f32.xlu0 %v1567
        %v1569 = vpop.xlane.xlu0 %1568
        %v1570 = vsel %vm1362, %v1502, 0.0
        %1571 = vadd.xlane.f32.xlu0 %v1570
        %v1572 = vpop.xlane.xlu0 %1571
        %v1573 = vsel %vm1362, %v1504, 0.0
        %1574 = vadd.xlane.f32.xlu0 %v1573
        %v1575 = vpop.xlane.xlu0 %1574
        %v1576 = vsel %vm1362, %v1506, 0.0
        %1577 = vadd.xlane.f32.xlu0 %v1576
        %v1578 = vpop.xlane.xlu0 %1577
        %v1579 = vsel %vm1362, %v1508, 0.0
        %1580 = vadd.xlane.f32.xlu0 %v1579
        %v1581 = vpop.xlane.xlu0 %1580
        %v1582 = vsel %vm1362, %v1510, 0.0
        %1583 = vadd.xlane.f32.xlu0 %v1582
        %v1584 = vpop.xlane.xlu0 %1583
        %v1585 = vsel %vm1362, %v1512, 0.0
        %1586 = vadd.xlane.f32.xlu0 %v1585
        %v1587 = vpop.xlane.xlu0 %1586
        %v1588 = vsel %vm1362, %v1514, 0.0
        %1589 = vadd.xlane.f32.xlu0 %v1588
        %v1590 = vpop.xlane.xlu0 %1589
        %v1591 = vsel %vm1362, %v1516, 0.0
        %1592 = vadd.xlane.f32.xlu0 %v1591
        %v1593 = vpop.xlane.xlu0 %1592
        %v1594 = vsel %vm1362, %v1518, 0.0
        %1595 = vadd.xlane.f32.xlu0 %v1594
        %v1596 = vpop.xlane.xlu0 %1595
        %v1597 = vsel %vm1362, %v1520, 0.0
        %1598 = vadd.xlane.f32.xlu0 %v1597
        %v1599 = vpop.xlane.xlu0 %1598
        %v1600 = vsel %vm1362, %v1522, 0.0
        %1601 = vadd.xlane.f32.xlu0 %v1600
        %v1602 = vpop.xlane.xlu0 %1601
        %v1603 = vsel %vm1362, %v1524, 0.0
        %1604 = vadd.xlane.f32.xlu0 %v1603
        %v1605 = vpop.xlane.xlu0 %1604
        %v1606 = vsel %vm1362, %v1526, 0.0
        %1607 = vadd.xlane.f32.xlu0 %v1606
        %v1608 = vpop.xlane.xlu0 %1607
        %v1609 = vsel %vm1362, %v1528, 0.0
        %1610 = vadd.xlane.f32.xlu0 %v1609
        %v1611 = vpop.xlane.xlu0 %1610
        %v1612 = vsel %vm1362, %v1530, 0.0
        %1613 = vadd.xlane.f32.xlu0 %v1612
        %v1614 = vpop.xlane.xlu0 %1613
        %v1615 = vsel %vm1362, %v1532, 0.0
        %1616 = vadd.xlane.f32.xlu0 %v1615
        %v1617 = vpop.xlane.xlu0 %1616
        %v1618 = vsel %vm1362, %v1534, 0.0
        %1619 = vadd.xlane.f32.xlu0 %v1618
        %v1620 = vpop.xlane.xlu0 %1619
        %v1621 = vsel %vm1362, %v1536, 0.0
        %1622 = vadd.xlane.f32.xlu0 %v1621
        %v1623 = vpop.xlane.xlu0 %1622
        %v1624 = vsel %vm1362, %v1538, 0.0
        %1625 = vadd.xlane.f32.xlu0 %v1624
        %v1626 = vpop.xlane.xlu0 %1625
        %v1627 = vsel %vm1362, %v1540, 0.0
        %1628 = vadd.xlane.f32.xlu0 %v1627
        %v1629 = vpop.xlane.xlu0 %1628
        %v1630 = vsel %vm1362, %v1542, 0.0
        %1631 = vadd.xlane.f32.xlu0 %v1630
        %v1632 = vpop.xlane.xlu0 %1631
        %v1633 = vsel %vm1362, %v1544, 0.0
        %1634 = vadd.xlane.f32.xlu0 %v1633
        %v1635 = vpop.xlane.xlu0 %1634
        %v1636 = vsel %vm1362, %v1546, 0.0
        %1637 = vadd.xlane.f32.xlu0 %v1636
        %v1638 = vpop.xlane.xlu0 %1637
        %v1639 = vsel %vm1362, %v1548, 0.0
        %1640 = vadd.xlane.f32.xlu0 %v1639
        %v1641 = vpop.xlane.xlu0 %1640
        %v1642 = vsel %vm1362, %v1550, 0.0
        %1643 = vadd.xlane.f32.xlu0 %v1642
        %v1644 = vpop.xlane.xlu0 %1643
        %v1645 = vsel %vm1362, %v1552, 0.0
        %1646 = vadd.xlane.f32.xlu0 %v1645
        %v1647 = vpop.xlane.xlu0 %1646
        %v1648 = vsel %vm1362, %v1554, 0.0
        %1649 = vadd.xlane.f32.xlu0 %v1648
        %v1650 = vpop.xlane.xlu0 %1649
        %v1651 = vrcp.pop %v1557
        %v1652 = vrcp.pop %v1560
        %v1653 = vrcp.pop %v1563
        %v1654 = vrcp.pop %v1566
        %v1655 = vrcp.pop %v1569
        %v1656 = vrcp.pop %v1572
        %v1657 = vrcp.pop %v1575
        %v1658 = vrcp.pop %v1578
        %v1659 = vrcp.pop %v1581
        %v1660 = vrcp.pop %v1584
        %v1661 = vrcp.pop %v1587
        %v1662 = vrcp.pop %v1590
        %v1663 = vrcp.pop %v1593
        %v1664 = vrcp.pop %v1596
        %v1665 = vrcp.pop %v1599
        %v1666 = vrcp.pop %v1602
        %v1667 = vrcp.pop %v1605
        %v1668 = vrcp.pop %v1608
        %v1669 = vrcp.pop %v1611
        %v1670 = vrcp.pop %v1614
        %v1671 = vrcp.pop %v1617
        %v1672 = vrcp.pop %v1620
        %v1673 = vrcp.pop %v1623
        %v1674 = vrcp.pop %v1626
        %v1675 = vrcp.pop %v1629
        %v1676 = vrcp.pop %v1632
        %v1677 = vrcp.pop %v1635
        %v1678 = vrcp.pop %v1638
        %v1679 = vrcp.pop %v1641
        %v1680 = vrcp.pop %v1644
        %v1681 = vrcp.pop %v1647
        %v1682 = vrcp.pop %v1650
        %v1683 = vmul.f32 %v1492, %v1651
        %v1684 = vmul.f32 %v1494, %v1652
        %v1685 = vmul.f32 %v1496, %v1653
        %v1686 = vmul.f32 %v1498, %v1654
        %v1687 = vmul.f32 %v1500, %v1655
        %v1688 = vmul.f32 %v1502, %v1656
        %v1689 = vmul.f32 %v1504, %v1657
        %v1690 = vmul.f32 %v1506, %v1658
        %v1691 = vmul.f32 %v1508, %v1659
        %v1692 = vmul.f32 %v1510, %v1660
        %v1693 = vmul.f32 %v1512, %v1661
        %v1694 = vmul.f32 %v1514, %v1662
        %v1695 = vmul.f32 %v1516, %v1663
        %v1696 = vmul.f32 %v1518, %v1664
        %v1697 = vmul.f32 %v1520, %v1665
        %v1698 = vmul.f32 %v1522, %v1666
        %v1699 = vmul.f32 %v1524, %v1667
        %v1700 = vmul.f32 %v1526, %v1668
        %v1701 = vmul.f32 %v1528, %v1669
        %v1702 = vmul.f32 %v1530, %v1670
        %v1703 = vmul.f32 %v1532, %v1671
        %v1704 = vmul.f32 %v1534, %v1672
        %v1705 = vmul.f32 %v1536, %v1673
        %v1706 = vmul.f32 %v1538, %v1674
        %v1707 = vmul.f32 %v1540, %v1675
        %v1708 = vmul.f32 %v1542, %v1676
        %v1709 = vmul.f32 %v1544, %v1677
        %v1710 = vmul.f32 %v1546, %v1678
        %v1711 = vmul.f32 %v1548, %v1679
        %v1712 = vmul.f32 %v1550, %v1680
        %v1713 = vmul.f32 %v1552, %v1681
        %v1714 = vmul.f32 %v1554, %v1682
        %1715 = vrot.lane.b32.xlu0 %v690, 64
        %v1716 = vpop.permute.xlu0 %1715
        %1717 = vrot.lane.b32.xlu0 %v693, 64
        %v1718 = vpop.permute.xlu0 %1717
        %v1722 = vsel %vm1362, %v1683, 0
        %v1725 = vsel %vm1362, %v1684, 0
        %1727 = vmatpush.msra.mxu0 0.0
        %1728 = vmatpush.msra.mxu0 0.0
        %1729 = vmatpush.msra.mxu0 0.0
        %1730 = vmatpush.msra.mxu0 0.0
        %1731 = vmatpush.msra.mxu0 0.0
        %1732 = vmatpush.msra.mxu0 0.0
        %1733 = vmatpush.msra.mxu0 0.0
        %1734 = vmatpush.msra.mxu0 0.0
        %1735 = vmatpush.msra.mxu0 0.0
        %1736 = vmatpush.msra.mxu0 0.0
        %1737 = vmatpush.msra.mxu0 0.0
        %1738 = vmatpush.msra.mxu0 0.0
        %1739 = vmatpush.msra.mxu0 0.0
        %1740 = vmatpush.msra.mxu0 0.0
        %1741 = vmatpush.msra.mxu0 %v1718
        %1742 = vmatpush.msra.mxu0 %v1716
        %1743 = vmatmul.f32.gmra.mxu0 %v1722
        %v1744 = vpop.f32.mrf.mxu0
        %v1745 = vadd.f32 0.0, %v1744
        %1746 = vmatmul.f32.gmra.mxu0 %v1725
        %v1747 = vpop.f32.mrf.mxu0
        %v1748 = vadd.f32 0.0, %v1747
        %1749 = vdwg.mxu0
        %1750 = vrot.lane.b32.xlu0 %v696, 64
        %v1751 = vpop.permute.xlu0 %1750
        %1752 = vrot.lane.b32.xlu0 %v699, 64
        %v1753 = vpop.permute.xlu0 %1752
        %v1757 = vsel %vm1362, %v1685, 0
        %v1760 = vsel %vm1362, %v1686, 0
        %1762 = vmatpush.msra.mxu0 0.0
        %1763 = vmatpush.msra.mxu0 0.0
        %1764 = vmatpush.msra.mxu0 0.0
        %1765 = vmatpush.msra.mxu0 0.0
        %1766 = vmatpush.msra.mxu0 0.0
        %1767 = vmatpush.msra.mxu0 0.0
        %1768 = vmatpush.msra.mxu0 0.0
        %1769 = vmatpush.msra.mxu0 0.0
        %1770 = vmatpush.msra.mxu0 0.0
        %1771 = vmatpush.msra.mxu0 0.0
        %1772 = vmatpush.msra.mxu0 0.0
        %1773 = vmatpush.msra.mxu0 0.0
        %1774 = vmatpush.msra.mxu0 0.0
        %1775 = vmatpush.msra.mxu0 0.0
        %1776 = vmatpush.msra.mxu0 %v1753
        %1777 = vmatpush.msra.mxu0 %v1751
        %1778 = vmatmul.f32.gmra.mxu0 %v1757
        %v1779 = vpop.f32.mrf.mxu0
        %v1780 = vadd.f32 0.0, %v1779
        %1781 = vmatmul.f32.gmra.mxu0 %v1760
        %v1782 = vpop.f32.mrf.mxu0
        %v1783 = vadd.f32 0.0, %v1782
        %1784 = vdwg.mxu0
        %1785 = vrot.lane.b32.xlu0 %v702, 64
        %v1786 = vpop.permute.xlu0 %1785
        %1787 = vrot.lane.b32.xlu0 %v705, 64
        %v1788 = vpop.permute.xlu0 %1787
        %v1792 = vsel %vm1362, %v1687, 0
        %v1795 = vsel %vm1362, %v1688, 0
        %1797 = vmatpush.msra.mxu0 0.0
        %1798 = vmatpush.msra.mxu0 0.0
        %1799 = vmatpush.msra.mxu0 0.0
        %1800 = vmatpush.msra.mxu0 0.0
        %1801 = vmatpush.msra.mxu0 0.0
        %1802 = vmatpush.msra.mxu0 0.0
        %1803 = vmatpush.msra.mxu0 0.0
        %1804 = vmatpush.msra.mxu0 0.0
        %1805 = vmatpush.msra.mxu0 0.0
        %1806 = vmatpush.msra.mxu0 0.0
        %1807 = vmatpush.msra.mxu0 0.0
        %1808 = vmatpush.msra.mxu0 0.0
        %1809 = vmatpush.msra.mxu0 0.0
        %1810 = vmatpush.msra.mxu0 0.0
        %1811 = vmatpush.msra.mxu0 %v1788
        %1812 = vmatpush.msra.mxu0 %v1786
        %1813 = vmatmul.f32.gmra.mxu0 %v1792
        %v1814 = vpop.f32.mrf.mxu0
        %v1815 = vadd.f32 0.0, %v1814
        %1816 = vmatmul.f32.gmra.mxu0 %v1795
        %v1817 = vpop.f32.mrf.mxu0
        %v1818 = vadd.f32 0.0, %v1817
        %1819 = vdwg.mxu0
        %1820 = vrot.lane.b32.xlu0 %v708, 64
        %v1821 = vpop.permute.xlu0 %1820
        %1822 = vrot.lane.b32.xlu0 %v711, 64
        %v1823 = vpop.permute.xlu0 %1822
        %v1827 = vsel %vm1362, %v1689, 0
        %v1830 = vsel %vm1362, %v1690, 0
        %1832 = vmatpush.msra.mxu0 0.0
        %1833 = vmatpush.msra.mxu0 0.0
        %1834 = vmatpush.msra.mxu0 0.0
        %1835 = vmatpush.msra.mxu0 0.0
        %1836 = vmatpush.msra.mxu0 0.0
        %1837 = vmatpush.msra.mxu0 0.0
        %1838 = vmatpush.msra.mxu0 0.0
        %1839 = vmatpush.msra.mxu0 0.0
        %1840 = vmatpush.msra.mxu0 0.0
        %1841 = vmatpush.msra.mxu0 0.0
        %1842 = vmatpush.msra.mxu0 0.0
        %1843 = vmatpush.msra.mxu0 0.0
        %1844 = vmatpush.msra.mxu0 0.0
        %1845 = vmatpush.msra.mxu0 0.0
        %1846 = vmatpush.msra.mxu0 %v1823
        %1847 = vmatpush.msra.mxu0 %v1821
        %1848 = vmatmul.f32.gmra.mxu0 %v1827
        %v1849 = vpop.f32.mrf.mxu0
        %v1850 = vadd.f32 0.0, %v1849
        %1851 = vmatmul.f32.gmra.mxu0 %v1830
        %v1852 = vpop.f32.mrf.mxu0
        %v1853 = vadd.f32 0.0, %v1852
        %1854 = vdwg.mxu0
        %1855 = vrot.lane.b32.xlu0 %v722, 64
        %v1856 = vpop.permute.xlu0 %1855
        %1857 = vrot.lane.b32.xlu0 %v724, 64
        %v1858 = vpop.permute.xlu0 %1857
        %v1862 = vsel %vm1362, %v1691, 0
        %v1865 = vsel %vm1362, %v1692, 0
        %1867 = vmatpush.msra.mxu0 0.0
        %1868 = vmatpush.msra.mxu0 0.0
        %1869 = vmatpush.msra.mxu0 0.0
        %1870 = vmatpush.msra.mxu0 0.0
        %1871 = vmatpush.msra.mxu0 0.0
        %1872 = vmatpush.msra.mxu0 0.0
        %1873 = vmatpush.msra.mxu0 0.0
        %1874 = vmatpush.msra.mxu0 0.0
        %1875 = vmatpush.msra.mxu0 0.0
        %1876 = vmatpush.msra.mxu0 0.0
        %1877 = vmatpush.msra.mxu0 0.0
        %1878 = vmatpush.msra.mxu0 0.0
        %1879 = vmatpush.msra.mxu0 0.0
        %1880 = vmatpush.msra.mxu0 0.0
        %1881 = vmatpush.msra.mxu0 %v1858
        %1882 = vmatpush.msra.mxu0 %v1856
        %1883 = vmatmul.f32.gmra.mxu0 %v1862
        %v1884 = vpop.f32.mrf.mxu0
        %v1885 = vadd.f32 0.0, %v1884
        %1886 = vmatmul.f32.gmra.mxu0 %v1865
        %v1887 = vpop.f32.mrf.mxu0
        %v1888 = vadd.f32 0.0, %v1887
        %1889 = vdwg.mxu0
        %1890 = vrot.lane.b32.xlu0 %v726, 64
        %v1891 = vpop.permute.xlu0 %1890
        %1892 = vrot.lane.b32.xlu0 %v728, 64
        %v1893 = vpop.permute.xlu0 %1892
        %v1897 = vsel %vm1362, %v1693, 0
        %v1900 = vsel %vm1362, %v1694, 0
        %1902 = vmatpush.msra.mxu0 0.0
        %1903 = vmatpush.msra.mxu0 0.0
        %1904 = vmatpush.msra.mxu0 0.0
        %1905 = vmatpush.msra.mxu0 0.0
        %1906 = vmatpush.msra.mxu0 0.0
        %1907 = vmatpush.msra.mxu0 0.0
        %1908 = vmatpush.msra.mxu0 0.0
        %1909 = vmatpush.msra.mxu0 0.0
        %1910 = vmatpush.msra.mxu0 0.0
        %1911 = vmatpush.msra.mxu0 0.0
        %1912 = vmatpush.msra.mxu0 0.0
        %1913 = vmatpush.msra.mxu0 0.0
        %1914 = vmatpush.msra.mxu0 0.0
        %1915 = vmatpush.msra.mxu0 0.0
        %1916 = vmatpush.msra.mxu0 %v1893
        %1917 = vmatpush.msra.mxu0 %v1891
        %1918 = vmatmul.f32.gmra.mxu0 %v1897
        %v1919 = vpop.f32.mrf.mxu0
        %v1920 = vadd.f32 0.0, %v1919
        %1921 = vmatmul.f32.gmra.mxu0 %v1900
        %v1922 = vpop.f32.mrf.mxu0
        %v1923 = vadd.f32 0.0, %v1922
        %1924 = vdwg.mxu0
        %1925 = vrot.lane.b32.xlu0 %v730, 64
        %v1926 = vpop.permute.xlu0 %1925
        %1927 = vrot.lane.b32.xlu0 %v732, 64
        %v1928 = vpop.permute.xlu0 %1927
        %v1932 = vsel %vm1362, %v1695, 0
        %v1935 = vsel %vm1362, %v1696, 0
        %1937 = vmatpush.msra.mxu0 0.0
        %1938 = vmatpush.msra.mxu0 0.0
        %1939 = vmatpush.msra.mxu0 0.0
        %1940 = vmatpush.msra.mxu0 0.0
        %1941 = vmatpush.msra.mxu0 0.0
        %1942 = vmatpush.msra.mxu0 0.0
        %1943 = vmatpush.msra.mxu0 0.0
        %1944 = vmatpush.msra.mxu0 0.0
        %1945 = vmatpush.msra.mxu0 0.0
        %1946 = vmatpush.msra.mxu0 0.0
        %1947 = vmatpush.msra.mxu0 0.0
        %1948 = vmatpush.msra.mxu0 0.0
        %1949 = vmatpush.msra.mxu0 0.0
        %1950 = vmatpush.msra.mxu0 0.0
        %1951 = vmatpush.msra.mxu0 %v1928
        %1952 = vmatpush.msra.mxu0 %v1926
        %1953 = vmatmul.f32.gmra.mxu0 %v1932
        %v1954 = vpop.f32.mrf.mxu0
        %v1955 = vadd.f32 0.0, %v1954
        %1956 = vmatmul.f32.gmra.mxu0 %v1935
        %v1957 = vpop.f32.mrf.mxu0
        %v1958 = vadd.f32 0.0, %v1957
        %1959 = vdwg.mxu0
        %1960 = vrot.lane.b32.xlu0 %v734, 64
        %v1961 = vpop.permute.xlu0 %1960
        %1962 = vrot.lane.b32.xlu0 %v736, 64
        %v1963 = vpop.permute.xlu0 %1962
        %v1967 = vsel %vm1362, %v1697, 0
        %v1970 = vsel %vm1362, %v1698, 0
        %1972 = vmatpush.msra.mxu0 0.0
        %1973 = vmatpush.msra.mxu0 0.0
        %1974 = vmatpush.msra.mxu0 0.0
        %1975 = vmatpush.msra.mxu0 0.0
        %1976 = vmatpush.msra.mxu0 0.0
        %1977 = vmatpush.msra.mxu0 0.0
        %1978 = vmatpush.msra.mxu0 0.0
        %1979 = vmatpush.msra.mxu0 0.0
        %1980 = vmatpush.msra.mxu0 0.0
        %1981 = vmatpush.msra.mxu0 0.0
        %1982 = vmatpush.msra.mxu0 0.0
        %1983 = vmatpush.msra.mxu0 0.0
        %1984 = vmatpush.msra.mxu0 0.0
        %1985 = vmatpush.msra.mxu0 0.0
        %1986 = vmatpush.msra.mxu0 %v1963
        %1987 = vmatpush.msra.mxu0 %v1961
        %1988 = vmatmul.f32.gmra.mxu0 %v1967
        %v1989 = vpop.f32.mrf.mxu0
        %v1990 = vadd.f32 0.0, %v1989
        %1991 = vmatmul.f32.gmra.mxu0 %v1970
        %v1992 = vpop.f32.mrf.mxu0
        %v1993 = vadd.f32 0.0, %v1992
        %1994 = vdwg.mxu0
        %1995 = vrot.lane.b32.xlu0 %v738, 64
        %v1996 = vpop.permute.xlu0 %1995
        %1997 = vrot.lane.b32.xlu0 %v740, 64
        %v1998 = vpop.permute.xlu0 %1997
        %v2002 = vsel %vm1362, %v1699, 0
        %v2005 = vsel %vm1362, %v1700, 0
        %2007 = vmatpush.msra.mxu0 0.0
        %2008 = vmatpush.msra.mxu0 0.0
        %2009 = vmatpush.msra.mxu0 0.0
        %2010 = vmatpush.msra.mxu0 0.0
        %2011 = vmatpush.msra.mxu0 0.0
        %2012 = vmatpush.msra.mxu0 0.0
        %2013 = vmatpush.msra.mxu0 0.0
        %2014 = vmatpush.msra.mxu0 0.0
        %2015 = vmatpush.msra.mxu0 0.0
        %2016 = vmatpush.msra.mxu0 0.0
        %2017 = vmatpush.msra.mxu0 0.0
        %2018 = vmatpush.msra.mxu0 0.0
        %2019 = vmatpush.msra.mxu0 0.0
        %2020 = vmatpush.msra.mxu0 0.0
        %2021 = vmatpush.msra.mxu0 %v1998
        %2022 = vmatpush.msra.mxu0 %v1996
        %2023 = vmatmul.f32.gmra.mxu0 %v2002
        %v2024 = vpop.f32.mrf.mxu0
        %v2025 = vadd.f32 0.0, %v2024
        %2026 = vmatmul.f32.gmra.mxu0 %v2005
        %v2027 = vpop.f32.mrf.mxu0
        %v2028 = vadd.f32 0.0, %v2027
        %2029 = vdwg.mxu0
        %2030 = vrot.lane.b32.xlu0 %v742, 64
        %v2031 = vpop.permute.xlu0 %2030
        %2032 = vrot.lane.b32.xlu0 %v744, 64
        %v2033 = vpop.permute.xlu0 %2032
        %v2037 = vsel %vm1362, %v1701, 0
        %v2040 = vsel %vm1362, %v1702, 0
        %2042 = vmatpush.msra.mxu0 0.0
        %2043 = vmatpush.msra.mxu0 0.0
        %2044 = vmatpush.msra.mxu0 0.0
        %2045 = vmatpush.msra.mxu0 0.0
        %2046 = vmatpush.msra.mxu0 0.0
        %2047 = vmatpush.msra.mxu0 0.0
        %2048 = vmatpush.msra.mxu0 0.0
        %2049 = vmatpush.msra.mxu0 0.0
        %2050 = vmatpush.msra.mxu0 0.0
        %2051 = vmatpush.msra.mxu0 0.0
        %2052 = vmatpush.msra.mxu0 0.0
        %2053 = vmatpush.msra.mxu0 0.0
        %2054 = vmatpush.msra.mxu0 0.0
        %2055 = vmatpush.msra.mxu0 0.0
        %2056 = vmatpush.msra.mxu0 %v2033
        %2057 = vmatpush.msra.mxu0 %v2031
        %2058 = vmatmul.f32.gmra.mxu0 %v2037
        %v2059 = vpop.f32.mrf.mxu0
        %v2060 = vadd.f32 0.0, %v2059
        %2061 = vmatmul.f32.gmra.mxu0 %v2040
        %v2062 = vpop.f32.mrf.mxu0
        %v2063 = vadd.f32 0.0, %v2062
        %2064 = vdwg.mxu0
        %2065 = vrot.lane.b32.xlu0 %v746, 64
        %v2066 = vpop.permute.xlu0 %2065
        %2067 = vrot.lane.b32.xlu0 %v748, 64
        %v2068 = vpop.permute.xlu0 %2067
        %v2072 = vsel %vm1362, %v1703, 0
        %v2075 = vsel %vm1362, %v1704, 0
        %2077 = vmatpush.msra.mxu0 0.0
        %2078 = vmatpush.msra.mxu0 0.0
        %2079 = vmatpush.msra.mxu0 0.0
        %2080 = vmatpush.msra.mxu0 0.0
        %2081 = vmatpush.msra.mxu0 0.0
        %2082 = vmatpush.msra.mxu0 0.0
        %2083 = vmatpush.msra.mxu0 0.0
        %2084 = vmatpush.msra.mxu0 0.0
        %2085 = vmatpush.msra.mxu0 0.0
        %2086 = vmatpush.msra.mxu0 0.0
        %2087 = vmatpush.msra.mxu0 0.0
        %2088 = vmatpush.msra.mxu0 0.0
        %2089 = vmatpush.msra.mxu0 0.0
        %2090 = vmatpush.msra.mxu0 0.0
        %2091 = vmatpush.msra.mxu0 %v2068
        %2092 = vmatpush.msra.mxu0 %v2066
        %2093 = vmatmul.f32.gmra.mxu0 %v2072
        %v2094 = vpop.f32.mrf.mxu0
        %v2095 = vadd.f32 0.0, %v2094
        %2096 = vmatmul.f32.gmra.mxu0 %v2075
        %v2097 = vpop.f32.mrf.mxu0
        %v2098 = vadd.f32 0.0, %v2097
        %2099 = vdwg.mxu0
        %2100 = vrot.lane.b32.xlu0 %v750, 64
        %v2101 = vpop.permute.xlu0 %2100
        %2102 = vrot.lane.b32.xlu0 %v752, 64
        %v2103 = vpop.permute.xlu0 %2102
        %v2107 = vsel %vm1362, %v1705, 0
        %v2110 = vsel %vm1362, %v1706, 0
        %2112 = vmatpush.msra.mxu0 0.0
        %2113 = vmatpush.msra.mxu0 0.0
        %2114 = vmatpush.msra.mxu0 0.0
        %2115 = vmatpush.msra.mxu0 0.0
        %2116 = vmatpush.msra.mxu0 0.0
        %2117 = vmatpush.msra.mxu0 0.0
        %2118 = vmatpush.msra.mxu0 0.0
        %2119 = vmatpush.msra.mxu0 0.0
        %2120 = vmatpush.msra.mxu0 0.0
        %2121 = vmatpush.msra.mxu0 0.0
        %2122 = vmatpush.msra.mxu0 0.0
        %2123 = vmatpush.msra.mxu0 0.0
        %2124 = vmatpush.msra.mxu0 0.0
        %2125 = vmatpush.msra.mxu0 0.0
        %2126 = vmatpush.msra.mxu0 %v2103
        %2127 = vmatpush.msra.mxu0 %v2101
        %2128 = vmatmul.f32.gmra.mxu0 %v2107
        %v2129 = vpop.f32.mrf.mxu0
        %v2130 = vadd.f32 0.0, %v2129
        %2131 = vmatmul.f32.gmra.mxu0 %v2110
        %v2132 = vpop.f32.mrf.mxu0
        %v2133 = vadd.f32 0.0, %v2132
        %2134 = vdwg.mxu0
        %2135 = vrot.lane.b32.xlu0 %v754, 64
        %v2136 = vpop.permute.xlu0 %2135
        %2137 = vrot.lane.b32.xlu0 %v756, 64
        %v2138 = vpop.permute.xlu0 %2137
        %v2142 = vsel %vm1362, %v1707, 0
        %v2145 = vsel %vm1362, %v1708, 0
        %2147 = vmatpush.msra.mxu0 0.0
        %2148 = vmatpush.msra.mxu0 0.0
        %2149 = vmatpush.msra.mxu0 0.0
        %2150 = vmatpush.msra.mxu0 0.0
        %2151 = vmatpush.msra.mxu0 0.0
        %2152 = vmatpush.msra.mxu0 0.0
        %2153 = vmatpush.msra.mxu0 0.0
        %2154 = vmatpush.msra.mxu0 0.0
        %2155 = vmatpush.msra.mxu0 0.0
        %2156 = vmatpush.msra.mxu0 0.0
        %2157 = vmatpush.msra.mxu0 0.0
        %2158 = vmatpush.msra.mxu0 0.0
        %2159 = vmatpush.msra.mxu0 0.0
        %2160 = vmatpush.msra.mxu0 0.0
        %2161 = vmatpush.msra.mxu0 %v2138
        %2162 = vmatpush.msra.mxu0 %v2136
        %2163 = vmatmul.f32.gmra.mxu0 %v2142
        %v2164 = vpop.f32.mrf.mxu0
        %v2165 = vadd.f32 0.0, %v2164
        %2166 = vmatmul.f32.gmra.mxu0 %v2145
        %v2167 = vpop.f32.mrf.mxu0
        %v2168 = vadd.f32 0.0, %v2167
        %2169 = vdwg.mxu0
        %2170 = vrot.lane.b32.xlu0 %v758, 64
        %v2171 = vpop.permute.xlu0 %2170
        %2172 = vrot.lane.b32.xlu0 %v760, 64
        %v2173 = vpop.permute.xlu0 %2172
        %v2177 = vsel %vm1362, %v1709, 0
        %v2180 = vsel %vm1362, %v1710, 0
        %2182 = vmatpush.msra.mxu0 0.0
        %2183 = vmatpush.msra.mxu0 0.0
        %2184 = vmatpush.msra.mxu0 0.0
        %2185 = vmatpush.msra.mxu0 0.0
        %2186 = vmatpush.msra.mxu0 0.0
        %2187 = vmatpush.msra.mxu0 0.0
        %2188 = vmatpush.msra.mxu0 0.0
        %2189 = vmatpush.msra.mxu0 0.0
        %2190 = vmatpush.msra.mxu0 0.0
        %2191 = vmatpush.msra.mxu0 0.0
        %2192 = vmatpush.msra.mxu0 0.0
        %2193 = vmatpush.msra.mxu0 0.0
        %2194 = vmatpush.msra.mxu0 0.0
        %2195 = vmatpush.msra.mxu0 0.0
        %2196 = vmatpush.msra.mxu0 %v2173
        %2197 = vmatpush.msra.mxu0 %v2171
        %2198 = vmatmul.f32.gmra.mxu0 %v2177
        %v2199 = vpop.f32.mrf.mxu0
        %v2200 = vadd.f32 0.0, %v2199
        %2201 = vmatmul.f32.gmra.mxu0 %v2180
        %v2202 = vpop.f32.mrf.mxu0
        %v2203 = vadd.f32 0.0, %v2202
        %2204 = vdwg.mxu0
        %2205 = vrot.lane.b32.xlu0 %v762, 64
        %v2206 = vpop.permute.xlu0 %2205
        %2207 = vrot.lane.b32.xlu0 %v764, 64
        %v2208 = vpop.permute.xlu0 %2207
        %v2212 = vsel %vm1362, %v1711, 0
        %v2215 = vsel %vm1362, %v1712, 0
        %2217 = vmatpush.msra.mxu0 0.0
        %2218 = vmatpush.msra.mxu0 0.0
        %2219 = vmatpush.msra.mxu0 0.0
        %2220 = vmatpush.msra.mxu0 0.0
        %2221 = vmatpush.msra.mxu0 0.0
        %2222 = vmatpush.msra.mxu0 0.0
        %2223 = vmatpush.msra.mxu0 0.0
        %2224 = vmatpush.msra.mxu0 0.0
        %2225 = vmatpush.msra.mxu0 0.0
        %2226 = vmatpush.msra.mxu0 0.0
        %2227 = vmatpush.msra.mxu0 0.0
        %2228 = vmatpush.msra.mxu0 0.0
        %2229 = vmatpush.msra.mxu0 0.0
        %2230 = vmatpush.msra.mxu0 0.0
        %2231 = vmatpush.msra.mxu0 %v2208
        %2232 = vmatpush.msra.mxu0 %v2206
        %2233 = vmatmul.f32.gmra.mxu0 %v2212
        %v2234 = vpop.f32.mrf.mxu0
        %v2235 = vadd.f32 0.0, %v2234
        %2236 = vmatmul.f32.gmra.mxu0 %v2215
        %v2237 = vpop.f32.mrf.mxu0
        %v2238 = vadd.f32 0.0, %v2237
        %2239 = vdwg.mxu0
        %2240 = vrot.lane.b32.xlu0 %v766, 64
        %v2241 = vpop.permute.xlu0 %2240
        %2242 = vrot.lane.b32.xlu0 %v768, 64
        %v2243 = vpop.permute.xlu0 %2242
        %v2247 = vsel %vm1362, %v1713, 0
        %v2250 = vsel %vm1362, %v1714, 0
        %2252 = vmatpush.msra.mxu0 0.0
        %2253 = vmatpush.msra.mxu0 0.0
        %2254 = vmatpush.msra.mxu0 0.0
        %2255 = vmatpush.msra.mxu0 0.0
        %2256 = vmatpush.msra.mxu0 0.0
        %2257 = vmatpush.msra.mxu0 0.0
        %2258 = vmatpush.msra.mxu0 0.0
        %2259 = vmatpush.msra.mxu0 0.0
        %2260 = vmatpush.msra.mxu0 0.0
        %2261 = vmatpush.msra.mxu0 0.0
        %2262 = vmatpush.msra.mxu0 0.0
        %2263 = vmatpush.msra.mxu0 0.0
        %2264 = vmatpush.msra.mxu0 0.0
        %2265 = vmatpush.msra.mxu0 0.0
        %2266 = vmatpush.msra.mxu0 %v2243
        %2267 = vmatpush.msra.mxu0 %v2241
        %2268 = vmatmul.f32.gmra.mxu0 %v2247
        %v2269 = vpop.f32.mrf.mxu0
        %v2270 = vadd.f32 0.0, %v2269
        %2271 = vmatmul.f32.gmra.mxu0 %v2250
        %v2272 = vpop.f32.mrf.mxu0
        %v2273 = vadd.f32 0.0, %v2272
        %2274 = vdwg.mxu0
        %2283 = vrot.lane.b32.xlu0 %v1885, 8
        %v2284 = vpop.permute.xlu0 %2283
        %2285 = vrot.lane.b32.xlu0 %v1888, 8
        %v2286 = vpop.permute.xlu0 %2285
        %2287 = vrot.lane.b32.xlu0 %v1920, 8
        %v2288 = vpop.permute.xlu0 %2287
        %2289 = vrot.lane.b32.xlu0 %v1923, 8
        %v2290 = vpop.permute.xlu0 %2289
        %2291 = vrot.lane.b32.xlu0 %v1955, 8
        %v2292 = vpop.permute.xlu0 %2291
        %2293 = vrot.lane.b32.xlu0 %v1958, 8
        %v2294 = vpop.permute.xlu0 %2293
        %2295 = vrot.lane.b32.xlu0 %v1990, 8
        %v2296 = vpop.permute.xlu0 %2295
        %2297 = vrot.lane.b32.xlu0 %v1993, 8
        %v2298 = vpop.permute.xlu0 %2297
        %2315 = vrot.lane.b32.xlu0 %v2025, 16
        %v2316 = vpop.permute.xlu0 %2315
        %2317 = vrot.lane.b32.xlu0 %v2028, 16
        %v2318 = vpop.permute.xlu0 %2317
        %2319 = vrot.lane.b32.xlu0 %v2060, 16
        %v2320 = vpop.permute.xlu0 %2319
        %2321 = vrot.lane.b32.xlu0 %v2063, 16
        %v2322 = vpop.permute.xlu0 %2321
        %2323 = vrot.lane.b32.xlu0 %v2095, 16
        %v2324 = vpop.permute.xlu0 %2323
        %2325 = vrot.lane.b32.xlu0 %v2098, 16
        %v2326 = vpop.permute.xlu0 %2325
        %2327 = vrot.lane.b32.xlu0 %v2130, 16
        %v2328 = vpop.permute.xlu0 %2327
        %2329 = vrot.lane.b32.xlu0 %v2133, 16
        %v2330 = vpop.permute.xlu0 %2329
        %2347 = vrot.lane.b32.xlu0 %v2165, 24
        %v2348 = vpop.permute.xlu0 %2347
        %2349 = vrot.lane.b32.xlu0 %v2168, 24
        %v2350 = vpop.permute.xlu0 %2349
        %2351 = vrot.lane.b32.xlu0 %v2200, 24
        %v2352 = vpop.permute.xlu0 %2351
        %2353 = vrot.lane.b32.xlu0 %v2203, 24
        %v2354 = vpop.permute.xlu0 %2353
        %2355 = vrot.lane.b32.xlu0 %v2235, 24
        %v2356 = vpop.permute.xlu0 %2355
        %2357 = vrot.lane.b32.xlu0 %v2238, 24
        %v2358 = vpop.permute.xlu0 %2357
        %2359 = vrot.lane.b32.xlu0 %v2270, 24
        %v2360 = vpop.permute.xlu0 %2359
        %2361 = vrot.lane.b32.xlu0 %v2273, 24
        %v2362 = vpop.permute.xlu0 %2361
        %v2371 = vsel %vm773, %v1745, %v2284
        %v2372 = vsel %vm773, %v1748, %v2286
        %v2373 = vsel %vm773, %v1780, %v2288
        %v2374 = vsel %vm773, %v1783, %v2290
        %v2375 = vsel %vm773, %v1815, %v2292
        %v2376 = vsel %vm773, %v1818, %v2294
        %v2377 = vsel %vm773, %v1850, %v2296
        %v2378 = vsel %vm773, %v1853, %v2298
        %v2379 = vsel %vm1362, %v2371, %v2316
        %v2380 = vsel %vm1362, %v2372, %v2318
        %v2381 = vsel %vm1362, %v2373, %v2320
        %v2382 = vsel %vm1362, %v2374, %v2322
        %v2383 = vsel %vm1362, %v2375, %v2324
        %v2384 = vsel %vm1362, %v2376, %v2326
        %v2385 = vsel %vm1362, %v2377, %v2328
        %v2386 = vsel %vm1362, %v2378, %v2330
        %vm2387 = vcmask 195584
        %v2388 = vsel %vm2387, %v2379, %v2348
        %v2389 = vsel %vm2387, %v2380, %v2350
        %v2390 = vsel %vm2387, %v2381, %v2352
        %v2391 = vsel %vm2387, %v2382, %v2354
        %v2392 = vsel %vm2387, %v2383, %v2356
        %v2393 = vsel %vm2387, %v2384, %v2358
        %v2394 = vsel %vm2387, %v2385, %v2360
        %v2395 = vsel %vm2387, %v2386, %v2362
        %v2396 = vld [vmem:[#allocation5] sm:$0xff]
        %v2397 = vld [vmem:[#allocation5 + $0x8] sm:$0xff]
        %v2398 = vld [vmem:[#allocation5 + $0x10] sm:$0xff]
        %v2399 = vld [vmem:[#allocation5 + $0x18] sm:$0xff]
        %v2401 = vsel %vm438, %v2388, 0
        %v2404 = vsel %vm438, %v2389, 0
        %v2407 = vsel %vm438, %v2390, 0
        %v2410 = vsel %vm438, %v2391, 0
        %v2413 = vsel %vm438, %v2392, 0
        %v2416 = vsel %vm438, %v2393, 0
        %v2419 = vsel %vm438, %v2394, 0
        %v2422 = vsel %vm438, %v2395, 0
        %2424 = vmatpush.msra.mxu0 0.0
        %2425 = vmatpush.msra.mxu0 0.0
        %2426 = vmatpush.msra.mxu0 0.0
        %2427 = vmatpush.msra.mxu0 0.0
        %2428 = vmatpush.msra.mxu0 0.0
        %2429 = vmatpush.msra.mxu0 0.0
        %2430 = vmatpush.msra.mxu0 0.0
        %2431 = vmatpush.msra.mxu0 0.0
        %2432 = vmatpush.msra.mxu0 0.0
        %2433 = vmatpush.msra.mxu0 0.0
        %2434 = vmatpush.msra.mxu0 0.0
        %2435 = vmatpush.msra.mxu0 0.0
        %2436 = vmatpush.msra.mxu0 %v2399
        %2437 = vmatpush.msra.mxu0 %v2398
        %2438 = vmatpush.msra.mxu0 %v2397
        %2439 = vmatpush.msra.mxu0 %v2396
        %2440 = vmatmul.f32.gmra.mxu0 %v2401
        %v2441 = vpop.f32.mrf.mxu0
        %v2442 = vadd.f32 0.0, %v2441
        %2443 = vmatmul.f32.gmra.mxu0 %v2404
        %v2444 = vpop.f32.mrf.mxu0
        %v2445 = vadd.f32 0.0, %v2444
        %2446 = vmatmul.f32.gmra.mxu0 %v2407
        %v2447 = vpop.f32.mrf.mxu0
        %v2448 = vadd.f32 0.0, %v2447
        %2449 = vmatmul.f32.gmra.mxu0 %v2410
        %v2450 = vpop.f32.mrf.mxu0
        %v2451 = vadd.f32 0.0, %v2450
        %2452 = vmatmul.f32.gmra.mxu0 %v2413
        %v2453 = vpop.f32.mrf.mxu0
        %v2454 = vadd.f32 0.0, %v2453
        %2455 = vmatmul.f32.gmra.mxu0 %v2416
        %v2456 = vpop.f32.mrf.mxu0
        %v2457 = vadd.f32 0.0, %v2456
        %2458 = vmatmul.f32.gmra.mxu0 %v2419
        %v2459 = vpop.f32.mrf.mxu0
        %v2460 = vadd.f32 0.0, %v2459
        %2461 = vmatmul.f32.gmra.mxu0 %v2422
        %v2462 = vpop.f32.mrf.mxu0
        %v2463 = vadd.f32 0.0, %v2462
        %2464 = vdwg.mxu0
        %v2465 = vadd.f32 %v429, %v2442
        %v2466 = vadd.f32 %v430, %v2445
        %v2467 = vadd.f32 %v431, %v2448
        %v2468 = vadd.f32 %v432, %v2451
        %v2469 = vadd.f32 %v433, %v2454
        %v2470 = vadd.f32 %v434, %v2457
        %v2471 = vadd.f32 %v435, %v2460
        %v2472 = vadd.f32 %v436, %v2463
        %v2473 = vperm.slane %v437, 6
        %v2474 = vadd.f32 %v2465, %v2473
        %v2475 = vadd.f32 %v2466, %v2473
        %v2476 = vadd.f32 %v2467, %v2473
        %v2477 = vadd.f32 %v2468, %v2473
        %v2478 = vadd.f32 %v2469, %v2473
        %v2479 = vadd.f32 %v2470, %v2473
        %v2480 = vadd.f32 %v2471, %v2473
        %v2481 = vadd.f32 %v2472, %v2473
        %v2482 = vsel %vm438, %v2474, 0.0
        %2483 = vadd.xlane.f32.xlu0 %v2482
        %v2484 = vpop.xlane.xlu0 %2483
        %v2485 = vsel %vm438, %v2475, 0.0
        %2486 = vadd.xlane.f32.xlu0 %v2485
        %v2487 = vpop.xlane.xlu0 %2486
        %v2488 = vsel %vm438, %v2476, 0.0
        %2489 = vadd.xlane.f32.xlu0 %v2488
        %v2490 = vpop.xlane.xlu0 %2489
        %v2491 = vsel %vm438, %v2477, 0.0
        %2492 = vadd.xlane.f32.xlu0 %v2491
        %v2493 = vpop.xlane.xlu0 %2492
        %v2494 = vsel %vm438, %v2478, 0.0
        %2495 = vadd.xlane.f32.xlu0 %v2494
        %v2496 = vpop.xlane.xlu0 %2495
        %v2497 = vsel %vm438, %v2479, 0.0
        %2498 = vadd.xlane.f32.xlu0 %v2497
        %v2499 = vpop.xlane.xlu0 %2498
        %v2500 = vsel %vm438, %v2480, 0.0
        %2501 = vadd.xlane.f32.xlu0 %v2500
        %v2502 = vpop.xlane.xlu0 %2501
        %v2503 = vsel %vm438, %v2481, 0.0
        %2504 = vadd.xlane.f32.xlu0 %v2503
        %v2505 = vpop.xlane.xlu0 %2504
        %v2506 = vmul.f32 %v2484, %v469
        %v2507 = vmul.f32 %v2487, %v469
        %v2508 = vmul.f32 %v2490, %v469
        %v2509 = vmul.f32 %v2493, %v469
        %v2510 = vmul.f32 %v2496, %v469
        %v2511 = vmul.f32 %v2499, %v469
        %v2512 = vmul.f32 %v2502, %v469
        %v2513 = vmul.f32 %v2505, %v469
        %v2514 = vsub.f32 %v2474, %v2506
        %v2515 = vsub.f32 %v2475, %v2507
        %v2516 = vsub.f32 %v2476, %v2508
        %v2517 = vsub.f32 %v2477, %v2509
        %v2518 = vsub.f32 %v2478, %v2510
        %v2519 = vsub.f32 %v2479, %v2511
        %v2520 = vsub.f32 %v2480, %v2512
        %v2521 = vsub.f32 %v2481, %v2513
        %v2522 = vmul.f32 %v2514, %v2514
        %v2523 = vmul.f32 %v2515, %v2515
        %v2524 = vmul.f32 %v2516, %v2516
        %v2525 = vmul.f32 %v2517, %v2517
        %v2526 = vmul.f32 %v2518, %v2518
        %v2527 = vmul.f32 %v2519, %v2519
        %v2528 = vmul.f32 %v2520, %v2520
        %v2529 = vmul.f32 %v2521, %v2521
        %v2530 = vsel %vm438, %v2522, 0.0
        %2531 = vadd.xlane.f32.xlu0 %v2530
        %v2532 = vpop.xlane.xlu0 %2531
        %v2533 = vsel %vm438, %v2523, 0.0
        %2534 = vadd.xlane.f32.xlu0 %v2533
        %v2535 = vpop.xlane.xlu0 %2534
        %v2536 = vsel %vm438, %v2524, 0.0
        %2537 = vadd.xlane.f32.xlu0 %v2536
        %v2538 = vpop.xlane.xlu0 %2537
        %v2539 = vsel %vm438, %v2525, 0.0
        %2540 = vadd.xlane.f32.xlu0 %v2539
        %v2541 = vpop.xlane.xlu0 %2540
        %v2542 = vsel %vm438, %v2526, 0.0
        %2543 = vadd.xlane.f32.xlu0 %v2542
        %v2544 = vpop.xlane.xlu0 %2543
        %v2545 = vsel %vm438, %v2527, 0.0
        %2546 = vadd.xlane.f32.xlu0 %v2545
        %v2547 = vpop.xlane.xlu0 %2546
        %v2548 = vsel %vm438, %v2528, 0.0
        %2549 = vadd.xlane.f32.xlu0 %v2548
        %v2550 = vpop.xlane.xlu0 %2549
        %v2551 = vsel %vm438, %v2529, 0.0
        %2552 = vadd.xlane.f32.xlu0 %v2551
        %v2553 = vpop.xlane.xlu0 %2552
        %v2554 = vmul.f32 %v2532, %v469
        %v2555 = vmul.f32 %v2535, %v469
        %v2556 = vmul.f32 %v2538, %v469
        %v2557 = vmul.f32 %v2541, %v469
        %v2558 = vmul.f32 %v2544, %v469
        %v2559 = vmul.f32 %v2547, %v469
        %v2560 = vmul.f32 %v2550, %v469
        %v2561 = vmul.f32 %v2553, %v469
        %v2562 = vadd.f32 %v2554, 1e-05
        %v2563 = vadd.f32 %v2555, 1e-05
        %v2564 = vadd.f32 %v2556, 1e-05
        %v2565 = vadd.f32 %v2557, 1e-05
        %v2566 = vadd.f32 %v2558, 1e-05
        %v2567 = vadd.f32 %v2559, 1e-05
        %v2568 = vadd.f32 %v2560, 1e-05
        %v2569 = vadd.f32 %v2561, 1e-05
        %v2570 = vrsqrt.pop %v2562
        %v2571 = vmul.f32 %v2570, %v2562
        %v2572 = vmul.f32 %v2571, %v2570
        %v2573 = vmul.f32 0.5, %v2572
        %v2574 = vsub.f32 1.5, %v2573
        %v2575 = vmul.f32 %v2570, %v2574
        %vm2576 = vweird.f32 %v2562
        %vm2577 = vweird.f32 %v2570
        %vm2578 = vmor %vm2576, %vm2577
        %v2579 = vsel %vm2578, %v2570, %v2575
        %v2580 = vrsqrt.pop %v2563
        %v2581 = vmul.f32 %v2580, %v2563
        %v2582 = vmul.f32 %v2581, %v2580
        %v2583 = vmul.f32 0.5, %v2582
        %v2584 = vsub.f32 1.5, %v2583
        %v2585 = vmul.f32 %v2580, %v2584
        %vm2586 = vweird.f32 %v2563
        %vm2587 = vweird.f32 %v2580
        %vm2588 = vmor %vm2586, %vm2587
        %v2589 = vsel %vm2588, %v2580, %v2585
        %v2590 = vrsqrt.pop %v2564
        %v2591 = vmul.f32 %v2590, %v2564
        %v2592 = vmul.f32 %v2591, %v2590
        %v2593 = vmul.f32 0.5, %v2592
        %v2594 = vsub.f32 1.5, %v2593
        %v2595 = vmul.f32 %v2590, %v2594
        %vm2596 = vweird.f32 %v2564
        %vm2597 = vweird.f32 %v2590
        %vm2598 = vmor %vm2596, %vm2597
        %v2599 = vsel %vm2598, %v2590, %v2595
        %v2600 = vrsqrt.pop %v2565
        %v2601 = vmul.f32 %v2600, %v2565
        %v2602 = vmul.f32 %v2601, %v2600
        %v2603 = vmul.f32 0.5, %v2602
        %v2604 = vsub.f32 1.5, %v2603
        %v2605 = vmul.f32 %v2600, %v2604
        %vm2606 = vweird.f32 %v2565
        %vm2607 = vweird.f32 %v2600
        %vm2608 = vmor %vm2606, %vm2607
        %v2609 = vsel %vm2608, %v2600, %v2605
        %v2610 = vrsqrt.pop %v2566
        %v2611 = vmul.f32 %v2610, %v2566
        %v2612 = vmul.f32 %v2611, %v2610
        %v2613 = vmul.f32 0.5, %v2612
        %v2614 = vsub.f32 1.5, %v2613
        %v2615 = vmul.f32 %v2610, %v2614
        %vm2616 = vweird.f32 %v2566
        %vm2617 = vweird.f32 %v2610
        %vm2618 = vmor %vm2616, %vm2617
        %v2619 = vsel %vm2618, %v2610, %v2615
        %v2620 = vrsqrt.pop %v2567
        %v2621 = vmul.f32 %v2620, %v2567
        %v2622 = vmul.f32 %v2621, %v2620
        %v2623 = vmul.f32 0.5, %v2622
        %v2624 = vsub.f32 1.5, %v2623
        %v2625 = vmul.f32 %v2620, %v2624
        %vm2626 = vweird.f32 %v2567
        %vm2627 = vweird.f32 %v2620
        %vm2628 = vmor %vm2626, %vm2627
        %v2629 = vsel %vm2628, %v2620, %v2625
        %v2630 = vrsqrt.pop %v2568
        %v2631 = vmul.f32 %v2630, %v2568
        %v2632 = vmul.f32 %v2631, %v2630
        %v2633 = vmul.f32 0.5, %v2632
        %v2634 = vsub.f32 1.5, %v2633
        %v2635 = vmul.f32 %v2630, %v2634
        %vm2636 = vweird.f32 %v2568
        %vm2637 = vweird.f32 %v2630
        %vm2638 = vmor %vm2636, %vm2637
        %v2639 = vsel %vm2638, %v2630, %v2635
        %v2640 = vrsqrt.pop %v2569
        %v2641 = vmul.f32 %v2640, %v2569
        %v2642 = vmul.f32 %v2641, %v2640
        %v2643 = vmul.f32 0.5, %v2642
        %v2644 = vsub.f32 1.5, %v2643
        %v2645 = vmul.f32 %v2640, %v2644
        %vm2646 = vweird.f32 %v2569
        %vm2647 = vweird.f32 %v2640
        %vm2648 = vmor %vm2646, %vm2647
        %v2649 = vsel %vm2648, %v2640, %v2645
        %v2650 = vmul.f32 %v2514, %v2579
        %v2651 = vmul.f32 %v2515, %v2589
        %v2652 = vmul.f32 %v2516, %v2599
        %v2653 = vmul.f32 %v2517, %v2609
        %v2654 = vmul.f32 %v2518, %v2619
        %v2655 = vmul.f32 %v2519, %v2629
        %v2656 = vmul.f32 %v2520, %v2639
        %v2657 = vmul.f32 %v2521, %v2649
        %v2658 = vperm.slane %v437, 2
        %v2659 = vmul.f32 %v2650, %v2658
        %v2660 = vmul.f32 %v2651, %v2658
        %v2661 = vmul.f32 %v2652, %v2658
        %v2662 = vmul.f32 %v2653, %v2658
        %v2663 = vmul.f32 %v2654, %v2658
        %v2664 = vmul.f32 %v2655, %v2658
        %v2665 = vmul.f32 %v2656, %v2658
        %v2666 = vmul.f32 %v2657, %v2658
        %v2667 = vperm.slane %v437, 3
        %v2668 = vadd.f32 %v2659, %v2667
        %v2669 = vadd.f32 %v2660, %v2667
        %v2670 = vadd.f32 %v2661, %v2667
        %v2671 = vadd.f32 %v2662, %v2667
        %v2672 = vadd.f32 %v2663, %v2667
        %v2673 = vadd.f32 %v2664, %v2667
        %v2674 = vadd.f32 %v2665, %v2667
        %v2675 = vadd.f32 %v2666, %v2667
        %v2676 = vld [vmem:[#allocation7] sm:$0xff]
        %v2677 = vld [vmem:[#allocation7 + $0x8] sm:$0xff]
        %v2678 = vld [vmem:[#allocation7 + $0x10] sm:$0xff]
        %v2679 = vld [vmem:[#allocation7 + $0x18] sm:$0xff]
        %v2680 = vld [vmem:[%s6] sm:$0x1]
        %v2682 = vperm.slane %v2680, 0
        %v2685 = vsel %vm438, %v2668, 0
        %v2688 = vsel %vm438, %v2669, 0
        %v2691 = vsel %vm438, %v2670, 0
        %v2694 = vsel %vm438, %v2671, 0
        %v2697 = vsel %vm438, %v2672, 0
        %v2700 = vsel %vm438, %v2673, 0
        %v2703 = vsel %vm438, %v2674, 0
        %v2706 = vsel %vm438, %v2675, 0
        %2708 = vmatpush.msra.mxu0 0.0
        %2709 = vmatpush.msra.mxu0 0.0
        %2710 = vmatpush.msra.mxu0 0.0
        %2711 = vmatpush.msra.mxu0 0.0
        %2712 = vmatpush.msra.mxu0 0.0
        %2713 = vmatpush.msra.mxu0 0.0
        %2714 = vmatpush.msra.mxu0 0.0
        %2715 = vmatpush.msra.mxu0 0.0
        %2716 = vmatpush.msra.mxu0 0.0
        %2717 = vmatpush.msra.mxu0 0.0
        %2718 = vmatpush.msra.mxu0 0.0
        %2719 = vmatpush.msra.mxu0 0.0
        %2720 = vmatpush.msra.mxu0 %v2679
        %2721 = vmatpush.msra.mxu0 %v2678
        %2722 = vmatpush.msra.mxu0 %v2677
        %2723 = vmatpush.msra.mxu0 %v2676
        %2724 = vmatmul.f32.gmra.mxu0 %v2685
        %v2725 = vpop.f32.mrf.mxu0
        %v2726 = vadd.f32 %v2682, %v2725
        %2727 = vmatmul.f32.gmra.mxu0 %v2688
        %v2728 = vpop.f32.mrf.mxu0
        %v2729 = vadd.f32 %v2682, %v2728
        %2730 = vmatmul.f32.gmra.mxu0 %v2691
        %v2731 = vpop.f32.mrf.mxu0
        %v2732 = vadd.f32 %v2682, %v2731
        %2733 = vmatmul.f32.gmra.mxu0 %v2694
        %v2734 = vpop.f32.mrf.mxu0
        %v2735 = vadd.f32 %v2682, %v2734
        %2736 = vmatmul.f32.gmra.mxu0 %v2697
        %v2737 = vpop.f32.mrf.mxu0
        %v2738 = vadd.f32 %v2682, %v2737
        %2739 = vmatmul.f32.gmra.mxu0 %v2700
        %v2740 = vpop.f32.mrf.mxu0
        %v2741 = vadd.f32 %v2682, %v2740
        %2742 = vmatmul.f32.gmra.mxu0 %v2703
        %v2743 = vpop.f32.mrf.mxu0
        %v2744 = vadd.f32 %v2682, %v2743
        %2745 = vmatmul.f32.gmra.mxu0 %v2706
        %v2746 = vpop.f32.mrf.mxu0
        %v2747 = vadd.f32 %v2682, %v2746
        %2748 = vdwg.mxu0
        %v2749 = vmax.f32 %v2726, 0.0
        %v2750 = vmax.f32 %v2729, 0.0
        %v2751 = vmax.f32 %v2732, 0.0
        %v2752 = vmax.f32 %v2735, 0.0
        %v2753 = vmax.f32 %v2738, 0.0
        %v2754 = vmax.f32 %v2741, 0.0
        %v2755 = vmax.f32 %v2744, 0.0
        %v2756 = vmax.f32 %v2747, 0.0
        %v2757 = vld [vmem:[%s7] sm:$0xff]
        %v2758 = vld [vmem:[%s7 + $0x8] sm:$0xff]
        %v2759 = vld [vmem:[%s7 + $0x10] sm:$0xff]
        %v2760 = vld [vmem:[%s7 + $0x18] sm:$0xff]
        %v2761 = vld [vmem:[%s7 + $0x20] sm:$0xff]
        %v2762 = vld [vmem:[%s7 + $0x28] sm:$0xff]
        %v2763 = vld [vmem:[%s7 + $0x30] sm:$0xff]
        %v2764 = vld [vmem:[%s7 + $0x38] sm:$0xff]
        %v2765 = vld [vmem:[%s7 + $0x40] sm:$0xff]
        %v2766 = vld [vmem:[%s7 + $0x48] sm:$0xff]
        %v2767 = vld [vmem:[%s7 + $0x50] sm:$0xff]
        %v2768 = vld [vmem:[%s7 + $0x58] sm:$0xff]
        %v2769 = vld [vmem:[%s7 + $0x60] sm:$0xff]
        %v2770 = vld [vmem:[%s7 + $0x68] sm:$0xff]
        %v2771 = vld [vmem:[%s7 + $0x70] sm:$0xff]
        %v2772 = vld [vmem:[%s7 + $0x78] sm:$0xff]
        %2773 = vmatpush.msra.mxu0 %v2772
        %2774 = vmatpush.msra.mxu0 %v2771
        %2775 = vmatpush.msra.mxu0 %v2770
        %2776 = vmatpush.msra.mxu0 %v2769
        %2777 = vmatpush.msra.mxu0 %v2768
        %2778 = vmatpush.msra.mxu0 %v2767
        %2779 = vmatpush.msra.mxu0 %v2766
        %2780 = vmatpush.msra.mxu0 %v2765
        %2781 = vmatpush.msra.mxu0 %v2764
        %2782 = vmatpush.msra.mxu0 %v2763
        %2783 = vmatpush.msra.mxu0 %v2762
        %2784 = vmatpush.msra.mxu0 %v2761
        %2785 = vmatpush.msra.mxu0 %v2760
        %2786 = vmatpush.msra.mxu0 %v2759
        %2787 = vmatpush.msra.mxu0 %v2758
        %2788 = vmatpush.msra.mxu0 %v2757
        %2789 = vmatmul.f32.gmra.mxu0 %v2749
        %v2790 = vpop.f32.mrf.mxu0
        %v2791 = vadd.f32 0.0, %v2790
        %2792 = vmatmul.f32.gmra.mxu0 %v2750
        %v2793 = vpop.f32.mrf.mxu0
        %v2794 = vadd.f32 0.0, %v2793
        %2795 = vmatmul.f32.gmra.mxu0 %v2751
        %v2796 = vpop.f32.mrf.mxu0
        %v2797 = vadd.f32 0.0, %v2796
        %2798 = vmatmul.f32.gmra.mxu0 %v2752
        %v2799 = vpop.f32.mrf.mxu0
        %v2800 = vadd.f32 0.0, %v2799
        %2801 = vmatmul.f32.gmra.mxu0 %v2753
        %v2802 = vpop.f32.mrf.mxu0
        %v2803 = vadd.f32 0.0, %v2802
        %2804 = vmatmul.f32.gmra.mxu0 %v2754
        %v2805 = vpop.f32.mrf.mxu0
        %v2806 = vadd.f32 0.0, %v2805
        %2807 = vmatmul.f32.gmra.mxu0 %v2755
        %v2808 = vpop.f32.mrf.mxu0
        %v2809 = vadd.f32 0.0, %v2808
        %2810 = vmatmul.f32.gmra.mxu0 %v2756
        %v2811 = vpop.f32.mrf.mxu0
        %v2812 = vadd.f32 0.0, %v2811
        %2813 = vdwg.mxu0
        %v2814 = vadd.f32 %v2474, %v2791
        %v2815 = vadd.f32 %v2475, %v2794
        %v2816 = vadd.f32 %v2476, %v2797
        %v2817 = vadd.f32 %v2477, %v2800
        %v2818 = vadd.f32 %v2478, %v2803
        %v2819 = vadd.f32 %v2479, %v2806
        %v2820 = vadd.f32 %v2480, %v2809
        %v2821 = vadd.f32 %v2481, %v2812
        %v2822 = vperm.slane %v437, 7
        %v2823 = vadd.f32 %v2814, %v2822
        %v2824 = vadd.f32 %v2815, %v2822
        %v2825 = vadd.f32 %v2816, %v2822
        %v2826 = vadd.f32 %v2817, %v2822
        %v2827 = vadd.f32 %v2818, %v2822
        %v2828 = vadd.f32 %v2819, %v2822
        %v2829 = vadd.f32 %v2820, %v2822
        %v2830 = vadd.f32 %v2821, %v2822
        %v2831 = vsel %vm438, %v2823, 0.0
        %2832 = vadd.xlane.f32.xlu0 %v2831
        %v2833 = vpop.xlane.xlu0 %2832
        %v2834 = vsel %vm438, %v2824, 0.0
        %2835 = vadd.xlane.f32.xlu0 %v2834
        %v2836 = vpop.xlane.xlu0 %2835
        %v2837 = vsel %vm438, %v2825, 0.0
        %2838 = vadd.xlane.f32.xlu0 %v2837
        %v2839 = vpop.xlane.xlu0 %2838
        %v2840 = vsel %vm438, %v2826, 0.0
        %2841 = vadd.xlane.f32.xlu0 %v2840
        %v2842 = vpop.xlane.xlu0 %2841
        %v2843 = vsel %vm438, %v2827, 0.0
        %2844 = vadd.xlane.f32.xlu0 %v2843
        %v2845 = vpop.xlane.xlu0 %2844
        %v2846 = vsel %vm438, %v2828, 0.0
        %2847 = vadd.xlane.f32.xlu0 %v2846
        %v2848 = vpop.xlane.xlu0 %2847
        %v2849 = vsel %vm438, %v2829, 0.0
        %2850 = vadd.xlane.f32.xlu0 %v2849
        %v2851 = vpop.xlane.xlu0 %2850
        %v2852 = vsel %vm438, %v2830, 0.0
        %2853 = vadd.xlane.f32.xlu0 %v2852
        %v2854 = vpop.xlane.xlu0 %2853
        %v2855 = vmul.f32 %v2833, %v469
        %v2856 = vmul.f32 %v2836, %v469
        %v2857 = vmul.f32 %v2839, %v469
        %v2858 = vmul.f32 %v2842, %v469
        %v2859 = vmul.f32 %v2845, %v469
        %v2860 = vmul.f32 %v2848, %v469
        %v2861 = vmul.f32 %v2851, %v469
        %v2862 = vmul.f32 %v2854, %v469
        %v2863 = vsub.f32 %v2823, %v2855
        %v2864 = vsub.f32 %v2824, %v2856
        %v2865 = vsub.f32 %v2825, %v2857
        %v2866 = vsub.f32 %v2826, %v2858
        %v2867 = vsub.f32 %v2827, %v2859
        %v2868 = vsub.f32 %v2828, %v2860
        %v2869 = vsub.f32 %v2829, %v2861
        %v2870 = vsub.f32 %v2830, %v2862
        %v2871 = vmul.f32 %v2863, %v2863
        %v2872 = vmul.f32 %v2864, %v2864
        %v2873 = vmul.f32 %v2865, %v2865
        %v2874 = vmul.f32 %v2866, %v2866
        %v2875 = vmul.f32 %v2867, %v2867
        %v2876 = vmul.f32 %v2868, %v2868
        %v2877 = vmul.f32 %v2869, %v2869
        %v2878 = vmul.f32 %v2870, %v2870
        %v2879 = vsel %vm438, %v2871, 0.0
        %2880 = vadd.xlane.f32.xlu0 %v2879
        %v2881 = vpop.xlane.xlu0 %2880
        %v2882 = vsel %vm438, %v2872, 0.0
        %2883 = vadd.xlane.f32.xlu0 %v2882
        %v2884 = vpop.xlane.xlu0 %2883
        %v2885 = vsel %vm438, %v2873, 0.0
        %2886 = vadd.xlane.f32.xlu0 %v2885
        %v2887 = vpop.xlane.xlu0 %2886
        %v2888 = vsel %vm438, %v2874, 0.0
        %2889 = vadd.xlane.f32.xlu0 %v2888
        %v2890 = vpop.xlane.xlu0 %2889
        %v2891 = vsel %vm438, %v2875, 0.0
        %2892 = vadd.xlane.f32.xlu0 %v2891
        %v2893 = vpop.xlane.xlu0 %2892
        %v2894 = vsel %vm438, %v2876, 0.0
        %2895 = vadd.xlane.f32.xlu0 %v2894
        %v2896 = vpop.xlane.xlu0 %2895
        %v2897 = vsel %vm438, %v2877, 0.0
        %2898 = vadd.xlane.f32.xlu0 %v2897
        %v2899 = vpop.xlane.xlu0 %2898
        %v2900 = vsel %vm438, %v2878, 0.0
        %2901 = vadd.xlane.f32.xlu0 %v2900
        %v2902 = vpop.xlane.xlu0 %2901
        %v2903 = vmul.f32 %v2881, %v469
        %v2904 = vmul.f32 %v2884, %v469
        %v2905 = vmul.f32 %v2887, %v469
        %v2906 = vmul.f32 %v2890, %v469
        %v2907 = vmul.f32 %v2893, %v469
        %v2908 = vmul.f32 %v2896, %v469
        %v2909 = vmul.f32 %v2899, %v469
        %v2910 = vmul.f32 %v2902, %v469
        %v2911 = vadd.f32 %v2903, 1e-05
        %v2912 = vadd.f32 %v2904, 1e-05
        %v2913 = vadd.f32 %v2905, 1e-05
        %v2914 = vadd.f32 %v2906, 1e-05
        %v2915 = vadd.f32 %v2907, 1e-05
        %v2916 = vadd.f32 %v2908, 1e-05
        %v2917 = vadd.f32 %v2909, 1e-05
        %v2918 = vadd.f32 %v2910, 1e-05
        %v2919 = vrsqrt.pop %v2911
        %v2920 = vmul.f32 %v2919, %v2911
        %v2921 = vmul.f32 %v2920, %v2919
        %v2922 = vmul.f32 0.5, %v2921
        %v2923 = vsub.f32 1.5, %v2922
        %v2924 = vmul.f32 %v2919, %v2923
        %vm2925 = vweird.f32 %v2911
        %vm2926 = vweird.f32 %v2919
        %vm2927 = vmor %vm2925, %vm2926
        %v2928 = vsel %vm2927, %v2919, %v2924
        %v2929 = vrsqrt.pop %v2912
        %v2930 = vmul.f32 %v2929, %v2912
        %v2931 = vmul.f32 %v2930, %v2929
        %v2932 = vmul.f32 0.5, %v2931
        %v2933 = vsub.f32 1.5, %v2932
        %v2934 = vmul.f32 %v2929, %v2933
        %vm2935 = vweird.f32 %v2912
        %vm2936 = vweird.f32 %v2929
        %vm2937 = vmor %vm2935, %vm2936
        %v2938 = vsel %vm2937, %v2929, %v2934
        %v2939 = vrsqrt.pop %v2913
        %v2940 = vmul.f32 %v2939, %v2913
        %v2941 = vmul.f32 %v2940, %v2939
        %v2942 = vmul.f32 0.5, %v2941
        %v2943 = vsub.f32 1.5, %v2942
        %v2944 = vmul.f32 %v2939, %v2943
        %vm2945 = vweird.f32 %v2913
        %vm2946 = vweird.f32 %v2939
        %vm2947 = vmor %vm2945, %vm2946
        %v2948 = vsel %vm2947, %v2939, %v2944
        %v2949 = vrsqrt.pop %v2914
        %v2950 = vmul.f32 %v2949, %v2914
        %v2951 = vmul.f32 %v2950, %v2949
        %v2952 = vmul.f32 0.5, %v2951
        %v2953 = vsub.f32 1.5, %v2952
        %v2954 = vmul.f32 %v2949, %v2953
        %vm2955 = vweird.f32 %v2914
        %vm2956 = vweird.f32 %v2949
        %vm2957 = vmor %vm2955, %vm2956
        %v2958 = vsel %vm2957, %v2949, %v2954
        %v2959 = vrsqrt.pop %v2915
        %v2960 = vmul.f32 %v2959, %v2915
        %v2961 = vmul.f32 %v2960, %v2959
        %v2962 = vmul.f32 0.5, %v2961
        %v2963 = vsub.f32 1.5, %v2962
        %v2964 = vmul.f32 %v2959, %v2963
        %vm2965 = vweird.f32 %v2915
        %vm2966 = vweird.f32 %v2959
        %vm2967 = vmor %vm2965, %vm2966
        %v2968 = vsel %vm2967, %v2959, %v2964
        %v2969 = vrsqrt.pop %v2916
        %v2970 = vmul.f32 %v2969, %v2916
        %v2971 = vmul.f32 %v2970, %v2969
        %v2972 = vmul.f32 0.5, %v2971
        %v2973 = vsub.f32 1.5, %v2972
        %v2974 = vmul.f32 %v2969, %v2973
        %vm2975 = vweird.f32 %v2916
        %vm2976 = vweird.f32 %v2969
        %vm2977 = vmor %vm2975, %vm2976
        %v2978 = vsel %vm2977, %v2969, %v2974
        %v2979 = vrsqrt.pop %v2917
        %v2980 = vmul.f32 %v2979, %v2917
        %v2981 = vmul.f32 %v2980, %v2979
        %v2982 = vmul.f32 0.5, %v2981
        %v2983 = vsub.f32 1.5, %v2982
        %v2984 = vmul.f32 %v2979, %v2983
        %vm2985 = vweird.f32 %v2917
        %vm2986 = vweird.f32 %v2979
        %vm2987 = vmor %vm2985, %vm2986
        %v2988 = vsel %vm2987, %v2979, %v2984
        %v2989 = vrsqrt.pop %v2918
        %v2990 = vmul.f32 %v2989, %v2918
        %v2991 = vmul.f32 %v2990, %v2989
        %v2992 = vmul.f32 0.5, %v2991
        %v2993 = vsub.f32 1.5, %v2992
        %v2994 = vmul.f32 %v2989, %v2993
        %vm2995 = vweird.f32 %v2918
        %vm2996 = vweird.f32 %v2989
        %vm2997 = vmor %vm2995, %vm2996
        %v2998 = vsel %vm2997, %v2989, %v2994
        %v2999 = vmul.f32 %v2863, %v2928
        %v3000 = vmul.f32 %v2864, %v2938
        %v3001 = vmul.f32 %v2865, %v2948
        %v3002 = vmul.f32 %v2866, %v2958
        %v3003 = vmul.f32 %v2867, %v2968
        %v3004 = vmul.f32 %v2868, %v2978
        %v3005 = vmul.f32 %v2869, %v2988
        %v3006 = vmul.f32 %v2870, %v2998
        %v3007 = vperm.slane %v437, 4
        %v3008 = vmul.f32 %v2999, %v3007
        %v3009 = vmul.f32 %v3000, %v3007
        %v3010 = vmul.f32 %v3001, %v3007
        %v3011 = vmul.f32 %v3002, %v3007
        %v3012 = vmul.f32 %v3003, %v3007
        %v3013 = vmul.f32 %v3004, %v3007
        %v3014 = vmul.f32 %v3005, %v3007
        %v3015 = vmul.f32 %v3006, %v3007
        %v3016 = vperm.slane %v437, 5
        %v3017 = vadd.f32 %v3008, %v3016
        %v3018 = vadd.f32 %v3009, %v3016
        %v3019 = vadd.f32 %v3010, %v3016
        %v3020 = vadd.f32 %v3011, %v3016
        %v3021 = vadd.f32 %v3012, %v3016
        %v3022 = vadd.f32 %v3013, %v3016
        %v3023 = vadd.f32 %v3014, %v3016
        %v3024 = vadd.f32 %v3015, %v3016
        %v3025 = vld [vmem:[#allocation8] sm:$0xff]
        %v3026 = vld [vmem:[#allocation8 + $0x8] sm:$0xff]
        %v3027 = vld [vmem:[#allocation8 + $0x10] sm:$0xff]
        %v3028 = vld [vmem:[#allocation8 + $0x18] sm:$0xff]
        %v3029 = vld [vmem:[%s9] sm:$0x1]
        %v3031 = vperm.slane %v3029, 0
        %v3034 = vsel %vm438, %v3017, 0
        %v3037 = vsel %vm438, %v3018, 0
        %v3040 = vsel %vm438, %v3019, 0
        %v3043 = vsel %vm438, %v3020, 0
        %v3046 = vsel %vm438, %v3021, 0
        %v3049 = vsel %vm438, %v3022, 0
        %v3052 = vsel %vm438, %v3023, 0
        %v3055 = vsel %vm438, %v3024, 0
        %3057 = vmatpush.msra.mxu0 0.0
        %3058 = vmatpush.msra.mxu0 0.0
        %3059 = vmatpush.msra.mxu0 0.0
        %3060 = vmatpush.msra.mxu0 0.0
        %3061 = vmatpush.msra.mxu0 0.0
        %3062 = vmatpush.msra.mxu0 0.0
        %3063 = vmatpush.msra.mxu0 0.0
        %3064 = vmatpush.msra.mxu0 0.0
        %3065 = vmatpush.msra.mxu0 0.0
        %3066 = vmatpush.msra.mxu0 0.0
        %3067 = vmatpush.msra.mxu0 0.0
        %3068 = vmatpush.msra.mxu0 0.0
        %3069 = vmatpush.msra.mxu0 %v3028
        %3070 = vmatpush.msra.mxu0 %v3027
        %3071 = vmatpush.msra.mxu0 %v3026
        %3072 = vmatpush.msra.mxu0 %v3025
        %3073 = vmatmul.f32.gmra.mxu0 %v3034
        %v3074 = vpop.f32.mrf.mxu0
        %v3075 = vadd.f32 %v3031, %v3074
        %3076 = vmatmul.f32.gmra.mxu0 %v3037
        %v3077 = vpop.f32.mrf.mxu0
        %v3078 = vadd.f32 %v3031, %v3077
        %3079 = vmatmul.f32.gmra.mxu0 %v3040
        %v3080 = vpop.f32.mrf.mxu0
        %v3081 = vadd.f32 %v3031, %v3080
        %3082 = vmatmul.f32.gmra.mxu0 %v3043
        %v3083 = vpop.f32.mrf.mxu0
        %v3084 = vadd.f32 %v3031, %v3083
        %3085 = vmatmul.f32.gmra.mxu0 %v3046
        %v3086 = vpop.f32.mrf.mxu0
        %v3087 = vadd.f32 %v3031, %v3086
        %3088 = vmatmul.f32.gmra.mxu0 %v3049
        %v3089 = vpop.f32.mrf.mxu0
        %v3090 = vadd.f32 %v3031, %v3089
        %3091 = vmatmul.f32.gmra.mxu0 %v3052
        %v3092 = vpop.f32.mrf.mxu0
        %v3093 = vadd.f32 %v3031, %v3092
        %3094 = vmatmul.f32.gmra.mxu0 %v3055
        %v3095 = vpop.f32.mrf.mxu0
        %v3096 = vadd.f32 %v3031, %v3095
        %3097 = vdwg.mxu0
        %3098 = vst [vmem:[%s420] sm:$0xff] %v3075
        %3099 = vst [vmem:[%s420 + $0x8] sm:$0xff] %v3078
        %3100 = vst [vmem:[%s420 + $0x10] sm:$0xff] %v3081
        %3101 = vst [vmem:[%s420 + $0x18] sm:$0xff] %v3084
        %3102 = vst [vmem:[%s420 + $0x20] sm:$0xff] %v3087
        %3103 = vst [vmem:[%s420 + $0x28] sm:$0xff] %v3090
        %3104 = vst [vmem:[%s420 + $0x30] sm:$0xff] %v3093
        %3105 = vst [vmem:[%s420 + $0x38] sm:$0xff] %v3096
        %s3106 = sand.u32 %s250, 1
        %s3107 = scalar_lea.sflag [#allocation4], %s3106
        %s3108 = sand.u32 %s250, 1
        %s3109 = smul.addr %s3108, 64
        %s3110 = scalar_lea.vmem [#allocation10], %s3109
        // Predicated region
        $region77: #{tpu_custom_call.1} parent=59 // pred_check
          %p3111 = pneg %p260
        $region78: #{tpu_custom_call.1} parent=59 // pred_check_branch
          %3113 = sbr.rel (%p3111) target = $region80
        $region79: #{tpu_custom_call.1} parent=59 // pred_region
          %s3114 = smul.u32 4, %s27
          %3116 = vsyncadd %s3107, 0
          %s3117 = smul.addr %s3114, 2
          %s3118 = smul.addr %s3117, 8
          %s3119 = scalar_lea.hbm %s10, %s3118
          %s3120 = sshll.u32 %s3110, 4
          %s3121 = int_to_ptr.vmem [resolvable:$true] %s3120
          %s3122 = sshll.u32 %s3119, 4
          %s3123 = int_to_ptr.hbm [resolvable:$true] %s3122
          %3128 = dma.vmem_to_hbm [thread:$0]  %s3121, 1024, %s3123, %s3107, 128, 128, 8
        $region80: #{tpu_custom_call.1} parent=59 // pred_fallthru
          _
      $region60: #{tpu_custom_call.1} parent=5 // pred_fallthru
        _
      %p3129 = scmp.le.s32.totalorder 2, %s22
      // Predicated region
      $region81: #{tpu_custom_call.1} parent=5 // pred_check
        %p3130 = pneg %p3129
      $region82: #{tpu_custom_call.1} parent=5 // pred_check_branch
        %3132 = sbr.rel (%p3130) target = $region84
      $region83: #{tpu_custom_call.1} parent=5 // pred_region
        %s3133 = ssub.s32 %s22, 2
        // Predicated region
        $region85: #{tpu_custom_call.1} parent=83 // pred_check
          %p3134 = pneg %p266
        $region86: #{tpu_custom_call.1} parent=83 // pred_check_branch
          %3136 = sbr.rel (%p3134) target = $region88
        $region87: #{tpu_custom_call.1} parent=83 // pred_region
          %s3137 = sand.u32 %s251, 1
          %s3138 = scalar_lea.sflag [#allocation4], %s3137
          %s3139 = sand.u32 %s251, 1
          %s3140 = smul.addr %s3139, 64
          %s3141 = scalar_lea.vmem [#allocation10], %s3140
          %3143 = dma.done %s3138, 1024
        $region88: #{tpu_custom_call.1} parent=83 // pred_fallthru
          _
      $region84: #{tpu_custom_call.1} parent=5 // pred_fallthru
        _
    $region6: #{tpu_custom_call.1} parent=1 // loop_footer
      %s26 = sadd.s32 1, %s22
    $region7: #{tpu_custom_call.1} parent=1 // loop_footer_branch
      %21 = sbr.rel target = $region3
    $region8: #{tpu_custom_call.1} parent=1 // loop_exit
      _
    %3144 = vsyncpa [#allocation3], 1
    %s3145 = scalar_lea.sflag [#allocation3], 1
    %3146 = vsyncpa %s3145, 1
    %3147 = vsyncpa [#allocation6], 1
    %3148 = vsyncpa [#allocation9], 1
    %3149 = vsyncpa [#allocation4], 1
    %s3150 = scalar_lea.sflag [#allocation4], 1
    %3151 = vsyncpa %s3150, 1

</llo_original>
